<compile_context>
chip_gen: v7x
topology: tpu7x:2x2x1
jax: 0.10.0
libtpu: 0.0.40
codegen_flags: <defaults>
</compile_context>

<pallas_src>
import jax
import jax.numpy as jnp
import numpy as np
from jax.experimental import pallas as pl
from jax.experimental.pallas import tpu as pltpu

HIGH = jax.lax.Precision.HIGHEST
BN_EPS = 1e-5


def _round_bf16(x):
    """Round params to bf16-representable f32 so the kernel (bf16 MXU operands)
    and the f32 HIGHEST-precision reference consume identical parameter values."""
    return x.astype(jnp.bfloat16).astype(jnp.float32)


# ----------------------------------------------------------------------------
# the fused Pallas kernel
# ----------------------------------------------------------------------------
def _stgcn_fused_kernel(*refs):
    """Whole STGCNVFL forward on VMEM-resident (B*N, T*C) activations."""
    in_refs, o_ref = refs[:-1], refs[-1]
    x_ref, a_ref, g_ref = in_refs[0], in_refs[1], in_refs[2]
    rest = in_refs[3:]
    p_block1, p_block2, p_last = rest[:11], rest[11:22], rest[22:26]

    a_blk = a_ref[...]   # (BN, BN) bf16  = kron(I_B, A_hat)
    g_mix = g_ref[...]   # (BN, BN) f32   = kron(ones(B,B)/B, I_N)

    def time_block(h, w13_ref, w2_ref, b13_ref, b2_ref):
        # Banded-weight temporal conv: one dot per gate branch over the whole
        # (1,3) conv; relu(conv1 + conv3 + sigmoid(conv2)).
        hb = h.astype(jnp.bfloat16)
        c13 = jnp.dot(hb, w13_ref[...], preferred_element_type=jnp.float32) + b13_ref[...]
        c2 = jnp.dot(hb, w2_ref[...], preferred_element_type=jnp.float32) + b2_ref[...]
        return jnp.maximum(c13 + jax.nn.sigmoid(c2), 0.0)

    def spatial(h, theta_ref):
        # lfs = (I_B (x) A_hat) @ h ;  t2 = relu(lfs @ (I_T (x) Theta))
        lfs = jnp.dot(a_blk, h.astype(jnp.bfloat16), preferred_element_type=jnp.float32)
        return jnp.maximum(
            jnp.dot(lfs.astype(jnp.bfloat16), theta_ref[...],
                    preferred_element_type=jnp.float32), 0.0)

    def batch_norm(h, gamma_ref, beta_ref):
        # Per-node training-mode batch stats; g_mix averages rows over the batch,
        # the lane-axis mean reduces over (time, channel). f32 throughout.
        xm = jnp.dot(g_mix, h, preferred_element_type=jnp.float32)
        x2m = jnp.dot(g_mix, h * h, preferred_element_type=jnp.float32)
        mu = jnp.mean(xm, axis=1, keepdims=True)
        var = jnp.maximum(jnp.mean(x2m, axis=1, keepdims=True) - mu * mu, 0.0)
        return (h - mu) * jax.lax.rsqrt(var + BN_EPS) * gamma_ref[...] + beta_ref[...]

    def stgcn_block(h, p):
        w13a, w2a, b13a, b2a, theta, w13b, w2b, b13b, b2b, gam, bet = p
        h = time_block(h, w13a, w2a, b13a, b2a)
        h = spatial(h, theta)
        h = time_block(h, w13b, w2b, b13b, b2b)
        return batch_norm(h, gam, bet)

    h = x_ref[...]                       # (BN, T*F) f32
    h = stgcn_block(h, p_block1)
    h = stgcn_block(h, p_block2)
    h = time_block(h, *p_last)
    o_ref[...] = h                       # (BN, T_final*64) -- lane-dense (128)


# ----------------------------------------------------------------------------
# parameter preparation (plain JAX, done once outside the kernel)
# ----------------------------------------------------------------------------
def _band_weight(w, T):
    # w: (3, Cin, Cout) -> banded (T*Cin, Tout*Cout).  Column block t holds taps
    # t..t+2, so ONE matmul on the (BN, T*Cin) slab performs the whole temporal conv.
    K, cin, cout = w.shape
    t_out = T - K + 1
    wb = jnp.zeros((T * cin, t_out * cout), jnp.float32)
    for t in range(t_out):
        for k in range(K):
            wb = wb.at[(t + k) * cin:(t + k + 1) * cin,
                       t * cout:(t + 1) * cout].set(w[k])
    return wb


def _prep_time_block(p, T):
    w1, w2, w3, b1, b2, b3 = p
    t_out = T - 2
    w13 = _band_weight(w1 + w3, T).astype(jnp.bfloat16)   # conv1 + conv3 share the branch
    w2b = _band_weight(w2, T).astype(jnp.bfloat16)        # sigmoid branch
    b13 = jnp.tile((b1 + b3).reshape(-1), t_out).reshape(1, -1)
    b2t = jnp.tile(b2.reshape(-1), t_out).reshape(1, -1)
    return [w13, w2b, b13, b2t], t_out


def _prep_block(p, T, B, N):
    tb1, t1 = _prep_time_block(p["temporal1"], T)
    theta_big = jnp.kron(jnp.eye(t1, dtype=jnp.float32), p["theta"]).astype(jnp.bfloat16)
    tb2, t2 = _prep_time_block(p["temporal2"], t1)
    gamma_rows = jnp.tile(p["gamma"].reshape(N, 1), (B, 1))
    beta_rows = jnp.tile(p["beta"].reshape(N, 1), (B, 1))
    return tb1 + [theta_big] + tb2 + [gamma_rows, beta_rows], t2


def prepare_fused_params(a_hat, params, B, N, T):
    a_block = jnp.kron(jnp.eye(B, dtype=jnp.float32), a_hat).astype(jnp.bfloat16)
    g_mix = jnp.kron(jnp.ones((B, B), jnp.float32), jnp.eye(N, dtype=jnp.float32)) / B
    p1, t1 = _prep_block(params["block1"], T, B, N)
    p2, t2 = _prep_block(params["block2"], t1, B, N)
    pl_, t3 = _prep_time_block(params["last_temporal"], t2)
    return [a_block, g_mix] + p1 + p2 + pl_, t3


# ----------------------------------------------------------------------------
# wrapper
# ----------------------------------------------------------------------------
def _full_spec(shape):
    nd = len(shape)
    return pl.BlockSpec(shape, lambda i, _nd=nd: (0,) * _nd)


def stgcn_vfl_forward(a_hat, x, params):
    B, N, T, F = x.shape
    flat, t_final = prepare_fused_params(a_hat, params, B, N, T)
    cout = params["last_temporal"][0].shape[-1]
    x2d = x.reshape(B * N, T * F)                         # canonical (BN, T*C) layout
    args = (x2d, *flat)
    out_shape = jax.ShapeDtypeStruct((B * N, t_final * cout), jnp.float32)
    out2d = pl.pallas_call(
        _stgcn_fused_kernel,
        grid=(1,),
        in_specs=[_full_spec(a.shape) for a in args],
        out_specs=_full_spec(out_shape.shape),
        out_shape=out_shape,
        compiler_params=pltpu.CompilerParams(dimension_semantics=("arbitrary",)),
    )(*args)
    return out2d.reshape(B, N, t_final * cout)


# ----------------------------------------------------------------------------
# deterministic parameter init (shapes from the module's __init__)
# ----------------------------------------------------------------------------
def init_time_block(key, cin, cout):
    ks = jax.random.split(key, 6)
    s = 1.0 / np.sqrt(3 * cin)
    w = lambda k: _round_bf16(jax.random.normal(k, (3, cin, cout), jnp.float32) * s)
    b = lambda k: jax.random.normal(k, (1, cout), jnp.float32) * 0.01
    return (w(ks[0]), w(ks[1]), w(ks[2]), b(ks[3]), b(ks[4]), b(ks[5]))


def init_block(key, cin, cout, cs, num_nodes):
    k1, k2, k3 = jax.random.split(key, 3)
    return dict(
        temporal1=init_time_block(k1, cin, cout),
        theta=_round_bf16(jax.random.normal(k2, (cout, cs), jnp.float32) / np.sqrt(cout)),
        temporal2=init_time_block(k3, cs, cout),
        gamma=jnp.ones((num_nodes, 1), jnp.float32),   # BN weight default
        beta=jnp.zeros((num_nodes, 1), jnp.float32),   # BN bias default
    )


def init_params(key, num_nodes, num_features):
    k1, k2, k3 = jax.random.split(key, 3)
    return dict(
        block1=init_block(k1, num_features, 64, 16, num_nodes),
        block2=init_block(k2, 64, 64, 16, num_nodes),
        last_temporal=init_time_block(k3, 64, 64),
    )


# ----------------------------------------------------------------------------
# pure-JAX reference (f32, HIGHEST precision) for validation
# ----------------------------------------------------------------------------
def ref_time_block(x, w1, w2, w3, b1, b2, b3):
    B, N, T, cin = x.shape

    def conv(w, b):
        return jnp.stack(
            [
                sum(
                    jnp.einsum("bnc,co->bno", x[:, :, t + k, :], w[k], precision=HIGH)
                    for k in range(3)
                )
                + b.reshape(-1)
                for t in range(T - 2)
            ],
            axis=2,
        )

    c1, c2, c3 = conv(w1, b1), conv(w2, b2), conv(w3, b3)
    return jnp.maximum(c1 + jax.nn.sigmoid(c2) + c3, 0.0)


def ref_spatial(a_hat, t, theta):
    lfs = jnp.einsum("ij,bjtc->bitc", a_hat, t, precision=HIGH)
    return jnp.maximum(jnp.einsum("bitc,cs->bits", lfs, theta, precision=HIGH), 0.0)


def ref_batch_norm(x, gamma, beta, eps=BN_EPS):
    mean = x.mean(axis=(0, 2, 3), keepdims=True)
    var = jnp.square(x - mean).mean(axis=(0, 2, 3), keepdims=True)
    g = gamma.reshape(1, -1, 1, 1)
    bt = beta.reshape(1, -1, 1, 1)
    return (x - mean) * jax.lax.rsqrt(var + eps) * g + bt


def ref_block(x, a_hat, p):
    t = ref_time_block(x, *p["temporal1"])
    t2 = ref_spatial(a_hat, t, p["theta"])
    t3 = ref_time_block(t2, *p["temporal2"])
    return ref_batch_norm(t3, p["gamma"], p["beta"])


def ref_forward(a_hat, x, params):
    out1 = ref_block(x, a_hat, params["block1"])
    out2 = ref_block(out1, a_hat, params["block2"])
    out3 = ref_time_block(out2, *params["last_temporal"])
    return out3.reshape(out3.shape[0], out3.shape[1], -1)


# ----------------------------------------------------------------------------
if __name__ == "__main__":
    key = jax.random.PRNGKey(0)
    kx, ka, kp = jax.random.split(key, 3)

    B, N, T, F = 2, 8, 12, 4  # batch, nodes, input time steps, features
    X = jax.random.normal(kx, (B, N, T, F), jnp.float32)

    A = jax.random.uniform(ka, (N, N), jnp.float32)
    A = A + A.T
    A_hat = _round_bf16(A / A.sum(axis=1, keepdims=True))  # normalized adjacency

    params = init_params(kp, N, F)

    out = jax.block_until_ready(stgcn_vfl_forward(A_hat, X, params))
    ref = jax.block_until_ready(ref_forward(A_hat, X, params))

    assert out.shape == (B, N, (T - 10) * 64), out.shape
    # Tolerance sized for bf16 MXU operands in the kernel vs f32 HIGHEST reference.
    np.testing.assert_allclose(np.asarray(out), np.asarray(ref), rtol=3e-2, atol=3e-2)
    print("KERNEL_OK")
</pallas_src>

<mosaic_0001>
module attributes {stable_mosaic.version = 11 : i64} {
  func.func @_stgcn_fused_kernel(%arg0: i32, %arg1: memref<16x48xf32, #tpu.memory_space<vmem>>, %arg2: memref<16x16xbf16, #tpu.memory_space<vmem>>, %arg3: memref<16x16xf32, #tpu.memory_space<vmem>>, %arg4: memref<48x640xbf16, #tpu.memory_space<vmem>>, %arg5: memref<48x640xbf16, #tpu.memory_space<vmem>>, %arg6: memref<1x640xf32, #tpu.memory_space<vmem>>, %arg7: memref<1x640xf32, #tpu.memory_space<vmem>>, %arg8: memref<640x160xbf16, #tpu.memory_space<vmem>>, %arg9: memref<160x512xbf16, #tpu.memory_space<vmem>>, %arg10: memref<160x512xbf16, #tpu.memory_space<vmem>>, %arg11: memref<1x512xf32, #tpu.memory_space<vmem>>, %arg12: memref<1x512xf32, #tpu.memory_space<vmem>>, %arg13: memref<16x1xf32, #tpu.memory_space<vmem>>, %arg14: memref<16x1xf32, #tpu.memory_space<vmem>>, %arg15: memref<512x384xbf16, #tpu.memory_space<vmem>>, %arg16: memref<512x384xbf16, #tpu.memory_space<vmem>>, %arg17: memref<1x384xf32, #tpu.memory_space<vmem>>, %arg18: memref<1x384xf32, #tpu.memory_space<vmem>>, %arg19: memref<384x96xbf16, #tpu.memory_space<vmem>>, %arg20: memref<96x256xbf16, #tpu.memory_space<vmem>>, %arg21: memref<96x256xbf16, #tpu.memory_space<vmem>>, %arg22: memref<1x256xf32, #tpu.memory_space<vmem>>, %arg23: memref<1x256xf32, #tpu.memory_space<vmem>>, %arg24: memref<16x1xf32, #tpu.memory_space<vmem>>, %arg25: memref<16x1xf32, #tpu.memory_space<vmem>>, %arg26: memref<256x128xbf16, #tpu.memory_space<vmem>>, %arg27: memref<256x128xbf16, #tpu.memory_space<vmem>>, %arg28: memref<1x128xf32, #tpu.memory_space<vmem>>, %arg29: memref<1x128xf32, #tpu.memory_space<vmem>>, %arg30: memref<16x128xf32, #tpu.memory_space<vmem>>) attributes {dimension_semantics = [#tpu.dimension_semantics<arbitrary>], iteration_bounds = array<i64: 1>, scalar_prefetch = 0 : i64, scratch_operands = 0 : i64, tpu.core_type = #tpu.core_type<tc>, window_params = [{pipeline_mode = #tpu.pipeline_mode<synchronous>, transform_indices = @transform_0, window_bounds = array<i64: 16, 48>}, {pipeline_mode = #tpu.pipeline_mode<synchronous>, transform_indices = @transform_1, window_bounds = array<i64: 16, 16>}, {pipeline_mode = #tpu.pipeline_mode<synchronous>, transform_indices = @transform_2, window_bounds = array<i64: 16, 16>}, {pipeline_mode = #tpu.pipeline_mode<synchronous>, transform_indices = @transform_3, window_bounds = array<i64: 48, 640>}, {pipeline_mode = #tpu.pipeline_mode<synchronous>, transform_indices = @transform_4, window_bounds = array<i64: 48, 640>}, {pipeline_mode = #tpu.pipeline_mode<synchronous>, transform_indices = @transform_5, window_bounds = array<i64: 1, 640>}, {pipeline_mode = #tpu.pipeline_mode<synchronous>, transform_indices = @transform_6, window_bounds = array<i64: 1, 640>}, {pipeline_mode = #tpu.pipeline_mode<synchronous>, transform_indices = @transform_7, window_bounds = array<i64: 640, 160>}, {pipeline_mode = #tpu.pipeline_mode<synchronous>, transform_indices = @transform_8, window_bounds = array<i64: 160, 512>}, {pipeline_mode = #tpu.pipeline_mode<synchronous>, transform_indices = @transform_9, window_bounds = array<i64: 160, 512>}, {pipeline_mode = #tpu.pipeline_mode<synchronous>, transform_indices = @transform_10, window_bounds = array<i64: 1, 512>}, {pipeline_mode = #tpu.pipeline_mode<synchronous>, transform_indices = @transform_11, window_bounds = array<i64: 1, 512>}, {pipeline_mode = #tpu.pipeline_mode<synchronous>, transform_indices = @transform_12, window_bounds = array<i64: 16, 1>}, {pipeline_mode = #tpu.pipeline_mode<synchronous>, transform_indices = @transform_13, window_bounds = array<i64: 16, 1>}, {pipeline_mode = #tpu.pipeline_mode<synchronous>, transform_indices = @transform_14, window_bounds = array<i64: 512, 384>}, {pipeline_mode = #tpu.pipeline_mode<synchronous>, transform_indices = @transform_15, window_bounds = array<i64: 512, 384>}, {pipeline_mode = #tpu.pipeline_mode<synchronous>, transform_indices = @transform_16, window_bounds = array<i64: 1, 384>}, {pipeline_mode = #tpu.pipeline_mode<synchronous>, transform_indices = @transform_17, window_bounds = array<i64: 1, 384>}, {pipeline_mode = #tpu.pipeline_mode<synchronous>, transform_indices = @transform_18, window_bounds = array<i64: 384, 96>}, {pipeline_mode = #tpu.pipeline_mode<synchronous>, transform_indices = @transform_19, window_bounds = array<i64: 96, 256>}, {pipeline_mode = #tpu.pipeline_mode<synchronous>, transform_indices = @transform_20, window_bounds = array<i64: 96, 256>}, {pipeline_mode = #tpu.pipeline_mode<synchronous>, transform_indices = @transform_21, window_bounds = array<i64: 1, 256>}, {pipeline_mode = #tpu.pipeline_mode<synchronous>, transform_indices = @transform_22, window_bounds = array<i64: 1, 256>}, {pipeline_mode = #tpu.pipeline_mode<synchronous>, transform_indices = @transform_23, window_bounds = array<i64: 16, 1>}, {pipeline_mode = #tpu.pipeline_mode<synchronous>, transform_indices = @transform_24, window_bounds = array<i64: 16, 1>}, {pipeline_mode = #tpu.pipeline_mode<synchronous>, transform_indices = @transform_25, window_bounds = array<i64: 256, 128>}, {pipeline_mode = #tpu.pipeline_mode<synchronous>, transform_indices = @transform_26, window_bounds = array<i64: 256, 128>}, {pipeline_mode = #tpu.pipeline_mode<synchronous>, transform_indices = @transform_27, window_bounds = array<i64: 1, 128>}, {pipeline_mode = #tpu.pipeline_mode<synchronous>, transform_indices = @transform_28, window_bounds = array<i64: 1, 128>}, {pipeline_mode = #tpu.pipeline_mode<synchronous>, transform_indices = @transform_29, window_bounds = array<i64: 16, 128>}]} {
    %c0 = arith.constant 0 : index
    %c0_0 = arith.constant 0 : index
    %0 = vector.load %arg2[%c0, %c0_0] : memref<16x16xbf16, #tpu.memory_space<vmem>>, vector<16x16xbf16>
    %c0_1 = arith.constant 0 : index
    %c0_2 = arith.constant 0 : index
    %1 = vector.load %arg3[%c0_1, %c0_2] : memref<16x16xf32, #tpu.memory_space<vmem>>, vector<16x16xf32>
    %c0_3 = arith.constant 0 : index
    %c0_4 = arith.constant 0 : index
    %2 = vector.load %arg1[%c0_3, %c0_4] : memref<16x48xf32, #tpu.memory_space<vmem>>, vector<16x48xf32>
    %3 = arith.truncf %2 : vector<16x48xf32> to vector<16x48xbf16>
    %c0_5 = arith.constant 0 : index
    %c0_6 = arith.constant 0 : index
    %4 = vector.load %arg4[%c0_5, %c0_6] : memref<48x640xbf16, #tpu.memory_space<vmem>>, vector<48x640xbf16>
    %cst = arith.constant dense<0.000000e+00> : vector<16x640xf32>
    %5 = tpu.matmul %3, %4, %cst {dimension_numbers = #tpu.dot_dimension_numbers<[1], [0], [0], [1], [0, 0, 1, 1], [], []>} : vector<16x48xbf16>, vector<48x640xbf16>, vector<16x640xf32> -> vector<16x640xf32>
    %c0_7 = arith.constant 0 : index
    %c0_8 = arith.constant 0 : index
    %6 = vector.load %arg6[%c0_7, %c0_8] : memref<1x640xf32, #tpu.memory_space<vmem>>, vector<1x640xf32>
    %7 = vector.broadcast %6 : vector<1x640xf32> to vector<16x640xf32>
    %8 = arith.addf %5, %7 : vector<16x640xf32>
    %c0_9 = arith.constant 0 : index
    %c0_10 = arith.constant 0 : index
    %9 = vector.load %arg5[%c0_9, %c0_10] : memref<48x640xbf16, #tpu.memory_space<vmem>>, vector<48x640xbf16>
    %cst_11 = arith.constant dense<0.000000e+00> : vector<16x640xf32>
    %10 = tpu.matmul %3, %9, %cst_11 {dimension_numbers = #tpu.dot_dimension_numbers<[1], [0], [0], [1], [0, 0, 1, 1], [], []>} : vector<16x48xbf16>, vector<48x640xbf16>, vector<16x640xf32> -> vector<16x640xf32>
    %c0_12 = arith.constant 0 : index
    %c0_13 = arith.constant 0 : index
    %11 = vector.load %arg7[%c0_12, %c0_13] : memref<1x640xf32, #tpu.memory_space<vmem>>, vector<1x640xf32>
    %12 = vector.broadcast %11 : vector<1x640xf32> to vector<16x640xf32>
    %13 = arith.addf %10, %12 : vector<16x640xf32>
    %14 = arith.negf %13 : vector<16x640xf32>
    %15 = math.exp %14 : vector<16x640xf32>
    %cst_14 = arith.constant 1.000000e+00 : f32
    %16 = vector.broadcast %cst_14 : f32 to vector<16x640xf32>
    %17 = arith.addf %16, %15 : vector<16x640xf32>
    %18 = arith.divf %16, %17 : vector<16x640xf32>
    %19 = arith.addf %8, %18 : vector<16x640xf32>
    %cst_15 = arith.constant 0.000000e+00 : f32
    %20 = vector.broadcast %cst_15 : f32 to vector<16x640xf32>
    %21 = arith.maximumf %19, %20 : vector<16x640xf32>
    %22 = arith.truncf %21 : vector<16x640xf32> to vector<16x640xbf16>
    %cst_16 = arith.constant dense<0.000000e+00> : vector<16x640xf32>
    %23 = tpu.matmul %0, %22, %cst_16 {dimension_numbers = #tpu.dot_dimension_numbers<[1], [0], [0], [1], [0, 0, 1, 1], [], []>} : vector<16x16xbf16>, vector<16x640xbf16>, vector<16x640xf32> -> vector<16x640xf32>
    %24 = arith.truncf %23 : vector<16x640xf32> to vector<16x640xbf16>
    %c0_17 = arith.constant 0 : index
    %c0_18 = arith.constant 0 : index
    %25 = vector.load %arg8[%c0_17, %c0_18] : memref<640x160xbf16, #tpu.memory_space<vmem>>, vector<640x160xbf16>
    %cst_19 = arith.constant dense<0.000000e+00> : vector<16x160xf32>
    %26 = tpu.matmul %24, %25, %cst_19 {dimension_numbers = #tpu.dot_dimension_numbers<[1], [0], [0], [1], [0, 0, 1, 1], [], []>} : vector<16x640xbf16>, vector<640x160xbf16>, vector<16x160xf32> -> vector<16x160xf32>
    %cst_20 = arith.constant 0.000000e+00 : f32
    %27 = vector.broadcast %cst_20 : f32 to vector<16x160xf32>
    %28 = arith.maximumf %26, %27 : vector<16x160xf32>
    %29 = arith.truncf %28 : vector<16x160xf32> to vector<16x160xbf16>
    %c0_21 = arith.constant 0 : index
    %c0_22 = arith.constant 0 : index
    %30 = vector.load %arg9[%c0_21, %c0_22] : memref<160x512xbf16, #tpu.memory_space<vmem>>, vector<160x512xbf16>
    %cst_23 = arith.constant dense<0.000000e+00> : vector<16x512xf32>
    %31 = tpu.matmul %29, %30, %cst_23 {dimension_numbers = #tpu.dot_dimension_numbers<[1], [0], [0], [1], [0, 0, 1, 1], [], []>} : vector<16x160xbf16>, vector<160x512xbf16>, vector<16x512xf32> -> vector<16x512xf32>
    %c0_24 = arith.constant 0 : index
    %c0_25 = arith.constant 0 : index
    %32 = vector.load %arg11[%c0_24, %c0_25] : memref<1x512xf32, #tpu.memory_space<vmem>>, vector<1x512xf32>
    %33 = vector.broadcast %32 : vector<1x512xf32> to vector<16x512xf32>
    %34 = arith.addf %31, %33 : vector<16x512xf32>
    %c0_26 = arith.constant 0 : index
    %c0_27 = arith.constant 0 : index
    %35 = vector.load %arg10[%c0_26, %c0_27] : memref<160x512xbf16, #tpu.memory_space<vmem>>, vector<160x512xbf16>
    %cst_28 = arith.constant dense<0.000000e+00> : vector<16x512xf32>
    %36 = tpu.matmul %29, %35, %cst_28 {dimension_numbers = #tpu.dot_dimension_numbers<[1], [0], [0], [1], [0, 0, 1, 1], [], []>} : vector<16x160xbf16>, vector<160x512xbf16>, vector<16x512xf32> -> vector<16x512xf32>
    %c0_29 = arith.constant 0 : index
    %c0_30 = arith.constant 0 : index
    %37 = vector.load %arg12[%c0_29, %c0_30] : memref<1x512xf32, #tpu.memory_space<vmem>>, vector<1x512xf32>
    %38 = vector.broadcast %37 : vector<1x512xf32> to vector<16x512xf32>
    %39 = arith.addf %36, %38 : vector<16x512xf32>
    %40 = arith.negf %39 : vector<16x512xf32>
    %41 = math.exp %40 : vector<16x512xf32>
    %cst_31 = arith.constant 1.000000e+00 : f32
    %42 = vector.broadcast %cst_31 : f32 to vector<16x512xf32>
    %43 = arith.addf %42, %41 : vector<16x512xf32>
    %44 = arith.divf %42, %43 : vector<16x512xf32>
    %45 = arith.addf %34, %44 : vector<16x512xf32>
    %cst_32 = arith.constant 0.000000e+00 : f32
    %46 = vector.broadcast %cst_32 : f32 to vector<16x512xf32>
    %47 = arith.maximumf %45, %46 : vector<16x512xf32>
    %cst_33 = arith.constant dense<0.000000e+00> : vector<16x512xf32>
    %48 = tpu.matmul %1, %47, %cst_33 {dimension_numbers = #tpu.dot_dimension_numbers<[1], [0], [0], [1], [0, 0, 1, 1], [], []>} : vector<16x16xf32>, vector<16x512xf32>, vector<16x512xf32> -> vector<16x512xf32>
    %49 = arith.mulf %47, %47 : vector<16x512xf32>
    %cst_34 = arith.constant dense<0.000000e+00> : vector<16x512xf32>
    %50 = tpu.matmul %1, %49, %cst_34 {dimension_numbers = #tpu.dot_dimension_numbers<[1], [0], [0], [1], [0, 0, 1, 1], [], []>} : vector<16x16xf32>, vector<16x512xf32>, vector<16x512xf32> -> vector<16x512xf32>
    %cst_35 = arith.constant dense<0.000000e+00> : vector<16xf32>
    %51 = vector.multi_reduction <add>, %48, %cst_35 [1] : vector<16x512xf32> to vector<16xf32>
    %52 = vector.shape_cast %51 : vector<16xf32> to vector<16x1xf32>
    %cst_36 = arith.constant 5.120000e+02 : f32
    %53 = vector.broadcast %cst_36 : f32 to vector<16x1xf32>
    %54 = arith.divf %52, %53 : vector<16x1xf32>
    %cst_37 = arith.constant dense<0.000000e+00> : vector<16xf32>
    %55 = vector.multi_reduction <add>, %50, %cst_37 [1] : vector<16x512xf32> to vector<16xf32>
    %56 = vector.shape_cast %55 : vector<16xf32> to vector<16x1xf32>
    %cst_38 = arith.constant 5.120000e+02 : f32
    %57 = vector.broadcast %cst_38 : f32 to vector<16x1xf32>
    %58 = arith.divf %56, %57 : vector<16x1xf32>
    %59 = arith.mulf %54, %54 : vector<16x1xf32>
    %60 = arith.subf %58, %59 : vector<16x1xf32>
    %cst_39 = arith.constant 0.000000e+00 : f32
    %61 = vector.broadcast %cst_39 : f32 to vector<16x1xf32>
    %62 = arith.maximumf %60, %61 : vector<16x1xf32>
    %63 = vector.broadcast %54 : vector<16x1xf32> to vector<16x512xf32>
    %64 = arith.subf %47, %63 : vector<16x512xf32>
    %cst_40 = arith.constant 9.99999974E-6 : f32
    %65 = vector.broadcast %cst_40 : f32 to vector<16x1xf32>
    %66 = arith.addf %62, %65 : vector<16x1xf32>
    %67 = math.rsqrt %66 : vector<16x1xf32>
    %68 = vector.broadcast %67 : vector<16x1xf32> to vector<16x512xf32>
    %69 = arith.mulf %64, %68 : vector<16x512xf32>
    %c0_41 = arith.constant 0 : index
    %c0_42 = arith.constant 0 : index
    %70 = vector.load %arg13[%c0_41, %c0_42] : memref<16x1xf32, #tpu.memory_space<vmem>>, vector<16x1xf32>
    %71 = vector.broadcast %70 : vector<16x1xf32> to vector<16x512xf32>
    %72 = arith.mulf %69, %71 : vector<16x512xf32>
    %c0_43 = arith.constant 0 : index
    %c0_44 = arith.constant 0 : index
    %73 = vector.load %arg14[%c0_43, %c0_44] : memref<16x1xf32, #tpu.memory_space<vmem>>, vector<16x1xf32>
    %74 = vector.broadcast %73 : vector<16x1xf32> to vector<16x512xf32>
    %75 = arith.addf %72, %74 : vector<16x512xf32>
    %76 = arith.truncf %75 : vector<16x512xf32> to vector<16x512xbf16>
    %c0_45 = arith.constant 0 : index
    %c0_46 = arith.constant 0 : index
    %77 = vector.load %arg15[%c0_45, %c0_46] : memref<512x384xbf16, #tpu.memory_space<vmem>>, vector<512x384xbf16>
    %cst_47 = arith.constant dense<0.000000e+00> : vector<16x384xf32>
    %78 = tpu.matmul %76, %77, %cst_47 {dimension_numbers = #tpu.dot_dimension_numbers<[1], [0], [0], [1], [0, 0, 1, 1], [], []>} : vector<16x512xbf16>, vector<512x384xbf16>, vector<16x384xf32> -> vector<16x384xf32>
    %c0_48 = arith.constant 0 : index
    %c0_49 = arith.constant 0 : index
    %79 = vector.load %arg17[%c0_48, %c0_49] : memref<1x384xf32, #tpu.memory_space<vmem>>, vector<1x384xf32>
    %80 = vector.broadcast %79 : vector<1x384xf32> to vector<16x384xf32>
    %81 = arith.addf %78, %80 : vector<16x384xf32>
    %c0_50 = arith.constant 0 : index
    %c0_51 = arith.constant 0 : index
    %82 = vector.load %arg16[%c0_50, %c0_51] : memref<512x384xbf16, #tpu.memory_space<vmem>>, vector<512x384xbf16>
    %cst_52 = arith.constant dense<0.000000e+00> : vector<16x384xf32>
    %83 = tpu.matmul %76, %82, %cst_52 {dimension_numbers = #tpu.dot_dimension_numbers<[1], [0], [0], [1], [0, 0, 1, 1], [], []>} : vector<16x512xbf16>, vector<512x384xbf16>, vector<16x384xf32> -> vector<16x384xf32>
    %c0_53 = arith.constant 0 : index
    %c0_54 = arith.constant 0 : index
    %84 = vector.load %arg18[%c0_53, %c0_54] : memref<1x384xf32, #tpu.memory_space<vmem>>, vector<1x384xf32>
    %85 = vector.broadcast %84 : vector<1x384xf32> to vector<16x384xf32>
    %86 = arith.addf %83, %85 : vector<16x384xf32>
    %87 = arith.negf %86 : vector<16x384xf32>
    %88 = math.exp %87 : vector<16x384xf32>
    %cst_55 = arith.constant 1.000000e+00 : f32
    %89 = vector.broadcast %cst_55 : f32 to vector<16x384xf32>
    %90 = arith.addf %89, %88 : vector<16x384xf32>
    %91 = arith.divf %89, %90 : vector<16x384xf32>
    %92 = arith.addf %81, %91 : vector<16x384xf32>
    %cst_56 = arith.constant 0.000000e+00 : f32
    %93 = vector.broadcast %cst_56 : f32 to vector<16x384xf32>
    %94 = arith.maximumf %92, %93 : vector<16x384xf32>
    %95 = arith.truncf %94 : vector<16x384xf32> to vector<16x384xbf16>
    %cst_57 = arith.constant dense<0.000000e+00> : vector<16x384xf32>
    %96 = tpu.matmul %0, %95, %cst_57 {dimension_numbers = #tpu.dot_dimension_numbers<[1], [0], [0], [1], [0, 0, 1, 1], [], []>} : vector<16x16xbf16>, vector<16x384xbf16>, vector<16x384xf32> -> vector<16x384xf32>
    %97 = arith.truncf %96 : vector<16x384xf32> to vector<16x384xbf16>
    %c0_58 = arith.constant 0 : index
    %c0_59 = arith.constant 0 : index
    %98 = vector.load %arg19[%c0_58, %c0_59] : memref<384x96xbf16, #tpu.memory_space<vmem>>, vector<384x96xbf16>
    %cst_60 = arith.constant dense<0.000000e+00> : vector<16x96xf32>
    %99 = tpu.matmul %97, %98, %cst_60 {dimension_numbers = #tpu.dot_dimension_numbers<[1], [0], [0], [1], [0, 0, 1, 1], [], []>} : vector<16x384xbf16>, vector<384x96xbf16>, vector<16x96xf32> -> vector<16x96xf32>
    %cst_61 = arith.constant 0.000000e+00 : f32
    %100 = vector.broadcast %cst_61 : f32 to vector<16x96xf32>
    %101 = arith.maximumf %99, %100 : vector<16x96xf32>
    %102 = arith.truncf %101 : vector<16x96xf32> to vector<16x96xbf16>
    %c0_62 = arith.constant 0 : index
    %c0_63 = arith.constant 0 : index
    %103 = vector.load %arg20[%c0_62, %c0_63] : memref<96x256xbf16, #tpu.memory_space<vmem>>, vector<96x256xbf16>
    %cst_64 = arith.constant dense<0.000000e+00> : vector<16x256xf32>
    %104 = tpu.matmul %102, %103, %cst_64 {dimension_numbers = #tpu.dot_dimension_numbers<[1], [0], [0], [1], [0, 0, 1, 1], [], []>} : vector<16x96xbf16>, vector<96x256xbf16>, vector<16x256xf32> -> vector<16x256xf32>
    %c0_65 = arith.constant 0 : index
    %c0_66 = arith.constant 0 : index
    %105 = vector.load %arg22[%c0_65, %c0_66] : memref<1x256xf32, #tpu.memory_space<vmem>>, vector<1x256xf32>
    %106 = vector.broadcast %105 : vector<1x256xf32> to vector<16x256xf32>
    %107 = arith.addf %104, %106 : vector<16x256xf32>
    %c0_67 = arith.constant 0 : index
    %c0_68 = arith.constant 0 : index
    %108 = vector.load %arg21[%c0_67, %c0_68] : memref<96x256xbf16, #tpu.memory_space<vmem>>, vector<96x256xbf16>
    %cst_69 = arith.constant dense<0.000000e+00> : vector<16x256xf32>
    %109 = tpu.matmul %102, %108, %cst_69 {dimension_numbers = #tpu.dot_dimension_numbers<[1], [0], [0], [1], [0, 0, 1, 1], [], []>} : vector<16x96xbf16>, vector<96x256xbf16>, vector<16x256xf32> -> vector<16x256xf32>
    %c0_70 = arith.constant 0 : index
    %c0_71 = arith.constant 0 : index
    %110 = vector.load %arg23[%c0_70, %c0_71] : memref<1x256xf32, #tpu.memory_space<vmem>>, vector<1x256xf32>
    %111 = vector.broadcast %110 : vector<1x256xf32> to vector<16x256xf32>
    %112 = arith.addf %109, %111 : vector<16x256xf32>
    %113 = arith.negf %112 : vector<16x256xf32>
    %114 = math.exp %113 : vector<16x256xf32>
    %cst_72 = arith.constant 1.000000e+00 : f32
    %115 = vector.broadcast %cst_72 : f32 to vector<16x256xf32>
    %116 = arith.addf %115, %114 : vector<16x256xf32>
    %117 = arith.divf %115, %116 : vector<16x256xf32>
    %118 = arith.addf %107, %117 : vector<16x256xf32>
    %cst_73 = arith.constant 0.000000e+00 : f32
    %119 = vector.broadcast %cst_73 : f32 to vector<16x256xf32>
    %120 = arith.maximumf %118, %119 : vector<16x256xf32>
    %cst_74 = arith.constant dense<0.000000e+00> : vector<16x256xf32>
    %121 = tpu.matmul %1, %120, %cst_74 {dimension_numbers = #tpu.dot_dimension_numbers<[1], [0], [0], [1], [0, 0, 1, 1], [], []>} : vector<16x16xf32>, vector<16x256xf32>, vector<16x256xf32> -> vector<16x256xf32>
    %122 = arith.mulf %120, %120 : vector<16x256xf32>
    %cst_75 = arith.constant dense<0.000000e+00> : vector<16x256xf32>
    %123 = tpu.matmul %1, %122, %cst_75 {dimension_numbers = #tpu.dot_dimension_numbers<[1], [0], [0], [1], [0, 0, 1, 1], [], []>} : vector<16x16xf32>, vector<16x256xf32>, vector<16x256xf32> -> vector<16x256xf32>
    %cst_76 = arith.constant dense<0.000000e+00> : vector<16xf32>
    %124 = vector.multi_reduction <add>, %121, %cst_76 [1] : vector<16x256xf32> to vector<16xf32>
    %125 = vector.shape_cast %124 : vector<16xf32> to vector<16x1xf32>
    %cst_77 = arith.constant 2.560000e+02 : f32
    %126 = vector.broadcast %cst_77 : f32 to vector<16x1xf32>
    %127 = arith.divf %125, %126 : vector<16x1xf32>
    %cst_78 = arith.constant dense<0.000000e+00> : vector<16xf32>
    %128 = vector.multi_reduction <add>, %123, %cst_78 [1] : vector<16x256xf32> to vector<16xf32>
    %129 = vector.shape_cast %128 : vector<16xf32> to vector<16x1xf32>
    %cst_79 = arith.constant 2.560000e+02 : f32
    %130 = vector.broadcast %cst_79 : f32 to vector<16x1xf32>
    %131 = arith.divf %129, %130 : vector<16x1xf32>
    %132 = arith.mulf %127, %127 : vector<16x1xf32>
    %133 = arith.subf %131, %132 : vector<16x1xf32>
    %cst_80 = arith.constant 0.000000e+00 : f32
    %134 = vector.broadcast %cst_80 : f32 to vector<16x1xf32>
    %135 = arith.maximumf %133, %134 : vector<16x1xf32>
    %136 = vector.broadcast %127 : vector<16x1xf32> to vector<16x256xf32>
    %137 = arith.subf %120, %136 : vector<16x256xf32>
    %cst_81 = arith.constant 9.99999974E-6 : f32
    %138 = vector.broadcast %cst_81 : f32 to vector<16x1xf32>
    %139 = arith.addf %135, %138 : vector<16x1xf32>
    %140 = math.rsqrt %139 : vector<16x1xf32>
    %141 = vector.broadcast %140 : vector<16x1xf32> to vector<16x256xf32>
    %142 = arith.mulf %137, %141 : vector<16x256xf32>
    %c0_82 = arith.constant 0 : index
    %c0_83 = arith.constant 0 : index
    %143 = vector.load %arg24[%c0_82, %c0_83] : memref<16x1xf32, #tpu.memory_space<vmem>>, vector<16x1xf32>
    %144 = vector.broadcast %143 : vector<16x1xf32> to vector<16x256xf32>
    %145 = arith.mulf %142, %144 : vector<16x256xf32>
    %c0_84 = arith.constant 0 : index
    %c0_85 = arith.constant 0 : index
    %146 = vector.load %arg25[%c0_84, %c0_85] : memref<16x1xf32, #tpu.memory_space<vmem>>, vector<16x1xf32>
    %147 = vector.broadcast %146 : vector<16x1xf32> to vector<16x256xf32>
    %148 = arith.addf %145, %147 : vector<16x256xf32>
    %149 = arith.truncf %148 : vector<16x256xf32> to vector<16x256xbf16>
    %c0_86 = arith.constant 0 : index
    %c0_87 = arith.constant 0 : index
    %150 = vector.load %arg26[%c0_86, %c0_87] : memref<256x128xbf16, #tpu.memory_space<vmem>>, vector<256x128xbf16>
    %cst_88 = arith.constant dense<0.000000e+00> : vector<16x128xf32>
    %151 = tpu.matmul %149, %150, %cst_88 {dimension_numbers = #tpu.dot_dimension_numbers<[1], [0], [0], [1], [0, 0, 1, 1], [], []>} : vector<16x256xbf16>, vector<256x128xbf16>, vector<16x128xf32> -> vector<16x128xf32>
    %c0_89 = arith.constant 0 : index
    %c0_90 = arith.constant 0 : index
    %152 = vector.load %arg28[%c0_89, %c0_90] : memref<1x128xf32, #tpu.memory_space<vmem>>, vector<1x128xf32>
    %153 = vector.broadcast %152 : vector<1x128xf32> to vector<16x128xf32>
    %154 = arith.addf %151, %153 : vector<16x128xf32>
    %c0_91 = arith.constant 0 : index
    %c0_92 = arith.constant 0 : index
    %155 = vector.load %arg27[%c0_91, %c0_92] : memref<256x128xbf16, #tpu.memory_space<vmem>>, vector<256x128xbf16>
    %cst_93 = arith.constant dense<0.000000e+00> : vector<16x128xf32>
    %156 = tpu.matmul %149, %155, %cst_93 {dimension_numbers = #tpu.dot_dimension_numbers<[1], [0], [0], [1], [0, 0, 1, 1], [], []>} : vector<16x256xbf16>, vector<256x128xbf16>, vector<16x128xf32> -> vector<16x128xf32>
    %c0_94 = arith.constant 0 : index
    %c0_95 = arith.constant 0 : index
    %157 = vector.load %arg29[%c0_94, %c0_95] : memref<1x128xf32, #tpu.memory_space<vmem>>, vector<1x128xf32>
    %158 = vector.broadcast %157 : vector<1x128xf32> to vector<16x128xf32>
    %159 = arith.addf %156, %158 : vector<16x128xf32>
    %160 = arith.negf %159 : vector<16x128xf32>
    %161 = math.exp %160 : vector<16x128xf32>
    %cst_96 = arith.constant 1.000000e+00 : f32
    %162 = vector.broadcast %cst_96 : f32 to vector<16x128xf32>
    %163 = arith.addf %162, %161 : vector<16x128xf32>
    %164 = arith.divf %162, %163 : vector<16x128xf32>
    %165 = arith.addf %154, %164 : vector<16x128xf32>
    %cst_97 = arith.constant 0.000000e+00 : f32
    %166 = vector.broadcast %cst_97 : f32 to vector<16x128xf32>
    %167 = arith.maximumf %165, %166 : vector<16x128xf32>
    %c0_98 = arith.constant 0 : index
    %c0_99 = arith.constant 0 : index
    %168 = vector.load %arg30[%c0_98, %c0_99] : memref<16x128xf32, #tpu.memory_space<vmem>>, vector<16x128xf32>
    tpu.vector_store %arg30[%c0_98, %c0_99], %167 {strides = array<i32>} : memref<16x128xf32, #tpu.memory_space<vmem>>, vector<16x128xf32>,
    return
  }
  func.func @transform_0(%arg0: i32) -> (i32, i32) {
    %c0_i32 = arith.constant 0 : i32
    %c0_i32_0 = arith.constant 0 : i32
    %c0_i32_1 = arith.constant 0 : i32
    return %c0_i32, %c0_i32_0 : i32, i32
  }
  func.func @transform_1(%arg0: i32) -> (i32, i32) {
    %c0_i32 = arith.constant 0 : i32
    %c0_i32_0 = arith.constant 0 : i32
    %c0_i32_1 = arith.constant 0 : i32
    return %c0_i32, %c0_i32_0 : i32, i32
  }
  func.func @transform_2(%arg0: i32) -> (i32, i32) {
    %c0_i32 = arith.constant 0 : i32
    %c0_i32_0 = arith.constant 0 : i32
    %c0_i32_1 = arith.constant 0 : i32
    return %c0_i32, %c0_i32_0 : i32, i32
  }
  func.func @transform_3(%arg0: i32) -> (i32, i32) {
    %c0_i32 = arith.constant 0 : i32
    %c0_i32_0 = arith.constant 0 : i32
    %c0_i32_1 = arith.constant 0 : i32
    return %c0_i32, %c0_i32_0 : i32, i32
  }
  func.func @transform_4(%arg0: i32) -> (i32, i32) {
    %c0_i32 = arith.constant 0 : i32
    %c0_i32_0 = arith.constant 0 : i32
    %c0_i32_1 = arith.constant 0 : i32
    return %c0_i32, %c0_i32_0 : i32, i32
  }
  func.func @transform_5(%arg0: i32) -> (i32, i32) {
    %c0_i32 = arith.constant 0 : i32
    %c0_i32_0 = arith.constant 0 : i32
    %c0_i32_1 = arith.constant 0 : i32
    return %c0_i32, %c0_i32_0 : i32, i32
  }
  func.func @transform_6(%arg0: i32) -> (i32, i32) {
    %c0_i32 = arith.constant 0 : i32
    %c0_i32_0 = arith.constant 0 : i32
    %c0_i32_1 = arith.constant 0 : i32
    return %c0_i32, %c0_i32_0 : i32, i32
  }
  func.func @transform_7(%arg0: i32) -> (i32, i32) {
    %c0_i32 = arith.constant 0 : i32
    %c0_i32_0 = arith.constant 0 : i32
    %c0_i32_1 = arith.constant 0 : i32
    return %c0_i32, %c0_i32_0 : i32, i32
  }
  func.func @transform_8(%arg0: i32) -> (i32, i32) {
    %c0_i32 = arith.constant 0 : i32
    %c0_i32_0 = arith.constant 0 : i32
    %c0_i32_1 = arith.constant 0 : i32
    return %c0_i32, %c0_i32_0 : i32, i32
  }
  func.func @transform_9(%arg0: i32) -> (i32, i32) {
    %c0_i32 = arith.constant 0 : i32
    %c0_i32_0 = arith.constant 0 : i32
    %c0_i32_1 = arith.constant 0 : i32
    return %c0_i32, %c0_i32_0 : i32, i32
  }
  func.func @transform_10(%arg0: i32) -> (i32, i32) {
    %c0_i32 = arith.constant 0 : i32
    %c0_i32_0 = arith.constant 0 : i32
    %c0_i32_1 = arith.constant 0 : i32
    return %c0_i32, %c0_i32_0 : i32, i32
  }
  func.func @transform_11(%arg0: i32) -> (i32, i32) {
    %c0_i32 = arith.constant 0 : i32
    %c0_i32_0 = arith.constant 0 : i32
    %c0_i32_1 = arith.constant 0 : i32
    return %c0_i32, %c0_i32_0 : i32, i32
  }
  func.func @transform_12(%arg0: i32) -> (i32, i32) {
    %c0_i32 = arith.constant 0 : i32
    %c0_i32_0 = arith.constant 0 : i32
    %c0_i32_1 = arith.constant 0 : i32
    return %c0_i32, %c0_i32_0 : i32, i32
  }
  func.func @transform_13(%arg0: i32) -> (i32, i32) {
    %c0_i32 = arith.constant 0 : i32
    %c0_i32_0 = arith.constant 0 : i32
    %c0_i32_1 = arith.constant 0 : i32
    return %c0_i32, %c0_i32_0 : i32, i32
  }
  func.func @transform_14(%arg0: i32) -> (i32, i32) {
    %c0_i32 = arith.constant 0 : i32
    %c0_i32_0 = arith.constant 0 : i32
    %c0_i32_1 = arith.constant 0 : i32
    return %c0_i32, %c0_i32_0 : i32, i32
  }
  func.func @transform_15(%arg0: i32) -> (i32, i32) {
    %c0_i32 = arith.constant 0 : i32
    %c0_i32_0 = arith.constant 0 : i32
    %c0_i32_1 = arith.constant 0 : i32
    return %c0_i32, %c0_i32_0 : i32, i32
  }
  func.func @transform_16(%arg0: i32) -> (i32, i32) {
    %c0_i32 = arith.constant 0 : i32
    %c0_i32_0 = arith.constant 0 : i32
    %c0_i32_1 = arith.constant 0 : i32
    return %c0_i32, %c0_i32_0 : i32, i32
  }
  func.func @transform_17(%arg0: i32) -> (i32, i32) {
    %c0_i32 = arith.constant 0 : i32
    %c0_i32_0 = arith.constant 0 : i32
    %c0_i32_1 = arith.constant 0 : i32
    return %c0_i32, %c0_i32_0 : i32, i32
  }
  func.func @transform_18(%arg0: i32) -> (i32, i32) {
    %c0_i32 = arith.constant 0 : i32
    %c0_i32_0 = arith.constant 0 : i32
    %c0_i32_1 = arith.constant 0 : i32
    return %c0_i32, %c0_i32_0 : i32, i32
  }
  func.func @transform_19(%arg0: i32) -> (i32, i32) {
    %c0_i32 = arith.constant 0 : i32
    %c0_i32_0 = arith.constant 0 : i32
    %c0_i32_1 = arith.constant 0 : i32
    return %c0_i32, %c0_i32_0 : i32, i32
  }
  func.func @transform_20(%arg0: i32) -> (i32, i32) {
    %c0_i32 = arith.constant 0 : i32
    %c0_i32_0 = arith.constant 0 : i32
    %c0_i32_1 = arith.constant 0 : i32
    return %c0_i32, %c0_i32_0 : i32, i32
  }
  func.func @transform_21(%arg0: i32) -> (i32, i32) {
    %c0_i32 = arith.constant 0 : i32
    %c0_i32_0 = arith.constant 0 : i32
    %c0_i32_1 = arith.constant 0 : i32
    return %c0_i32, %c0_i32_0 : i32, i32
  }
  func.func @transform_22(%arg0: i32) -> (i32, i32) {
    %c0_i32 = arith.constant 0 : i32
    %c0_i32_0 = arith.constant 0 : i32
    %c0_i32_1 = arith.constant 0 : i32
    return %c0_i32, %c0_i32_0 : i32, i32
  }
  func.func @transform_23(%arg0: i32) -> (i32, i32) {
    %c0_i32 = arith.constant 0 : i32
    %c0_i32_0 = arith.constant 0 : i32
    %c0_i32_1 = arith.constant 0 : i32
    return %c0_i32, %c0_i32_0 : i32, i32
  }
  func.func @transform_24(%arg0: i32) -> (i32, i32) {
    %c0_i32 = arith.constant 0 : i32
    %c0_i32_0 = arith.constant 0 : i32
    %c0_i32_1 = arith.constant 0 : i32
    return %c0_i32, %c0_i32_0 : i32, i32
  }
  func.func @transform_25(%arg0: i32) -> (i32, i32) {
    %c0_i32 = arith.constant 0 : i32
    %c0_i32_0 = arith.constant 0 : i32
    %c0_i32_1 = arith.constant 0 : i32
    return %c0_i32, %c0_i32_0 : i32, i32
  }
  func.func @transform_26(%arg0: i32) -> (i32, i32) {
    %c0_i32 = arith.constant 0 : i32
    %c0_i32_0 = arith.constant 0 : i32
    %c0_i32_1 = arith.constant 0 : i32
    return %c0_i32, %c0_i32_0 : i32, i32
  }
  func.func @transform_27(%arg0: i32) -> (i32, i32) {
    %c0_i32 = arith.constant 0 : i32
    %c0_i32_0 = arith.constant 0 : i32
    %c0_i32_1 = arith.constant 0 : i32
    return %c0_i32, %c0_i32_0 : i32, i32
  }
  func.func @transform_28(%arg0: i32) -> (i32, i32) {
    %c0_i32 = arith.constant 0 : i32
    %c0_i32_0 = arith.constant 0 : i32
    %c0_i32_1 = arith.constant 0 : i32
    return %c0_i32, %c0_i32_0 : i32, i32
  }
  func.func @transform_29(%arg0: i32) -> (i32, i32) {
    %c0_i32 = arith.constant 0 : i32
    %c0_i32_0 = arith.constant 0 : i32
    %c0_i32_1 = arith.constant 0 : i32
    return %c0_i32, %c0_i32_0 : i32, i32
  }
}

</mosaic_0001>

<llo_original>
// kernel: tpu_custom_call.1
$region0: #{tpu_custom_call.1}
  #allocation0 [shape = 'u32[]', space=smem, size = 0x4, offset = 0x4, fixed_abs, tag = 'smem constant byte address 0x4 - core index']
  #allocation1 [shape = 'u32[144,128]{1,0:T(1,128)}', space=vmem, size = 0x12000, scoped, tag = 'internal scratch']
  %s0 = inlined_call_operand.smem [shape: u32[30], index: -1, kind: input, shape index: {}]
  %s1 = sld [smem:[%s0]]
  %s2 = scalar_lea.smem %s0, 1
  %s3 = sld [smem:[%s2]]
  %s4 = scalar_lea.smem %s0, 2
  %s5 = sld [smem:[%s4]]
  %s6 = scalar_lea.smem %s0, 3
  %s7 = sld [smem:[%s6]]
  %s8 = scalar_lea.smem %s0, 4
  %s9 = sld [smem:[%s8]]
  %s10 = scalar_lea.smem %s0, 5
  %s11 = sld [smem:[%s10]]
  %s12 = scalar_lea.smem %s0, 6
  %s13 = sld [smem:[%s12]]
  %s14 = scalar_lea.smem %s0, 7
  %s15 = sld [smem:[%s14]]
  %s16 = scalar_lea.smem %s0, 8
  %s17 = sld [smem:[%s16]]
  %s18 = scalar_lea.smem %s0, 9
  %s19 = sld [smem:[%s18]]
  %s20 = scalar_lea.smem %s0, 10
  %s21 = sld [smem:[%s20]]
  %s22 = scalar_lea.smem %s0, 11
  %s23 = sld [smem:[%s22]]
  %s24 = scalar_lea.smem %s0, 12
  %s25 = sld [smem:[%s24]]
  %s26 = scalar_lea.smem %s0, 13
  %s27 = sld [smem:[%s26]]
  %s28 = scalar_lea.smem %s0, 14
  %s29 = sld [smem:[%s28]]
  %s30 = scalar_lea.smem %s0, 15
  %s31 = sld [smem:[%s30]]
  %s32 = scalar_lea.smem %s0, 16
  %s33 = sld [smem:[%s32]]
  %s34 = scalar_lea.smem %s0, 17
  %s35 = sld [smem:[%s34]]
  %s36 = scalar_lea.smem %s0, 18
  %s37 = sld [smem:[%s36]]
  %s38 = scalar_lea.smem %s0, 19
  %s39 = sld [smem:[%s38]]
  %s40 = scalar_lea.smem %s0, 20
  %s41 = sld [smem:[%s40]]
  %s42 = scalar_lea.smem %s0, 21
  %s43 = sld [smem:[%s42]]
  %s44 = scalar_lea.smem %s0, 22
  %s45 = sld [smem:[%s44]]
  %s46 = scalar_lea.smem %s0, 23
  %s47 = sld [smem:[%s46]]
  %s48 = scalar_lea.smem %s0, 24
  %s49 = sld [smem:[%s48]]
  %s50 = scalar_lea.smem %s0, 25
  %s51 = sld [smem:[%s50]]
  %s52 = scalar_lea.smem %s0, 26
  %s53 = sld [smem:[%s52]]
  %s54 = scalar_lea.smem %s0, 27
  %s55 = sld [smem:[%s54]]
  %s56 = scalar_lea.smem %s0, 28
  %s57 = sld [smem:[%s56]]
  %s58 = scalar_lea.smem %s0, 29
  %s59 = sld [smem:[%s58]]
  %s60 = sld [smem:[#allocation0]]
  $region198: #{tpu_custom_call.1} parent=0
    _
  %s62 = ssub.s32 1, %s60
  %s63 = scalar_select 0, %s62, %s60
  $region1: #{tpu_custom_call.1} parent=0
    #allocation2 [shape = 'u8[8192]{0}', space=vmem, size = 0x2000, scoped, tag = 'input window, operand 0, single buffered']
    #allocation3 [shape = 's32[1]{0}', space=sflag, size = 0x4, scoped, tag = 'scoped memory for tpu_custom_call.1']
    #allocation4 [shape = 's32[1]{0}', space=sflag, size = 0x4, scoped, tag = 'scoped memory for tpu_custom_call.1']
    #allocation5 [shape = 'u8[4096]{0}', space=vmem, size = 0x1000, scoped, tag = 'input window, operand 1, single buffered']
    #allocation6 [shape = 's32[1]{0}', space=sflag, size = 0x4, scoped, tag = 'scoped memory for tpu_custom_call.1']
    #allocation7 [shape = 'u8[8192]{0}', space=vmem, size = 0x2000, scoped, tag = 'input window, operand 2, single buffered']
    #allocation8 [shape = 'u8[61440]{0}', space=vmem, size = 0xf000, scoped, tag = 'input window, operand 3, single buffered']
    #allocation9 [shape = 's32[1]{0}', space=sflag, size = 0x4, scoped, tag = 'scoped memory for tpu_custom_call.1']
    #allocation10 [shape = 'u8[61440]{0}', space=vmem, size = 0xf000, scoped, tag = 'input window, operand 4, single buffered']
    #allocation11 [shape = 'u8[2560]{0}', space=vmem, size = 0xc00, scoped, tag = 'input window, operand 5, single buffered']
    #allocation12 [shape = 's32[1]{0}', space=sflag, size = 0x4, scoped, tag = 'scoped memory for tpu_custom_call.1']
    #allocation13 [shape = 'u8[2560]{0}', space=vmem, size = 0xc00, scoped, tag = 'input window, operand 6, single buffered']
    #allocation14 [shape = 'u8[2048]{0}', space=vmem, size = 0x800, scoped, tag = 'input window, operand 10, single buffered']
    #allocation15 [shape = 's32[1]{0}', space=sflag, size = 0x4, scoped, tag = 'scoped memory for tpu_custom_call.1']
    #allocation16 [shape = 'u8[2048]{0}', space=vmem, size = 0x800, scoped, tag = 'input window, operand 11, single buffered']
    #allocation17 [shape = 'u8[393216]{0}', space=vmem, size = 0x60000, scoped, tag = 'input window, operand 15, single buffered']
    #allocation18 [shape = 's32[1]{0}', space=sflag, size = 0x4, scoped, tag = 'scoped memory for tpu_custom_call.1']
    #allocation19 [shape = 'u8[1536]{0}', space=vmem, size = 0x800, scoped, tag = 'input window, operand 16, single buffered']
    #allocation20 [shape = 'u8[1536]{0}', space=vmem, size = 0x800, scoped, tag = 'input window, operand 17, single buffered']
    #allocation21 [shape = 's32[1]{0}', space=sflag, size = 0x4, scoped, tag = 'scoped memory for tpu_custom_call.1']
    #allocation22 [shape = 'u8[49152]{0}', space=vmem, size = 0xc000, scoped, tag = 'input window, operand 19, single buffered']
    #allocation23 [shape = 'u8[49152]{0}', space=vmem, size = 0xc000, scoped, tag = 'input window, operand 20, single buffered']
    #allocation24 [shape = 's32[1]{0}', space=sflag, size = 0x4, scoped, tag = 'scoped memory for tpu_custom_call.1']
    #allocation25 [shape = 'u8[1024]{0}', space=vmem, size = 0x400, scoped, tag = 'input window, operand 22, single buffered']
    #allocation26 [shape = 'u8[65536]{0}', space=vmem, size = 0x10000, scoped, tag = 'input window, operand 26, single buffered']
    #allocation27 [shape = 's32[1]{0}', space=sflag, size = 0x4, scoped, tag = 'scoped memory for tpu_custom_call.1']
    #allocation28 [shape = 'u8[512]{0}', space=vmem, size = 0x400, scoped, tag = 'input window, operand 27, single buffered']
    #allocation29 [shape = 'u8[512]{0}', space=vmem, size = 0x400, scoped, tag = 'input window, operand 28, single buffered']
    #allocation30 [shape = 's32[1]{0}', space=sflag, size = 0x4, scoped, tag = 'scoped memory for tpu_custom_call.1']
    #allocation31 [shape = 'u8[8192]{0}', space=vmem, size = 0x2000, scoped, tag = 'output window, operand 0, single buffered']
    %64 = vsyncpa [#allocation3], 0
    %65 = vsyncpa [#allocation6], 0
    %66 = vsyncpa [#allocation9], 0
    %67 = vsyncpa [#allocation12], 0
    %68 = vsyncpa [#allocation15], 0
    %69 = vsyncpa [#allocation18], 0
    %70 = vsyncpa [#allocation21], 0
    %71 = vsyncpa [#allocation24], 0
    %72 = vsyncpa [#allocation27], 0
    %73 = vsyncpa [#allocation30], 0
    %74 = vsyncpa [#allocation4], 0
    // Predicated region
    $region2: #{tpu_custom_call.1} parent=1 // pred_check
      _
    $region3: #{tpu_custom_call.1} parent=1 // pred_check_branch
      %76 = sbr.rel (0) target = $region5
    $region4: #{tpu_custom_call.1} parent=1 // pred_region
      %s78 = ssub.s32 256, 256
      %79 = vsyncadd [#allocation3], %s78
      %s80 = sshll.u32 [#allocation2], 4
      %s81 = int_to_ptr.vmem [resolvable:$true] %s80
      %86 = dma.hbm_to_vmem [thread:$0]  %s1, 256, %s81, [#allocation3], 128, 128, 8
    $region5: #{tpu_custom_call.1} parent=1 // pred_fallthru
      _
    // Predicated region
    $region6: #{tpu_custom_call.1} parent=1 // pred_check
      _
    $region7: #{tpu_custom_call.1} parent=1 // pred_check_branch
      %88 = sbr.rel (0) target = $region9
    $region8: #{tpu_custom_call.1} parent=1 // pred_region
      %s90 = ssub.s32 128, 128
      %91 = vsyncadd [#allocation6], %s90
      %s92 = sshll.u32 [#allocation5], 4
      %s93 = int_to_ptr.vmem [resolvable:$true] %s92
      %98 = dma.hbm_to_vmem [thread:$0]  %s3, 128, %s93, [#allocation6], 64, 64, 4
    $region9: #{tpu_custom_call.1} parent=1 // pred_fallthru
      _
    // Predicated region
    $region10: #{tpu_custom_call.1} parent=1 // pred_check
      _
    $region11: #{tpu_custom_call.1} parent=1 // pred_check_branch
      %100 = sbr.rel (0) target = $region13
    $region12: #{tpu_custom_call.1} parent=1 // pred_region
      %s102 = ssub.s32 256, 256
      %103 = vsyncadd [#allocation6], %s102
      %s104 = sshll.u32 [#allocation7], 4
      %s105 = int_to_ptr.vmem [resolvable:$true] %s104
      %110 = dma.hbm_to_vmem [thread:$0]  %s5, 256, %s105, [#allocation6], 128, 128, 8
    $region13: #{tpu_custom_call.1} parent=1 // pred_fallthru
      _
    // Predicated region
    $region14: #{tpu_custom_call.1} parent=1 // pred_check
      _
    $region15: #{tpu_custom_call.1} parent=1 // pred_check_branch
      %112 = sbr.rel (0) target = $region17
    $region16: #{tpu_custom_call.1} parent=1 // pred_region
      %s114 = ssub.s32 1920, 1920
      %115 = vsyncadd [#allocation9], %s114
      %s116 = sshll.u32 [#allocation8], 4
      %s117 = int_to_ptr.vmem [resolvable:$true] %s116
      %122 = dma.hbm_to_vmem [thread:$0]  %s7, 1920, %s117, [#allocation9], 320, 320, 20
    $region17: #{tpu_custom_call.1} parent=1 // pred_fallthru
      _
    // Predicated region
    $region18: #{tpu_custom_call.1} parent=1 // pred_check
      _
    $region19: #{tpu_custom_call.1} parent=1 // pred_check_branch
      %124 = sbr.rel (0) target = $region21
    $region20: #{tpu_custom_call.1} parent=1 // pred_region
      %s126 = ssub.s32 1920, 1920
      %127 = vsyncadd [#allocation9], %s126
      %s128 = sshll.u32 [#allocation10], 4
      %s129 = int_to_ptr.vmem [resolvable:$true] %s128
      %134 = dma.hbm_to_vmem [thread:$0]  %s9, 1920, %s129, [#allocation9], 320, 320, 20
    $region21: #{tpu_custom_call.1} parent=1 // pred_fallthru
      _
    // Predicated region
    $region22: #{tpu_custom_call.1} parent=1 // pred_check
      _
    $region23: #{tpu_custom_call.1} parent=1 // pred_check_branch
      %136 = sbr.rel (0) target = $region25
    $region24: #{tpu_custom_call.1} parent=1 // pred_region
      %s138 = ssub.s32 80, 80
      %139 = vsyncadd [#allocation12], %s138
      %s141 = sshll.u32 [#allocation11], 4
      %s142 = int_to_ptr.vmem [resolvable:$true] %s141
      %144 = dma.hbm_to_vmem [thread:$0]  %s11, 80, %s142, [#allocation12]
    $region25: #{tpu_custom_call.1} parent=1 // pred_fallthru
      _
    // Predicated region
    $region26: #{tpu_custom_call.1} parent=1 // pred_check
      _
    $region27: #{tpu_custom_call.1} parent=1 // pred_check_branch
      %146 = sbr.rel (0) target = $region29
    $region28: #{tpu_custom_call.1} parent=1 // pred_region
      %s148 = ssub.s32 80, 80
      %149 = vsyncadd [#allocation12], %s148
      %s151 = sshll.u32 [#allocation13], 4
      %s152 = int_to_ptr.vmem [resolvable:$true] %s151
      %154 = dma.hbm_to_vmem [thread:$0]  %s13, 80, %s152, [#allocation12]
    $region29: #{tpu_custom_call.1} parent=1 // pred_fallthru
      _
    // Predicated region
    $region30: #{tpu_custom_call.1} parent=1 // pred_check
      _
    $region31: #{tpu_custom_call.1} parent=1 // pred_check_branch
      %156 = sbr.rel (0) target = $region33
    $region32: #{tpu_custom_call.1} parent=1 // pred_region
      _
    $region33: #{tpu_custom_call.1} parent=1 // pred_fallthru
      _
    // Predicated region
    $region34: #{tpu_custom_call.1} parent=1 // pred_check
      _
    $region35: #{tpu_custom_call.1} parent=1 // pred_check_branch
      %158 = sbr.rel (0) target = $region37
    $region36: #{tpu_custom_call.1} parent=1 // pred_region
      _
    $region37: #{tpu_custom_call.1} parent=1 // pred_fallthru
      _
    // Predicated region
    $region38: #{tpu_custom_call.1} parent=1 // pred_check
      _
    $region39: #{tpu_custom_call.1} parent=1 // pred_check_branch
      %160 = sbr.rel (0) target = $region41
    $region40: #{tpu_custom_call.1} parent=1 // pred_region
      _
    $region41: #{tpu_custom_call.1} parent=1 // pred_fallthru
      _
    // Predicated region
    $region42: #{tpu_custom_call.1} parent=1 // pred_check
      _
    $region43: #{tpu_custom_call.1} parent=1 // pred_check_branch
      %162 = sbr.rel (0) target = $region45
    $region44: #{tpu_custom_call.1} parent=1 // pred_region
      %s164 = ssub.s32 64, 64
      %165 = vsyncadd [#allocation15], %s164
      %s167 = sshll.u32 [#allocation14], 4
      %s168 = int_to_ptr.vmem [resolvable:$true] %s167
      %170 = dma.hbm_to_vmem [thread:$0]  %s21, 64, %s168, [#allocation15]
    $region45: #{tpu_custom_call.1} parent=1 // pred_fallthru
      _
    // Predicated region
    $region46: #{tpu_custom_call.1} parent=1 // pred_check
      _
    $region47: #{tpu_custom_call.1} parent=1 // pred_check_branch
      %172 = sbr.rel (0) target = $region49
    $region48: #{tpu_custom_call.1} parent=1 // pred_region
      %s174 = ssub.s32 64, 64
      %175 = vsyncadd [#allocation15], %s174
      %s177 = sshll.u32 [#allocation16], 4
      %s178 = int_to_ptr.vmem [resolvable:$true] %s177
      %180 = dma.hbm_to_vmem [thread:$0]  %s23, 64, %s178, [#allocation15]
    $region49: #{tpu_custom_call.1} parent=1 // pred_fallthru
      _
    // Predicated region
    $region50: #{tpu_custom_call.1} parent=1 // pred_check
      _
    $region51: #{tpu_custom_call.1} parent=1 // pred_check_branch
      %182 = sbr.rel (0) target = $region53
    $region52: #{tpu_custom_call.1} parent=1 // pred_region
      _
    $region53: #{tpu_custom_call.1} parent=1 // pred_fallthru
      _
    // Predicated region
    $region54: #{tpu_custom_call.1} parent=1 // pred_check
      _
    $region55: #{tpu_custom_call.1} parent=1 // pred_check_branch
      %184 = sbr.rel (0) target = $region57
    $region56: #{tpu_custom_call.1} parent=1 // pred_region
      _
    $region57: #{tpu_custom_call.1} parent=1 // pred_fallthru
      _
    // Predicated region
    $region58: #{tpu_custom_call.1} parent=1 // pred_check
      _
    $region59: #{tpu_custom_call.1} parent=1 // pred_check_branch
      %186 = sbr.rel (0) target = $region61
    $region60: #{tpu_custom_call.1} parent=1 // pred_region
      _
    $region61: #{tpu_custom_call.1} parent=1 // pred_fallthru
      _
    // Predicated region
    $region62: #{tpu_custom_call.1} parent=1 // pred_check
      _
    $region63: #{tpu_custom_call.1} parent=1 // pred_check_branch
      %188 = sbr.rel (0) target = $region65
    $region64: #{tpu_custom_call.1} parent=1 // pred_region
      %s190 = ssub.s32 12288, 12288
      %191 = vsyncadd [#allocation18], %s190
      %s192 = sshll.u32 [#allocation17], 4
      %s193 = int_to_ptr.vmem [resolvable:$true] %s192
      %198 = dma.hbm_to_vmem [thread:$0]  %s31, 12288, %s193, [#allocation18], 192, 192, 12
    $region65: #{tpu_custom_call.1} parent=1 // pred_fallthru
      _
    // Predicated region
    $region66: #{tpu_custom_call.1} parent=1 // pred_check
      _
    $region67: #{tpu_custom_call.1} parent=1 // pred_check_branch
      %200 = sbr.rel (0) target = $region69
    $region68: #{tpu_custom_call.1} parent=1 // pred_region
      %s202 = ssub.s32 48, 48
      %203 = vsyncadd [#allocation18], %s202
      %s205 = sshll.u32 [#allocation19], 4
      %s206 = int_to_ptr.vmem [resolvable:$true] %s205
      %208 = dma.hbm_to_vmem [thread:$0]  %s33, 48, %s206, [#allocation18]
    $region69: #{tpu_custom_call.1} parent=1 // pred_fallthru
      _
    // Predicated region
    $region70: #{tpu_custom_call.1} parent=1 // pred_check
      _
    $region71: #{tpu_custom_call.1} parent=1 // pred_check_branch
      %210 = sbr.rel (0) target = $region73
    $region72: #{tpu_custom_call.1} parent=1 // pred_region
      %s212 = ssub.s32 48, 48
      %213 = vsyncadd [#allocation21], %s212
      %s215 = sshll.u32 [#allocation20], 4
      %s216 = int_to_ptr.vmem [resolvable:$true] %s215
      %218 = dma.hbm_to_vmem [thread:$0]  %s35, 48, %s216, [#allocation21]
    $region73: #{tpu_custom_call.1} parent=1 // pred_fallthru
      _
    // Predicated region
    $region74: #{tpu_custom_call.1} parent=1 // pred_check
      _
    $region75: #{tpu_custom_call.1} parent=1 // pred_check_branch
      %220 = sbr.rel (0) target = $region77
    $region76: #{tpu_custom_call.1} parent=1 // pred_region
      _
    $region77: #{tpu_custom_call.1} parent=1 // pred_fallthru
      _
    // Predicated region
    $region78: #{tpu_custom_call.1} parent=1 // pred_check
      _
    $region79: #{tpu_custom_call.1} parent=1 // pred_check_branch
      %222 = sbr.rel (0) target = $region81
    $region80: #{tpu_custom_call.1} parent=1 // pred_region
      %s224 = ssub.s32 1536, 1536
      %225 = vsyncadd [#allocation21], %s224
      %s226 = sshll.u32 [#allocation22], 4
      %s227 = int_to_ptr.vmem [resolvable:$true] %s226
      %232 = dma.hbm_to_vmem [thread:$0]  %s39, 1536, %s227, [#allocation21], 128, 128, 8
    $region81: #{tpu_custom_call.1} parent=1 // pred_fallthru
      _
    // Predicated region
    $region82: #{tpu_custom_call.1} parent=1 // pred_check
      _
    $region83: #{tpu_custom_call.1} parent=1 // pred_check_branch
      %234 = sbr.rel (0) target = $region85
    $region84: #{tpu_custom_call.1} parent=1 // pred_region
      %s236 = ssub.s32 1536, 1536
      %237 = vsyncadd [#allocation24], %s236
      %s238 = sshll.u32 [#allocation23], 4
      %s239 = int_to_ptr.vmem [resolvable:$true] %s238
      %244 = dma.hbm_to_vmem [thread:$0]  %s41, 1536, %s239, [#allocation24], 128, 128, 8
    $region85: #{tpu_custom_call.1} parent=1 // pred_fallthru
      _
    // Predicated region
    $region86: #{tpu_custom_call.1} parent=1 // pred_check
      _
    $region87: #{tpu_custom_call.1} parent=1 // pred_check_branch
      %246 = sbr.rel (0) target = $region89
    $region88: #{tpu_custom_call.1} parent=1 // pred_region
      _
    $region89: #{tpu_custom_call.1} parent=1 // pred_fallthru
      _
    // Predicated region
    $region90: #{tpu_custom_call.1} parent=1 // pred_check
      _
    $region91: #{tpu_custom_call.1} parent=1 // pred_check_branch
      %248 = sbr.rel (0) target = $region93
    $region92: #{tpu_custom_call.1} parent=1 // pred_region
      %s250 = ssub.s32 32, 32
      %251 = vsyncadd [#allocation24], %s250
      %s253 = sshll.u32 [#allocation25], 4
      %s254 = int_to_ptr.vmem [resolvable:$true] %s253
      %256 = dma.hbm_to_vmem [thread:$0]  %s45, 32, %s254, [#allocation24]
    $region93: #{tpu_custom_call.1} parent=1 // pred_fallthru
      _
    // Predicated region
    $region94: #{tpu_custom_call.1} parent=1 // pred_check
      _
    $region95: #{tpu_custom_call.1} parent=1 // pred_check_branch
      %258 = sbr.rel (0) target = $region97
    $region96: #{tpu_custom_call.1} parent=1 // pred_region
      _
    $region97: #{tpu_custom_call.1} parent=1 // pred_fallthru
      _
    // Predicated region
    $region98: #{tpu_custom_call.1} parent=1 // pred_check
      _
    $region99: #{tpu_custom_call.1} parent=1 // pred_check_branch
      %260 = sbr.rel (0) target = $region101
    $region100: #{tpu_custom_call.1} parent=1 // pred_region
      _
    $region101: #{tpu_custom_call.1} parent=1 // pred_fallthru
      _
    // Predicated region
    $region102: #{tpu_custom_call.1} parent=1 // pred_check
      _
    $region103: #{tpu_custom_call.1} parent=1 // pred_check_branch
      %262 = sbr.rel (0) target = $region105
    $region104: #{tpu_custom_call.1} parent=1 // pred_region
      _
    $region105: #{tpu_custom_call.1} parent=1 // pred_fallthru
      _
    // Predicated region
    $region106: #{tpu_custom_call.1} parent=1 // pred_check
      _
    $region107: #{tpu_custom_call.1} parent=1 // pred_check_branch
      %264 = sbr.rel (0) target = $region109
    $region108: #{tpu_custom_call.1} parent=1 // pred_region
      %s266 = ssub.s32 2048, 2048
      %267 = vsyncadd [#allocation27], %s266
      %s268 = sshll.u32 [#allocation26], 4
      %s269 = int_to_ptr.vmem [resolvable:$true] %s268
      %274 = dma.hbm_to_vmem [thread:$0]  %s53, 2048, %s269, [#allocation27], 64, 64, 4
    $region109: #{tpu_custom_call.1} parent=1 // pred_fallthru
      _
    // Predicated region
    $region110: #{tpu_custom_call.1} parent=1 // pred_check
      _
    $region111: #{tpu_custom_call.1} parent=1 // pred_check_branch
      %276 = sbr.rel (0) target = $region113
    $region112: #{tpu_custom_call.1} parent=1 // pred_region
      %s278 = ssub.s32 16, 16
      %279 = vsyncadd [#allocation27], %s278
      %s281 = sshll.u32 [#allocation28], 4
      %s282 = int_to_ptr.vmem [resolvable:$true] %s281
      %284 = dma.hbm_to_vmem [thread:$0]  %s55, 16, %s282, [#allocation27]
    $region113: #{tpu_custom_call.1} parent=1 // pred_fallthru
      _
    // Predicated region
    $region114: #{tpu_custom_call.1} parent=1 // pred_check
      _
    $region115: #{tpu_custom_call.1} parent=1 // pred_check_branch
      %286 = sbr.rel (0) target = $region117
    $region116: #{tpu_custom_call.1} parent=1 // pred_region
      %s288 = ssub.s32 16, 16
      %289 = vsyncadd [#allocation30], %s288
      %s291 = sshll.u32 [#allocation29], 4
      %s292 = int_to_ptr.vmem [resolvable:$true] %s291
      %294 = dma.hbm_to_vmem [thread:$0]  %s57, 16, %s292, [#allocation30]
    $region117: #{tpu_custom_call.1} parent=1 // pred_fallthru
      _
    // Predicated region
    $region118: #{tpu_custom_call.1} parent=1 // pred_check
      _
    $region119: #{tpu_custom_call.1} parent=1 // pred_check_branch
      %296 = sbr.rel (0) target = $region121
    $region120: #{tpu_custom_call.1} parent=1 // pred_region
      %297 = dma.done [#allocation3], 256
    $region121: #{tpu_custom_call.1} parent=1 // pred_fallthru
      _
    // Predicated region
    $region122: #{tpu_custom_call.1} parent=1 // pred_check
      _
    $region123: #{tpu_custom_call.1} parent=1 // pred_check_branch
      %299 = sbr.rel (0) target = $region125
    $region124: #{tpu_custom_call.1} parent=1 // pred_region
      %300 = dma.done [#allocation6], 128
    $region125: #{tpu_custom_call.1} parent=1 // pred_fallthru
      _
    // Predicated region
    $region126: #{tpu_custom_call.1} parent=1 // pred_check
      _
    $region127: #{tpu_custom_call.1} parent=1 // pred_check_branch
      %302 = sbr.rel (0) target = $region129
    $region128: #{tpu_custom_call.1} parent=1 // pred_region
      %303 = dma.done [#allocation6], 256
    $region129: #{tpu_custom_call.1} parent=1 // pred_fallthru
      _
    // Predicated region
    $region130: #{tpu_custom_call.1} parent=1 // pred_check
      _
    $region131: #{tpu_custom_call.1} parent=1 // pred_check_branch
      %305 = sbr.rel (0) target = $region133
    $region132: #{tpu_custom_call.1} parent=1 // pred_region
      %306 = dma.done [#allocation9], 1920
    $region133: #{tpu_custom_call.1} parent=1 // pred_fallthru
      _
    // Predicated region
    $region134: #{tpu_custom_call.1} parent=1 // pred_check
      _
    $region135: #{tpu_custom_call.1} parent=1 // pred_check_branch
      %308 = sbr.rel (0) target = $region137
    $region136: #{tpu_custom_call.1} parent=1 // pred_region
      %309 = dma.done [#allocation9], 1920
    $region137: #{tpu_custom_call.1} parent=1 // pred_fallthru
      _
    // Predicated region
    $region138: #{tpu_custom_call.1} parent=1 // pred_check
      _
    $region139: #{tpu_custom_call.1} parent=1 // pred_check_branch
      %311 = sbr.rel (0) target = $region141
    $region140: #{tpu_custom_call.1} parent=1 // pred_region
      %312 = dma.done [#allocation12], 80
    $region141: #{tpu_custom_call.1} parent=1 // pred_fallthru
      _
    // Predicated region
    $region142: #{tpu_custom_call.1} parent=1 // pred_check
      _
    $region143: #{tpu_custom_call.1} parent=1 // pred_check_branch
      %314 = sbr.rel (0) target = $region145
    $region144: #{tpu_custom_call.1} parent=1 // pred_region
      %315 = dma.done [#allocation12], 80
    $region145: #{tpu_custom_call.1} parent=1 // pred_fallthru
      _
    // Predicated region
    $region146: #{tpu_custom_call.1} parent=1 // pred_check
      _
    $region147: #{tpu_custom_call.1} parent=1 // pred_check_branch
      %317 = sbr.rel (0) target = $region149
    $region148: #{tpu_custom_call.1} parent=1 // pred_region
      %318 = dma.done [#allocation15], 64
    $region149: #{tpu_custom_call.1} parent=1 // pred_fallthru
      _
    // Predicated region
    $region150: #{tpu_custom_call.1} parent=1 // pred_check
      _
    $region151: #{tpu_custom_call.1} parent=1 // pred_check_branch
      %320 = sbr.rel (0) target = $region153
    $region152: #{tpu_custom_call.1} parent=1 // pred_region
      %321 = dma.done [#allocation15], 64
    $region153: #{tpu_custom_call.1} parent=1 // pred_fallthru
      _
    // Predicated region
    $region154: #{tpu_custom_call.1} parent=1 // pred_check
      _
    $region155: #{tpu_custom_call.1} parent=1 // pred_check_branch
      %323 = sbr.rel (0) target = $region157
    $region156: #{tpu_custom_call.1} parent=1 // pred_region
      %324 = dma.done [#allocation18], 12288
    $region157: #{tpu_custom_call.1} parent=1 // pred_fallthru
      _
    // Predicated region
    $region158: #{tpu_custom_call.1} parent=1 // pred_check
      _
    $region159: #{tpu_custom_call.1} parent=1 // pred_check_branch
      %326 = sbr.rel (0) target = $region161
    $region160: #{tpu_custom_call.1} parent=1 // pred_region
      %327 = dma.done [#allocation18], 48
    $region161: #{tpu_custom_call.1} parent=1 // pred_fallthru
      _
    // Predicated region
    $region162: #{tpu_custom_call.1} parent=1 // pred_check
      _
    $region163: #{tpu_custom_call.1} parent=1 // pred_check_branch
      %329 = sbr.rel (0) target = $region165
    $region164: #{tpu_custom_call.1} parent=1 // pred_region
      %330 = dma.done [#allocation21], 48
    $region165: #{tpu_custom_call.1} parent=1 // pred_fallthru
      _
    // Predicated region
    $region166: #{tpu_custom_call.1} parent=1 // pred_check
      _
    $region167: #{tpu_custom_call.1} parent=1 // pred_check_branch
      %332 = sbr.rel (0) target = $region169
    $region168: #{tpu_custom_call.1} parent=1 // pred_region
      %333 = dma.done [#allocation21], 1536
    $region169: #{tpu_custom_call.1} parent=1 // pred_fallthru
      _
    // Predicated region
    $region170: #{tpu_custom_call.1} parent=1 // pred_check
      _
    $region171: #{tpu_custom_call.1} parent=1 // pred_check_branch
      %335 = sbr.rel (0) target = $region173
    $region172: #{tpu_custom_call.1} parent=1 // pred_region
      %336 = dma.done [#allocation24], 1536
    $region173: #{tpu_custom_call.1} parent=1 // pred_fallthru
      _
    // Predicated region
    $region174: #{tpu_custom_call.1} parent=1 // pred_check
      _
    $region175: #{tpu_custom_call.1} parent=1 // pred_check_branch
      %338 = sbr.rel (0) target = $region177
    $region176: #{tpu_custom_call.1} parent=1 // pred_region
      %339 = dma.done [#allocation24], 32
    $region177: #{tpu_custom_call.1} parent=1 // pred_fallthru
      _
    // Predicated region
    $region178: #{tpu_custom_call.1} parent=1 // pred_check
      _
    $region179: #{tpu_custom_call.1} parent=1 // pred_check_branch
      %341 = sbr.rel (0) target = $region181
    $region180: #{tpu_custom_call.1} parent=1 // pred_region
      %342 = dma.done [#allocation27], 2048
    $region181: #{tpu_custom_call.1} parent=1 // pred_fallthru
      _
    // Predicated region
    $region182: #{tpu_custom_call.1} parent=1 // pred_check
      _
    $region183: #{tpu_custom_call.1} parent=1 // pred_check_branch
      %344 = sbr.rel (0) target = $region185
    $region184: #{tpu_custom_call.1} parent=1 // pred_region
      %345 = dma.done [#allocation27], 16
    $region185: #{tpu_custom_call.1} parent=1 // pred_fallthru
      _
    // Predicated region
    $region186: #{tpu_custom_call.1} parent=1 // pred_check
      _
    $region187: #{tpu_custom_call.1} parent=1 // pred_check_branch
      %347 = sbr.rel (0) target = $region189
    $region188: #{tpu_custom_call.1} parent=1 // pred_region
      %348 = dma.done [#allocation30], 16
    $region189: #{tpu_custom_call.1} parent=1 // pred_fallthru
      _
    %v350 = vld [vmem:[#allocation5] sm:$0xf]
    %v351 = vld [vmem:[#allocation5 + $0x4] sm:$0xf]
    %v352 = vld [vmem:[#allocation7] sm:$0xff]
    %v353 = vld [vmem:[#allocation7 + $0x8] sm:$0xff]
    %v354 = vld [vmem:[#allocation2] sm:$0xff]
    %v355 = vld [vmem:[#allocation2 + $0x8] sm:$0xff]
    %v356 = vpack.c.bf16 %v355, %v354
    %v357 = vld [vmem:[#allocation8] sm:$0xff]
    %v358 = vld [vmem:[#allocation8 + $0x8] sm:$0xff]
    %v359 = vld [vmem:[#allocation8 + $0x10] sm:$0xf]
    %v360 = vld [vmem:[#allocation8 + $0x14] sm:$0xff]
    %v361 = vld [vmem:[#allocation8 + $0x1c] sm:$0xff]
    %v362 = vld [vmem:[#allocation8 + $0x24] sm:$0xf]
    %v363 = vld [vmem:[#allocation8 + $0x28] sm:$0xff]
    %v364 = vld [vmem:[#allocation8 + $0x30] sm:$0xff]
    %v365 = vld [vmem:[#allocation8 + $0x38] sm:$0xf]
    %v366 = vld [vmem:[#allocation8 + $0x3c] sm:$0xff]
    %v367 = vld [vmem:[#allocation8 + $0x44] sm:$0xff]
    %v368 = vld [vmem:[#allocation8 + $0x4c] sm:$0xf]
    %v369 = vld [vmem:[#allocation8 + $0x50] sm:$0xff]
    %v370 = vld [vmem:[#allocation8 + $0x58] sm:$0xff]
    %v371 = vld [vmem:[#allocation8 + $0x60] sm:$0xf]
    %v372 = vld [vmem:[#allocation8 + $0x64] sm:$0xff]
    %v373 = vld [vmem:[#allocation8 + $0x6c] sm:$0xff]
    %v374 = vld [vmem:[#allocation8 + $0x74] sm:$0xf]
    %v375 = vld [vmem:[#allocation11] sm:$0x1f]
    %v377 = vlaneseq
    %v378 = vshrl.u32 %v377, 7
    %v379 = vsub.s32 0, %v378
    %v380 = vrot.slane %v375, %v379
    %v381 = vlaneseq
    %v382 = vshrl.u32 %v381, 7
    %v383 = vsub.s32 1, %v382
    %v384 = vrot.slane %v375, %v383
    %v385 = vlaneseq
    %v386 = vshrl.u32 %v385, 7
    %v387 = vsub.s32 2, %v386
    %v388 = vrot.slane %v375, %v387
    %v389 = vlaneseq
    %v390 = vshrl.u32 %v389, 7
    %v391 = vsub.s32 3, %v390
    %v392 = vrot.slane %v375, %v391
    %v393 = vlaneseq
    %v394 = vshrl.u32 %v393, 7
    %v395 = vsub.s32 4, %v394
    %v396 = vrot.slane %v375, %v395
    %v420 = vunpack.c.l.b16 %v357
    %v421 = vunpack.c.h.b16 %v357
    %v422 = vunpack.c.l.b16 %v358
    %v423 = vunpack.c.h.b16 %v358
    %v424 = vunpack.c.l.b16 %v359
    %v425 = vunpack.c.l.b16 %v360
    %v426 = vunpack.c.h.b16 %v360
    %v427 = vunpack.c.l.b16 %v361
    %v428 = vunpack.c.h.b16 %v361
    %v429 = vunpack.c.l.b16 %v362
    %v430 = vunpack.c.l.b16 %v363
    %v431 = vunpack.c.h.b16 %v363
    %v432 = vunpack.c.l.b16 %v364
    %v433 = vunpack.c.h.b16 %v364
    %v434 = vunpack.c.l.b16 %v365
    %v435 = vunpack.c.l.b16 %v366
    %v436 = vunpack.c.h.b16 %v366
    %v437 = vunpack.c.l.b16 %v367
    %v438 = vunpack.c.h.b16 %v367
    %v439 = vunpack.c.l.b16 %v368
    %v440 = vunpack.c.l.b16 %v369
    %v441 = vunpack.c.h.b16 %v369
    %v442 = vunpack.c.l.b16 %v370
    %v443 = vunpack.c.h.b16 %v370
    %v444 = vunpack.c.l.b16 %v371
    %v445 = vunpack.c.l.b16 %v372
    %v446 = vunpack.c.h.b16 %v372
    %v447 = vunpack.c.l.b16 %v373
    %v448 = vunpack.c.h.b16 %v373
    %v449 = vunpack.c.l.b16 %v374
    %v450 = vpack.c.b16 %v425, %v420
    %v451 = vpack.c.b16 %v426, %v421
    %v452 = vpack.c.b16 %v427, %v422
    %v453 = vpack.c.b16 %v428, %v423
    %v454 = vpack.c.b16 %v429, %v424
    %v455 = vpack.c.b16 %v435, %v430
    %v456 = vpack.c.b16 %v436, %v431
    %v457 = vpack.c.b16 %v437, %v432
    %v458 = vpack.c.b16 %v438, %v433
    %v459 = vpack.c.b16 %v439, %v434
    %v460 = vpack.c.b16 %v445, %v440
    %v461 = vpack.c.b16 %v446, %v441
    %v462 = vpack.c.b16 %v447, %v442
    %v463 = vpack.c.b16 %v448, %v443
    %v464 = vpack.c.b16 %v449, %v444
    %vm480 = vcmask 392192
    %v482 = vsel %vm480, %v356, 0
    %484 = vmatprep.subr.bf16.mxu0 %v451
    %485 = vmatpush1.bf16.msra.mxu0 %v450
    %486 = vmatprep.subr.bf16.mxu0 %v456
    %487 = vmatpush1.bf16.msra.mxu0 %v455
    %488 = vmatprep.subr.bf16.mxu0 %v461
    %489 = vmatpush1.bf16.msra.mxu0 %v460
    %490 = vmatprep.subr.bf16.mxu0 0
    %491 = vmatpush1.bf16.msra.mxu0 0
    %492 = vmatprep.subr.bf16.mxu0 0
    %493 = vmatpush1.bf16.msra.mxu0 0
    %494 = vmatprep.subr.bf16.mxu0 0
    %495 = vmatpush1.bf16.msra.mxu0 0
    %496 = vmatprep.subr.bf16.mxu0 0
    %497 = vmatpush1.bf16.msra.mxu0 0
    %498 = vmatprep.subr.bf16.mxu0 0
    %499 = vmatpush1.bf16.msra.mxu0 0
    %500 = vmatprep.subr.bf16.mxu0 0
    %501 = vmatpush1.bf16.msra.mxu0 0
    %502 = vmatprep.subr.bf16.mxu0 0
    %503 = vmatpush1.bf16.msra.mxu0 0
    %504 = vmatprep.subr.bf16.mxu0 0
    %505 = vmatpush1.bf16.msra.mxu0 0
    %506 = vmatprep.subr.bf16.mxu0 0
    %507 = vmatpush1.bf16.msra.mxu0 0
    %508 = vmatprep.subr.bf16.mxu0 0
    %509 = vmatpush1.bf16.msra.mxu0 0
    %510 = vmatprep.subr.bf16.mxu0 0
    %511 = vmatpush1.bf16.msra.mxu0 0
    %512 = vmatprep.subr.bf16.mxu0 0
    %513 = vmatpush1.bf16.msra.mxu0 0
    %514 = vmatprep.subr.bf16.mxu0 0
    %515 = vmatpush1.bf16.msra.mxu0 0
    %516 = vmatprep.mubr.bf16.mxu0 0
    %517 = vmatmul.mubr.bf16.gmra.mrb[0].mxu0 %v482
    %v518 = vpop.f32.mrb[0].mxu0
    %v519 = vadd.f32 %v380, %v518
    %v520 = vpop.f32.mrb[0].mxu0
    %v521 = vadd.f32 %v384, %v520
    %v522 = vpop.f32.mrb[0].mxu0
    %v523 = vadd.f32 %v380, %v522
    %v524 = vpop.f32.mrb[0].mxu0
    %v525 = vadd.f32 %v384, %v524
    %526 = vdwg.mxu0
    %527 = vmatprep.subr.bf16.mxu0 %v453
    %528 = vmatpush1.bf16.msra.mxu0 %v452
    %529 = vmatprep.subr.bf16.mxu0 %v458
    %530 = vmatpush1.bf16.msra.mxu0 %v457
    %531 = vmatprep.subr.bf16.mxu0 %v463
    %532 = vmatpush1.bf16.msra.mxu0 %v462
    %533 = vmatprep.subr.bf16.mxu0 0
    %534 = vmatpush1.bf16.msra.mxu0 0
    %535 = vmatprep.subr.bf16.mxu0 0
    %536 = vmatpush1.bf16.msra.mxu0 0
    %537 = vmatprep.subr.bf16.mxu0 0
    %538 = vmatpush1.bf16.msra.mxu0 0
    %539 = vmatprep.subr.bf16.mxu0 0
    %540 = vmatpush1.bf16.msra.mxu0 0
    %541 = vmatprep.subr.bf16.mxu0 0
    %542 = vmatpush1.bf16.msra.mxu0 0
    %543 = vmatprep.subr.bf16.mxu0 0
    %544 = vmatpush1.bf16.msra.mxu0 0
    %545 = vmatprep.subr.bf16.mxu0 0
    %546 = vmatpush1.bf16.msra.mxu0 0
    %547 = vmatprep.subr.bf16.mxu0 0
    %548 = vmatpush1.bf16.msra.mxu0 0
    %549 = vmatprep.subr.bf16.mxu0 0
    %550 = vmatpush1.bf16.msra.mxu0 0
    %551 = vmatprep.subr.bf16.mxu0 0
    %552 = vmatpush1.bf16.msra.mxu0 0
    %553 = vmatprep.subr.bf16.mxu0 0
    %554 = vmatpush1.bf16.msra.mxu0 0
    %555 = vmatprep.subr.bf16.mxu0 0
    %556 = vmatpush1.bf16.msra.mxu0 0
    %557 = vmatprep.subr.bf16.mxu0 0
    %558 = vmatpush1.bf16.msra.mxu0 0
    %559 = vmatprep.mubr.bf16.mxu0 0
    %560 = vmatmul.mubr.bf16.gmra.mrb[0].mxu0 %v482
    %v561 = vpop.f32.mrb[0].mxu0
    %v562 = vadd.f32 %v388, %v561
    %v563 = vpop.f32.mrb[0].mxu0
    %v564 = vadd.f32 %v392, %v563
    %v565 = vpop.f32.mrb[0].mxu0
    %v566 = vadd.f32 %v388, %v565
    %v567 = vpop.f32.mrb[0].mxu0
    %v568 = vadd.f32 %v392, %v567
    %569 = vdwg.mxu0
    %570 = vmatprep.subr.bf16.mxu0 0
    %571 = vmatpush1.bf16.msra.mxu0 %v454
    %572 = vmatprep.subr.bf16.mxu0 0
    %573 = vmatpush1.bf16.msra.mxu0 %v459
    %574 = vmatprep.subr.bf16.mxu0 0
    %575 = vmatpush1.bf16.msra.mxu0 %v464
    %576 = vmatprep.subr.bf16.mxu0 0
    %577 = vmatpush1.bf16.msra.mxu0 0
    %578 = vmatprep.subr.bf16.mxu0 0
    %579 = vmatpush1.bf16.msra.mxu0 0
    %580 = vmatprep.subr.bf16.mxu0 0
    %581 = vmatpush1.bf16.msra.mxu0 0
    %582 = vmatprep.subr.bf16.mxu0 0
    %583 = vmatpush1.bf16.msra.mxu0 0
    %584 = vmatprep.subr.bf16.mxu0 0
    %585 = vmatpush1.bf16.msra.mxu0 0
    %586 = vmatprep.subr.bf16.mxu0 0
    %587 = vmatpush1.bf16.msra.mxu0 0
    %588 = vmatprep.subr.bf16.mxu0 0
    %589 = vmatpush1.bf16.msra.mxu0 0
    %590 = vmatprep.subr.bf16.mxu0 0
    %591 = vmatpush1.bf16.msra.mxu0 0
    %592 = vmatprep.subr.bf16.mxu0 0
    %593 = vmatpush1.bf16.msra.mxu0 0
    %594 = vmatprep.subr.bf16.mxu0 0
    %595 = vmatpush1.bf16.msra.mxu0 0
    %596 = vmatprep.subr.bf16.mxu0 0
    %597 = vmatpush1.bf16.msra.mxu0 0
    %598 = vmatprep.subr.bf16.mxu0 0
    %599 = vmatpush1.bf16.msra.mxu0 0
    %600 = vmatprep.subr.bf16.mxu0 0
    %601 = vmatpush1.bf16.msra.mxu0 0
    %602 = vmatprep.mubr.bf16.mxu0 0
    %603 = vmatmul.mubr.bf16.gmra.mrb[0].mxu0 %v482
    %v604 = vpop.f32.mrb[0].mxu0
    %v605 = vadd.f32 %v396, %v604
    %v606 = vpop.f32.mrb[0].mxu0
    %v607 = vpop.f32.mrb[0].mxu0
    %v608 = vadd.f32 %v396, %v607
    %v609 = vpop.f32.mrb[0].mxu0
    %610 = vdwg.mxu0
    %v611 = vld [vmem:[#allocation10] sm:$0xff]
    %v612 = vld [vmem:[#allocation10 + $0x8] sm:$0xff]
    %v613 = vld [vmem:[#allocation10 + $0x10] sm:$0xf]
    %v614 = vld [vmem:[#allocation10 + $0x14] sm:$0xff]
    %v615 = vld [vmem:[#allocation10 + $0x1c] sm:$0xff]
    %v616 = vld [vmem:[#allocation10 + $0x24] sm:$0xf]
    %v617 = vld [vmem:[#allocation10 + $0x28] sm:$0xff]
    %v618 = vld [vmem:[#allocation10 + $0x30] sm:$0xff]
    %v619 = vld [vmem:[#allocation10 + $0x38] sm:$0xf]
    %v620 = vld [vmem:[#allocation10 + $0x3c] sm:$0xff]
    %v621 = vld [vmem:[#allocation10 + $0x44] sm:$0xff]
    %v622 = vld [vmem:[#allocation10 + $0x4c] sm:$0xf]
    %v623 = vld [vmem:[#allocation10 + $0x50] sm:$0xff]
    %v624 = vld [vmem:[#allocation10 + $0x58] sm:$0xff]
    %v625 = vld [vmem:[#allocation10 + $0x60] sm:$0xf]
    %v626 = vld [vmem:[#allocation10 + $0x64] sm:$0xff]
    %v627 = vld [vmem:[#allocation10 + $0x6c] sm:$0xff]
    %v628 = vld [vmem:[#allocation10 + $0x74] sm:$0xf]
    %v629 = vld [vmem:[#allocation13] sm:$0x1f]
    %v631 = vlaneseq
    %v632 = vshrl.u32 %v631, 7
    %v633 = vsub.s32 0, %v632
    %v634 = vrot.slane %v629, %v633
    %v635 = vlaneseq
    %v636 = vshrl.u32 %v635, 7
    %v637 = vsub.s32 1, %v636
    %v638 = vrot.slane %v629, %v637
    %v639 = vlaneseq
    %v640 = vshrl.u32 %v639, 7
    %v641 = vsub.s32 2, %v640
    %v642 = vrot.slane %v629, %v641
    %v643 = vlaneseq
    %v644 = vshrl.u32 %v643, 7
    %v645 = vsub.s32 3, %v644
    %v646 = vrot.slane %v629, %v645
    %v647 = vlaneseq
    %v648 = vshrl.u32 %v647, 7
    %v649 = vsub.s32 4, %v648
    %v650 = vrot.slane %v629, %v649
    %v674 = vunpack.c.l.b16 %v611
    %v675 = vunpack.c.h.b16 %v611
    %v676 = vunpack.c.l.b16 %v612
    %v677 = vunpack.c.h.b16 %v612
    %v678 = vunpack.c.l.b16 %v613
    %v679 = vunpack.c.l.b16 %v614
    %v680 = vunpack.c.h.b16 %v614
    %v681 = vunpack.c.l.b16 %v615
    %v682 = vunpack.c.h.b16 %v615
    %v683 = vunpack.c.l.b16 %v616
    %v684 = vunpack.c.l.b16 %v617
    %v685 = vunpack.c.h.b16 %v617
    %v686 = vunpack.c.l.b16 %v618
    %v687 = vunpack.c.h.b16 %v618
    %v688 = vunpack.c.l.b16 %v619
    %v689 = vunpack.c.l.b16 %v620
    %v690 = vunpack.c.h.b16 %v620
    %v691 = vunpack.c.l.b16 %v621
    %v692 = vunpack.c.h.b16 %v621
    %v693 = vunpack.c.l.b16 %v622
    %v694 = vunpack.c.l.b16 %v623
    %v695 = vunpack.c.h.b16 %v623
    %v696 = vunpack.c.l.b16 %v624
    %v697 = vunpack.c.h.b16 %v624
    %v698 = vunpack.c.l.b16 %v625
    %v699 = vunpack.c.l.b16 %v626
    %v700 = vunpack.c.h.b16 %v626
    %v701 = vunpack.c.l.b16 %v627
    %v702 = vunpack.c.h.b16 %v627
    %v703 = vunpack.c.l.b16 %v628
    %v704 = vpack.c.b16 %v679, %v674
    %v705 = vpack.c.b16 %v680, %v675
    %v706 = vpack.c.b16 %v681, %v676
    %v707 = vpack.c.b16 %v682, %v677
    %v708 = vpack.c.b16 %v683, %v678
    %v709 = vpack.c.b16 %v689, %v684
    %v710 = vpack.c.b16 %v690, %v685
    %v711 = vpack.c.b16 %v691, %v686
    %v712 = vpack.c.b16 %v692, %v687
    %v713 = vpack.c.b16 %v693, %v688
    %v714 = vpack.c.b16 %v699, %v694
    %v715 = vpack.c.b16 %v700, %v695
    %v716 = vpack.c.b16 %v701, %v696
    %v717 = vpack.c.b16 %v702, %v697
    %v718 = vpack.c.b16 %v703, %v698
    %734 = vmatprep.subr.bf16.mxu0 %v705
    %735 = vmatpush1.bf16.msra.mxu0 %v704
    %736 = vmatprep.subr.bf16.mxu0 %v710
    %737 = vmatpush1.bf16.msra.mxu0 %v709
    %738 = vmatprep.subr.bf16.mxu0 %v715
    %739 = vmatpush1.bf16.msra.mxu0 %v714
    %740 = vmatprep.subr.bf16.mxu0 0
    %741 = vmatpush1.bf16.msra.mxu0 0
    %742 = vmatprep.subr.bf16.mxu0 0
    %743 = vmatpush1.bf16.msra.mxu0 0
    %744 = vmatprep.subr.bf16.mxu0 0
    %745 = vmatpush1.bf16.msra.mxu0 0
    %746 = vmatprep.subr.bf16.mxu0 0
    %747 = vmatpush1.bf16.msra.mxu0 0
    %748 = vmatprep.subr.bf16.mxu0 0
    %749 = vmatpush1.bf16.msra.mxu0 0
    %750 = vmatprep.subr.bf16.mxu0 0
    %751 = vmatpush1.bf16.msra.mxu0 0
    %752 = vmatprep.subr.bf16.mxu0 0
    %753 = vmatpush1.bf16.msra.mxu0 0
    %754 = vmatprep.subr.bf16.mxu0 0
    %755 = vmatpush1.bf16.msra.mxu0 0
    %756 = vmatprep.subr.bf16.mxu0 0
    %757 = vmatpush1.bf16.msra.mxu0 0
    %758 = vmatprep.subr.bf16.mxu0 0
    %759 = vmatpush1.bf16.msra.mxu0 0
    %760 = vmatprep.subr.bf16.mxu0 0
    %761 = vmatpush1.bf16.msra.mxu0 0
    %762 = vmatprep.subr.bf16.mxu0 0
    %763 = vmatpush1.bf16.msra.mxu0 0
    %764 = vmatprep.subr.bf16.mxu0 0
    %765 = vmatpush1.bf16.msra.mxu0 0
    %766 = vmatprep.mubr.bf16.mxu0 0
    %767 = vmatmul.mubr.bf16.gmra.mrb[0].mxu0 %v482
    %v768 = vpop.f32.mrb[0].mxu0
    %v769 = vadd.f32 %v634, %v768
    %v770 = vpop.f32.mrb[0].mxu0
    %v771 = vadd.f32 %v638, %v770
    %v772 = vpop.f32.mrb[0].mxu0
    %v773 = vadd.f32 %v634, %v772
    %v774 = vpop.f32.mrb[0].mxu0
    %v775 = vadd.f32 %v638, %v774
    %776 = vdwg.mxu0
    %777 = vmatprep.subr.bf16.mxu0 %v707
    %778 = vmatpush1.bf16.msra.mxu0 %v706
    %779 = vmatprep.subr.bf16.mxu0 %v712
    %780 = vmatpush1.bf16.msra.mxu0 %v711
    %781 = vmatprep.subr.bf16.mxu0 %v717
    %782 = vmatpush1.bf16.msra.mxu0 %v716
    %783 = vmatprep.subr.bf16.mxu0 0
    %784 = vmatpush1.bf16.msra.mxu0 0
    %785 = vmatprep.subr.bf16.mxu0 0
    %786 = vmatpush1.bf16.msra.mxu0 0
    %787 = vmatprep.subr.bf16.mxu0 0
    %788 = vmatpush1.bf16.msra.mxu0 0
    %789 = vmatprep.subr.bf16.mxu0 0
    %790 = vmatpush1.bf16.msra.mxu0 0
    %791 = vmatprep.subr.bf16.mxu0 0
    %792 = vmatpush1.bf16.msra.mxu0 0
    %793 = vmatprep.subr.bf16.mxu0 0
    %794 = vmatpush1.bf16.msra.mxu0 0
    %795 = vmatprep.subr.bf16.mxu0 0
    %796 = vmatpush1.bf16.msra.mxu0 0
    %797 = vmatprep.subr.bf16.mxu0 0
    %798 = vmatpush1.bf16.msra.mxu0 0
    %799 = vmatprep.subr.bf16.mxu0 0
    %800 = vmatpush1.bf16.msra.mxu0 0
    %801 = vmatprep.subr.bf16.mxu0 0
    %802 = vmatpush1.bf16.msra.mxu0 0
    %803 = vmatprep.subr.bf16.mxu0 0
    %804 = vmatpush1.bf16.msra.mxu0 0
    %805 = vmatprep.subr.bf16.mxu0 0
    %806 = vmatpush1.bf16.msra.mxu0 0
    %807 = vmatprep.subr.bf16.mxu0 0
    %808 = vmatpush1.bf16.msra.mxu0 0
    %809 = vmatprep.mubr.bf16.mxu0 0
    %810 = vmatmul.mubr.bf16.gmra.mrb[0].mxu0 %v482
    %v811 = vpop.f32.mrb[0].mxu0
    %v812 = vadd.f32 %v642, %v811
    %v813 = vpop.f32.mrb[0].mxu0
    %v814 = vadd.f32 %v646, %v813
    %v815 = vpop.f32.mrb[0].mxu0
    %v816 = vadd.f32 %v642, %v815
    %v817 = vpop.f32.mrb[0].mxu0
    %v818 = vadd.f32 %v646, %v817
    %819 = vdwg.mxu0
    %820 = vmatprep.subr.bf16.mxu0 0
    %821 = vmatpush1.bf16.msra.mxu0 %v708
    %822 = vmatprep.subr.bf16.mxu0 0
    %823 = vmatpush1.bf16.msra.mxu0 %v713
    %824 = vmatprep.subr.bf16.mxu0 0
    %825 = vmatpush1.bf16.msra.mxu0 %v718
    %826 = vmatprep.subr.bf16.mxu0 0
    %827 = vmatpush1.bf16.msra.mxu0 0
    %828 = vmatprep.subr.bf16.mxu0 0
    %829 = vmatpush1.bf16.msra.mxu0 0
    %830 = vmatprep.subr.bf16.mxu0 0
    %831 = vmatpush1.bf16.msra.mxu0 0
    %832 = vmatprep.subr.bf16.mxu0 0
    %833 = vmatpush1.bf16.msra.mxu0 0
    %834 = vmatprep.subr.bf16.mxu0 0
    %835 = vmatpush1.bf16.msra.mxu0 0
    %836 = vmatprep.subr.bf16.mxu0 0
    %837 = vmatpush1.bf16.msra.mxu0 0
    %838 = vmatprep.subr.bf16.mxu0 0
    %839 = vmatpush1.bf16.msra.mxu0 0
    %840 = vmatprep.subr.bf16.mxu0 0
    %841 = vmatpush1.bf16.msra.mxu0 0
    %842 = vmatprep.subr.bf16.mxu0 0
    %843 = vmatpush1.bf16.msra.mxu0 0
    %844 = vmatprep.subr.bf16.mxu0 0
    %845 = vmatpush1.bf16.msra.mxu0 0
    %846 = vmatprep.subr.bf16.mxu0 0
    %847 = vmatpush1.bf16.msra.mxu0 0
    %848 = vmatprep.subr.bf16.mxu0 0
    %849 = vmatpush1.bf16.msra.mxu0 0
    %850 = vmatprep.subr.bf16.mxu0 0
    %851 = vmatpush1.bf16.msra.mxu0 0
    %852 = vmatprep.mubr.bf16.mxu0 0
    %853 = vmatmul.mubr.bf16.gmra.mrb[0].mxu0 %v482
    %v854 = vpop.f32.mrb[0].mxu0
    %v855 = vadd.f32 %v650, %v854
    %v856 = vpop.f32.mrb[0].mxu0
    %v857 = vpop.f32.mrb[0].mxu0
    %v858 = vadd.f32 %v650, %v857
    %v859 = vpop.f32.mrb[0].mxu0
    %860 = vdwg.mxu0
    %v861 = vxor.u32 %v769, 2147483648
    %v862 = vxor.u32 %v771, 2147483648
    %v863 = vxor.u32 %v812, 2147483648
    %v864 = vxor.u32 %v814, 2147483648
    %v865 = vxor.u32 %v855, 2147483648
    %v866 = vxor.u32 %v773, 2147483648
    %v867 = vxor.u32 %v775, 2147483648
    %v868 = vxor.u32 %v816, 2147483648
    %v869 = vxor.u32 %v818, 2147483648
    %v870 = vxor.u32 %v858, 2147483648
    %v871 = vmul.f32 %v861, 1.442695
    %v872 = vpow.pop %v871
    %v873 = vmul.f32 %v862, 1.442695
    %v874 = vpow.pop %v873
    %v875 = vmul.f32 %v863, 1.442695
    %v876 = vpow.pop %v875
    %v877 = vmul.f32 %v864, 1.442695
    %v878 = vpow.pop %v877
    %v879 = vmul.f32 %v865, 1.442695
    %v880 = vpow.pop %v879
    %v881 = vmul.f32 %v866, 1.442695
    %v882 = vpow.pop %v881
    %v883 = vmul.f32 %v867, 1.442695
    %v884 = vpow.pop %v883
    %v885 = vmul.f32 %v868, 1.442695
    %v886 = vpow.pop %v885
    %v887 = vmul.f32 %v869, 1.442695
    %v888 = vpow.pop %v887
    %v889 = vmul.f32 %v870, 1.442695
    %v890 = vpow.pop %v889
    %v891 = vadd.f32 %v872, 1.0
    %v892 = vadd.f32 %v874, 1.0
    %v893 = vadd.f32 %v876, 1.0
    %v894 = vadd.f32 %v878, 1.0
    %v895 = vadd.f32 %v880, 1.0
    %v896 = vadd.f32 %v882, 1.0
    %v897 = vadd.f32 %v884, 1.0
    %v898 = vadd.f32 %v886, 1.0
    %v899 = vadd.f32 %v888, 1.0
    %v900 = vadd.f32 %v890, 1.0
    %v901 = vrcp.pop %v891
    %v902 = vmul.f32 1.0, %v901
    %v903 = vrcp.pop %v892
    %v904 = vmul.f32 1.0, %v903
    %v905 = vrcp.pop %v893
    %v906 = vmul.f32 1.0, %v905
    %v907 = vrcp.pop %v894
    %v908 = vmul.f32 1.0, %v907
    %v909 = vrcp.pop %v895
    %v910 = vmul.f32 1.0, %v909
    %v911 = vrcp.pop %v896
    %v912 = vmul.f32 1.0, %v911
    %v913 = vrcp.pop %v897
    %v914 = vmul.f32 1.0, %v913
    %v915 = vrcp.pop %v898
    %v916 = vmul.f32 1.0, %v915
    %v917 = vrcp.pop %v899
    %v918 = vmul.f32 1.0, %v917
    %v919 = vrcp.pop %v900
    %v920 = vmul.f32 1.0, %v919
    %v921 = vadd.f32 %v519, %v902
    %v922 = vadd.f32 %v521, %v904
    %v923 = vadd.f32 %v562, %v906
    %v924 = vadd.f32 %v564, %v908
    %v925 = vadd.f32 %v605, %v910
    %v926 = vadd.f32 %v523, %v912
    %v927 = vadd.f32 %v525, %v914
    %v928 = vadd.f32 %v566, %v916
    %v929 = vadd.f32 %v568, %v918
    %v930 = vadd.f32 %v608, %v920
    %v931 = vmax.f32 %v921, 0.0
    %v932 = vmax.f32 %v922, 0.0
    %v933 = vmax.f32 %v923, 0.0
    %v934 = vmax.f32 %v924, 0.0
    %v935 = vmax.f32 %v925, 0.0
    %v936 = vmax.f32 %v926, 0.0
    %v937 = vmax.f32 %v927, 0.0
    %v938 = vmax.f32 %v928, 0.0
    %v939 = vmax.f32 %v929, 0.0
    %v940 = vmax.f32 %v930, 0.0
    %v941 = vpack.c.bf16 %v936, %v931
    %v942 = vpack.c.bf16 %v937, %v932
    %v943 = vpack.c.bf16 %v938, %v933
    %v944 = vpack.c.bf16 %v939, %v934
    %v945 = vpack.c.bf16 %v940, %v935
    %v948 = vunpack.c.l.b16 %v350
    %v949 = vunpack.c.l.b16 %v351
    %v950 = vpack.c.b16 %v949, %v948
    %vm951 = vcmask 130048
    %v953 = vsel %vm951, %v950, 0
    %955 = vmatprep.subr.bf16.mxu0 %v942
    %956 = vmatpush1.bf16.msra.mxu0 %v941
    %957 = vmatprep.subr.bf16.mxu0 0
    %958 = vmatpush1.bf16.msra.mxu0 0
    %959 = vmatprep.subr.bf16.mxu0 0
    %960 = vmatpush1.bf16.msra.mxu0 0
    %961 = vmatprep.subr.bf16.mxu0 0
    %962 = vmatpush1.bf16.msra.mxu0 0
    %963 = vmatprep.subr.bf16.mxu0 0
    %964 = vmatpush1.bf16.msra.mxu0 0
    %965 = vmatprep.subr.bf16.mxu0 0
    %966 = vmatpush1.bf16.msra.mxu0 0
    %967 = vmatprep.subr.bf16.mxu0 0
    %968 = vmatpush1.bf16.msra.mxu0 0
    %969 = vmatprep.subr.bf16.mxu0 0
    %970 = vmatpush1.bf16.msra.mxu0 0
    %971 = vmatprep.subr.bf16.mxu0 0
    %972 = vmatpush1.bf16.msra.mxu0 0
    %973 = vmatprep.subr.bf16.mxu0 0
    %974 = vmatpush1.bf16.msra.mxu0 0
    %975 = vmatprep.subr.bf16.mxu0 0
    %976 = vmatpush1.bf16.msra.mxu0 0
    %977 = vmatprep.subr.bf16.mxu0 0
    %978 = vmatpush1.bf16.msra.mxu0 0
    %979 = vmatprep.subr.bf16.mxu0 0
    %980 = vmatpush1.bf16.msra.mxu0 0
    %981 = vmatprep.subr.bf16.mxu0 0
    %982 = vmatpush1.bf16.msra.mxu0 0
    %983 = vmatprep.subr.bf16.mxu0 0
    %984 = vmatpush1.bf16.msra.mxu0 0
    %985 = vmatprep.subr.bf16.mxu0 0
    %986 = vmatpush1.bf16.msra.mxu0 0
    %987 = vmatprep.mubr.bf16.mxu0 0
    %988 = vmatmul.mubr.bf16.gmra.mrb[0].mxu0 %v953
    %v989 = vpop.f32.mrb[0].mxu0
    %v990 = vadd.f32 0.0, %v989
    %v991 = vpop.f32.mrb[0].mxu0
    %v992 = vadd.f32 0.0, %v991
    %v993 = vpop.f32.mrb[0].mxu0
    %v994 = vadd.f32 0.0, %v993
    %v995 = vpop.f32.mrb[0].mxu0
    %v996 = vadd.f32 0.0, %v995
    %997 = vdwg.mxu0
    %998 = vmatprep.subr.bf16.mxu0 %v944
    %999 = vmatpush1.bf16.msra.mxu0 %v943
    %1000 = vmatprep.subr.bf16.mxu0 0
    %1001 = vmatpush1.bf16.msra.mxu0 0
    %1002 = vmatprep.subr.bf16.mxu0 0
    %1003 = vmatpush1.bf16.msra.mxu0 0
    %1004 = vmatprep.subr.bf16.mxu0 0
    %1005 = vmatpush1.bf16.msra.mxu0 0
    %1006 = vmatprep.subr.bf16.mxu0 0
    %1007 = vmatpush1.bf16.msra.mxu0 0
    %1008 = vmatprep.subr.bf16.mxu0 0
    %1009 = vmatpush1.bf16.msra.mxu0 0
    %1010 = vmatprep.subr.bf16.mxu0 0
    %1011 = vmatpush1.bf16.msra.mxu0 0
    %1012 = vmatprep.subr.bf16.mxu0 0
    %1013 = vmatpush1.bf16.msra.mxu0 0
    %1014 = vmatprep.subr.bf16.mxu0 0
    %1015 = vmatpush1.bf16.msra.mxu0 0
    %1016 = vmatprep.subr.bf16.mxu0 0
    %1017 = vmatpush1.bf16.msra.mxu0 0
    %1018 = vmatprep.subr.bf16.mxu0 0
    %1019 = vmatpush1.bf16.msra.mxu0 0
    %1020 = vmatprep.subr.bf16.mxu0 0
    %1021 = vmatpush1.bf16.msra.mxu0 0
    %1022 = vmatprep.subr.bf16.mxu0 0
    %1023 = vmatpush1.bf16.msra.mxu0 0
    %1024 = vmatprep.subr.bf16.mxu0 0
    %1025 = vmatpush1.bf16.msra.mxu0 0
    %1026 = vmatprep.subr.bf16.mxu0 0
    %1027 = vmatpush1.bf16.msra.mxu0 0
    %1028 = vmatprep.subr.bf16.mxu0 0
    %1029 = vmatpush1.bf16.msra.mxu0 0
    %1030 = vmatprep.mubr.bf16.mxu0 0
    %1031 = vmatmul.mubr.bf16.gmra.mrb[0].mxu0 %v953
    %v1032 = vpop.f32.mrb[0].mxu0
    %v1033 = vadd.f32 0.0, %v1032
    %v1034 = vpop.f32.mrb[0].mxu0
    %v1035 = vadd.f32 0.0, %v1034
    %v1036 = vpop.f32.mrb[0].mxu0
    %v1037 = vadd.f32 0.0, %v1036
    %v1038 = vpop.f32.mrb[0].mxu0
    %v1039 = vadd.f32 0.0, %v1038
    %1040 = vdwg.mxu0
    %1041 = vmatprep.subr.bf16.mxu0 0
    %1042 = vmatpush1.bf16.msra.mxu0 %v945
    %1043 = vmatprep.subr.bf16.mxu0 0
    %1044 = vmatpush1.bf16.msra.mxu0 0
    %1045 = vmatprep.subr.bf16.mxu0 0
    %1046 = vmatpush1.bf16.msra.mxu0 0
    %1047 = vmatprep.subr.bf16.mxu0 0
    %1048 = vmatpush1.bf16.msra.mxu0 0
    %1049 = vmatprep.subr.bf16.mxu0 0
    %1050 = vmatpush1.bf16.msra.mxu0 0
    %1051 = vmatprep.subr.bf16.mxu0 0
    %1052 = vmatpush1.bf16.msra.mxu0 0
    %1053 = vmatprep.subr.bf16.mxu0 0
    %1054 = vmatpush1.bf16.msra.mxu0 0
    %1055 = vmatprep.subr.bf16.mxu0 0
    %1056 = vmatpush1.bf16.msra.mxu0 0
    %1057 = vmatprep.subr.bf16.mxu0 0
    %1058 = vmatpush1.bf16.msra.mxu0 0
    %1059 = vmatprep.subr.bf16.mxu0 0
    %1060 = vmatpush1.bf16.msra.mxu0 0
    %1061 = vmatprep.subr.bf16.mxu0 0
    %1062 = vmatpush1.bf16.msra.mxu0 0
    %1063 = vmatprep.subr.bf16.mxu0 0
    %1064 = vmatpush1.bf16.msra.mxu0 0
    %1065 = vmatprep.subr.bf16.mxu0 0
    %1066 = vmatpush1.bf16.msra.mxu0 0
    %1067 = vmatprep.subr.bf16.mxu0 0
    %1068 = vmatpush1.bf16.msra.mxu0 0
    %1069 = vmatprep.subr.bf16.mxu0 0
    %1070 = vmatpush1.bf16.msra.mxu0 0
    %1071 = vmatprep.subr.bf16.mxu0 0
    %1072 = vmatpush1.bf16.msra.mxu0 0
    %1073 = vmatprep.mubr.bf16.mxu0 0
    %1074 = vmatmul.mubr.bf16.gmra.mrb[0].mxu0 %v953
    %v1075 = vpop.f32.mrb[0].mxu0
    %v1076 = vadd.f32 0.0, %v1075
    %v1077 = vpop.f32.mrb[0].mxu0
    %v1078 = vpop.f32.mrb[0].mxu0
    %v1079 = vadd.f32 0.0, %v1078
    %v1080 = vpop.f32.mrb[0].mxu0
    %1081 = vdwg.mxu0
    %v1082 = vpack.c.bf16 %v994, %v990
    %v1083 = vpack.c.bf16 %v996, %v992
    %v1084 = vpack.c.bf16 %v1037, %v1033
    %v1085 = vpack.c.bf16 %v1039, %v1035
    %v1086 = vpack.c.bf16 %v1079, %v1076
    %v1087 = vld [vmem:[%s15] sm:$0xff]
    %v1088 = vld [vmem:[%s15 + $0x8] sm:$0xff]
    %v1089 = vld [vmem:[%s15 + $0x10] sm:$0xff]
    %v1090 = vld [vmem:[%s15 + $0x18] sm:$0xff]
    %v1091 = vld [vmem:[%s15 + $0x20] sm:$0xff]
    %v1092 = vld [vmem:[%s15 + $0x28] sm:$0xff]
    %v1093 = vld [vmem:[%s15 + $0x30] sm:$0xff]
    %v1094 = vld [vmem:[%s15 + $0x38] sm:$0xff]
    %v1095 = vld [vmem:[%s15 + $0x40] sm:$0xff]
    %v1096 = vld [vmem:[%s15 + $0x48] sm:$0xff]
    %v1097 = vld [vmem:[%s15 + $0x50] sm:$0xff]
    %v1098 = vld [vmem:[%s15 + $0x58] sm:$0xff]
    %v1099 = vld [vmem:[%s15 + $0x60] sm:$0xff]
    %v1100 = vld [vmem:[%s15 + $0x68] sm:$0xff]
    %v1101 = vld [vmem:[%s15 + $0x70] sm:$0xff]
    %v1102 = vld [vmem:[%s15 + $0x78] sm:$0xff]
    %v1103 = vld [vmem:[%s15 + $0x80] sm:$0xff]
    %v1104 = vld [vmem:[%s15 + $0x88] sm:$0xff]
    %v1105 = vld [vmem:[%s15 + $0x90] sm:$0xff]
    %v1106 = vld [vmem:[%s15 + $0x98] sm:$0xff]
    %v1107 = vld [vmem:[%s15 + $0xa0] sm:$0xff]
    %v1108 = vld [vmem:[%s15 + $0xa8] sm:$0xff]
    %v1109 = vld [vmem:[%s15 + $0xb0] sm:$0xff]
    %v1110 = vld [vmem:[%s15 + $0xb8] sm:$0xff]
    %v1111 = vld [vmem:[%s15 + $0xc0] sm:$0xff]
    %v1112 = vld [vmem:[%s15 + $0xc8] sm:$0xff]
    %v1113 = vld [vmem:[%s15 + $0xd0] sm:$0xff]
    %v1114 = vld [vmem:[%s15 + $0xd8] sm:$0xff]
    %v1115 = vld [vmem:[%s15 + $0xe0] sm:$0xff]
    %v1116 = vld [vmem:[%s15 + $0xe8] sm:$0xff]
    %v1117 = vld [vmem:[%s15 + $0xf0] sm:$0xff]
    %v1118 = vld [vmem:[%s15 + $0xf8] sm:$0xff]
    %v1119 = vld [vmem:[%s15 + $0x100] sm:$0xff]
    %v1120 = vld [vmem:[%s15 + $0x108] sm:$0xff]
    %v1121 = vld [vmem:[%s15 + $0x110] sm:$0xff]
    %v1122 = vld [vmem:[%s15 + $0x118] sm:$0xff]
    %v1123 = vld [vmem:[%s15 + $0x120] sm:$0xff]
    %v1124 = vld [vmem:[%s15 + $0x128] sm:$0xff]
    %v1125 = vld [vmem:[%s15 + $0x130] sm:$0xff]
    %v1126 = vld [vmem:[%s15 + $0x138] sm:$0xff]
    %v1127 = vld [vmem:[%s15 + $0x140] sm:$0xff]
    %v1128 = vld [vmem:[%s15 + $0x148] sm:$0xff]
    %v1129 = vld [vmem:[%s15 + $0x150] sm:$0xff]
    %v1130 = vld [vmem:[%s15 + $0x158] sm:$0xff]
    %v1131 = vld [vmem:[%s15 + $0x160] sm:$0xff]
    %v1132 = vld [vmem:[%s15 + $0x168] sm:$0xff]
    %v1133 = vld [vmem:[%s15 + $0x170] sm:$0xff]
    %v1134 = vld [vmem:[%s15 + $0x178] sm:$0xff]
    %v1135 = vld [vmem:[%s15 + $0x180] sm:$0xff]
    %v1136 = vld [vmem:[%s15 + $0x188] sm:$0xff]
    %v1137 = vld [vmem:[%s15 + $0x190] sm:$0xff]
    %v1138 = vld [vmem:[%s15 + $0x198] sm:$0xff]
    %v1139 = vld [vmem:[%s15 + $0x1a0] sm:$0xff]
    %v1140 = vld [vmem:[%s15 + $0x1a8] sm:$0xff]
    %v1141 = vld [vmem:[%s15 + $0x1b0] sm:$0xff]
    %v1142 = vld [vmem:[%s15 + $0x1b8] sm:$0xff]
    %v1143 = vld [vmem:[%s15 + $0x1c0] sm:$0xff]
    %v1144 = vld [vmem:[%s15 + $0x1c8] sm:$0xff]
    %v1145 = vld [vmem:[%s15 + $0x1d0] sm:$0xff]
    %v1146 = vld [vmem:[%s15 + $0x1d8] sm:$0xff]
    %v1147 = vld [vmem:[%s15 + $0x1e0] sm:$0xff]
    %v1148 = vld [vmem:[%s15 + $0x1e8] sm:$0xff]
    %v1149 = vld [vmem:[%s15 + $0x1f0] sm:$0xff]
    %v1150 = vld [vmem:[%s15 + $0x1f8] sm:$0xff]
    %v1151 = vld [vmem:[%s15 + $0x200] sm:$0xff]
    %v1152 = vld [vmem:[%s15 + $0x208] sm:$0xff]
    %v1153 = vld [vmem:[%s15 + $0x210] sm:$0xff]
    %v1154 = vld [vmem:[%s15 + $0x218] sm:$0xff]
    %v1155 = vld [vmem:[%s15 + $0x220] sm:$0xff]
    %v1156 = vld [vmem:[%s15 + $0x228] sm:$0xff]
    %v1157 = vld [vmem:[%s15 + $0x230] sm:$0xff]
    %v1158 = vld [vmem:[%s15 + $0x238] sm:$0xff]
    %v1159 = vld [vmem:[%s15 + $0x240] sm:$0xff]
    %v1160 = vld [vmem:[%s15 + $0x248] sm:$0xff]
    %v1161 = vld [vmem:[%s15 + $0x250] sm:$0xff]
    %v1162 = vld [vmem:[%s15 + $0x258] sm:$0xff]
    %v1163 = vld [vmem:[%s15 + $0x260] sm:$0xff]
    %v1164 = vld [vmem:[%s15 + $0x268] sm:$0xff]
    %v1165 = vld [vmem:[%s15 + $0x270] sm:$0xff]
    %v1166 = vld [vmem:[%s15 + $0x278] sm:$0xff]
    %v1247 = vunpack.c.l.b16 %v1087
    %v1248 = vunpack.c.h.b16 %v1087
    %v1249 = vunpack.c.l.b16 %v1088
    %v1250 = vunpack.c.h.b16 %v1088
    %v1251 = vunpack.c.l.b16 %v1089
    %v1252 = vunpack.c.h.b16 %v1089
    %v1253 = vunpack.c.l.b16 %v1090
    %v1254 = vunpack.c.h.b16 %v1090
    %v1255 = vunpack.c.l.b16 %v1091
    %v1256 = vunpack.c.h.b16 %v1091
    %v1257 = vunpack.c.l.b16 %v1092
    %v1258 = vunpack.c.h.b16 %v1092
    %v1259 = vunpack.c.l.b16 %v1093
    %v1260 = vunpack.c.h.b16 %v1093
    %v1261 = vunpack.c.l.b16 %v1094
    %v1262 = vunpack.c.h.b16 %v1094
    %v1263 = vunpack.c.l.b16 %v1095
    %v1264 = vunpack.c.h.b16 %v1095
    %v1265 = vunpack.c.l.b16 %v1096
    %v1266 = vunpack.c.h.b16 %v1096
    %v1267 = vunpack.c.l.b16 %v1097
    %v1268 = vunpack.c.h.b16 %v1097
    %v1269 = vunpack.c.l.b16 %v1098
    %v1270 = vunpack.c.h.b16 %v1098
    %v1271 = vunpack.c.l.b16 %v1099
    %v1272 = vunpack.c.h.b16 %v1099
    %v1273 = vunpack.c.l.b16 %v1100
    %v1274 = vunpack.c.h.b16 %v1100
    %v1275 = vunpack.c.l.b16 %v1101
    %v1276 = vunpack.c.h.b16 %v1101
    %v1277 = vunpack.c.l.b16 %v1102
    %v1278 = vunpack.c.h.b16 %v1102
    %v1279 = vunpack.c.l.b16 %v1103
    %v1280 = vunpack.c.h.b16 %v1103
    %v1281 = vunpack.c.l.b16 %v1104
    %v1282 = vunpack.c.h.b16 %v1104
    %v1283 = vunpack.c.l.b16 %v1105
    %v1284 = vunpack.c.h.b16 %v1105
    %v1285 = vunpack.c.l.b16 %v1106
    %v1286 = vunpack.c.h.b16 %v1106
    %v1287 = vunpack.c.l.b16 %v1107
    %v1288 = vunpack.c.h.b16 %v1107
    %v1289 = vunpack.c.l.b16 %v1108
    %v1290 = vunpack.c.h.b16 %v1108
    %v1291 = vunpack.c.l.b16 %v1109
    %v1292 = vunpack.c.h.b16 %v1109
    %v1293 = vunpack.c.l.b16 %v1110
    %v1294 = vunpack.c.h.b16 %v1110
    %v1295 = vunpack.c.l.b16 %v1111
    %v1296 = vunpack.c.h.b16 %v1111
    %v1297 = vunpack.c.l.b16 %v1112
    %v1298 = vunpack.c.h.b16 %v1112
    %v1299 = vunpack.c.l.b16 %v1113
    %v1300 = vunpack.c.h.b16 %v1113
    %v1301 = vunpack.c.l.b16 %v1114
    %v1302 = vunpack.c.h.b16 %v1114
    %v1303 = vunpack.c.l.b16 %v1115
    %v1304 = vunpack.c.h.b16 %v1115
    %v1305 = vunpack.c.l.b16 %v1116
    %v1306 = vunpack.c.h.b16 %v1116
    %v1307 = vunpack.c.l.b16 %v1117
    %v1308 = vunpack.c.h.b16 %v1117
    %v1309 = vunpack.c.l.b16 %v1118
    %v1310 = vunpack.c.h.b16 %v1118
    %v1311 = vunpack.c.l.b16 %v1119
    %v1312 = vunpack.c.h.b16 %v1119
    %v1313 = vunpack.c.l.b16 %v1120
    %v1314 = vunpack.c.h.b16 %v1120
    %v1315 = vunpack.c.l.b16 %v1121
    %v1316 = vunpack.c.h.b16 %v1121
    %v1317 = vunpack.c.l.b16 %v1122
    %v1318 = vunpack.c.h.b16 %v1122
    %v1319 = vunpack.c.l.b16 %v1123
    %v1320 = vunpack.c.h.b16 %v1123
    %v1321 = vunpack.c.l.b16 %v1124
    %v1322 = vunpack.c.h.b16 %v1124
    %v1323 = vunpack.c.l.b16 %v1125
    %v1324 = vunpack.c.h.b16 %v1125
    %v1325 = vunpack.c.l.b16 %v1126
    %v1326 = vunpack.c.h.b16 %v1126
    %v1327 = vunpack.c.l.b16 %v1127
    %v1328 = vunpack.c.h.b16 %v1127
    %v1329 = vunpack.c.l.b16 %v1128
    %v1330 = vunpack.c.h.b16 %v1128
    %v1331 = vunpack.c.l.b16 %v1129
    %v1332 = vunpack.c.h.b16 %v1129
    %v1333 = vunpack.c.l.b16 %v1130
    %v1334 = vunpack.c.h.b16 %v1130
    %v1335 = vunpack.c.l.b16 %v1131
    %v1336 = vunpack.c.h.b16 %v1131
    %v1337 = vunpack.c.l.b16 %v1132
    %v1338 = vunpack.c.h.b16 %v1132
    %v1339 = vunpack.c.l.b16 %v1133
    %v1340 = vunpack.c.h.b16 %v1133
    %v1341 = vunpack.c.l.b16 %v1134
    %v1342 = vunpack.c.h.b16 %v1134
    %v1343 = vunpack.c.l.b16 %v1135
    %v1344 = vunpack.c.h.b16 %v1135
    %v1345 = vunpack.c.l.b16 %v1136
    %v1346 = vunpack.c.h.b16 %v1136
    %v1347 = vunpack.c.l.b16 %v1137
    %v1348 = vunpack.c.h.b16 %v1137
    %v1349 = vunpack.c.l.b16 %v1138
    %v1350 = vunpack.c.h.b16 %v1138
    %v1351 = vunpack.c.l.b16 %v1139
    %v1352 = vunpack.c.h.b16 %v1139
    %v1353 = vunpack.c.l.b16 %v1140
    %v1354 = vunpack.c.h.b16 %v1140
    %v1355 = vunpack.c.l.b16 %v1141
    %v1356 = vunpack.c.h.b16 %v1141
    %v1357 = vunpack.c.l.b16 %v1142
    %v1358 = vunpack.c.h.b16 %v1142
    %v1359 = vunpack.c.l.b16 %v1143
    %v1360 = vunpack.c.h.b16 %v1143
    %v1361 = vunpack.c.l.b16 %v1144
    %v1362 = vunpack.c.h.b16 %v1144
    %v1363 = vunpack.c.l.b16 %v1145
    %v1364 = vunpack.c.h.b16 %v1145
    %v1365 = vunpack.c.l.b16 %v1146
    %v1366 = vunpack.c.h.b16 %v1146
    %v1367 = vunpack.c.l.b16 %v1147
    %v1368 = vunpack.c.h.b16 %v1147
    %v1369 = vunpack.c.l.b16 %v1148
    %v1370 = vunpack.c.h.b16 %v1148
    %v1371 = vunpack.c.l.b16 %v1149
    %v1372 = vunpack.c.h.b16 %v1149
    %v1373 = vunpack.c.l.b16 %v1150
    %v1374 = vunpack.c.h.b16 %v1150
    %v1375 = vunpack.c.l.b16 %v1151
    %v1376 = vunpack.c.h.b16 %v1151
    %v1377 = vunpack.c.l.b16 %v1152
    %v1378 = vunpack.c.h.b16 %v1152
    %v1379 = vunpack.c.l.b16 %v1153
    %v1380 = vunpack.c.h.b16 %v1153
    %v1381 = vunpack.c.l.b16 %v1154
    %v1382 = vunpack.c.h.b16 %v1154
    %v1383 = vunpack.c.l.b16 %v1155
    %v1384 = vunpack.c.h.b16 %v1155
    %v1385 = vunpack.c.l.b16 %v1156
    %v1386 = vunpack.c.h.b16 %v1156
    %v1387 = vunpack.c.l.b16 %v1157
    %v1388 = vunpack.c.h.b16 %v1157
    %v1389 = vunpack.c.l.b16 %v1158
    %v1390 = vunpack.c.h.b16 %v1158
    %v1391 = vunpack.c.l.b16 %v1159
    %v1392 = vunpack.c.h.b16 %v1159
    %v1393 = vunpack.c.l.b16 %v1160
    %v1394 = vunpack.c.h.b16 %v1160
    %v1395 = vunpack.c.l.b16 %v1161
    %v1396 = vunpack.c.h.b16 %v1161
    %v1397 = vunpack.c.l.b16 %v1162
    %v1398 = vunpack.c.h.b16 %v1162
    %v1399 = vunpack.c.l.b16 %v1163
    %v1400 = vunpack.c.h.b16 %v1163
    %v1401 = vunpack.c.l.b16 %v1164
    %v1402 = vunpack.c.h.b16 %v1164
    %v1403 = vunpack.c.l.b16 %v1165
    %v1404 = vunpack.c.h.b16 %v1165
    %v1405 = vunpack.c.l.b16 %v1166
    %v1406 = vunpack.c.h.b16 %v1166
    %v1407 = vpack.c.b16 %v1249, %v1247
    %v1408 = vpack.c.b16 %v1250, %v1248
    %v1409 = vpack.c.b16 %v1253, %v1251
    %v1410 = vpack.c.b16 %v1254, %v1252
    %v1411 = vpack.c.b16 %v1257, %v1255
    %v1412 = vpack.c.b16 %v1258, %v1256
    %v1413 = vpack.c.b16 %v1261, %v1259
    %v1414 = vpack.c.b16 %v1262, %v1260
    %v1415 = vpack.c.b16 %v1265, %v1263
    %v1416 = vpack.c.b16 %v1266, %v1264
    %v1417 = vpack.c.b16 %v1269, %v1267
    %v1418 = vpack.c.b16 %v1270, %v1268
    %v1419 = vpack.c.b16 %v1273, %v1271
    %v1420 = vpack.c.b16 %v1274, %v1272
    %v1421 = vpack.c.b16 %v1277, %v1275
    %v1422 = vpack.c.b16 %v1278, %v1276
    %v1423 = vpack.c.b16 %v1281, %v1279
    %v1424 = vpack.c.b16 %v1282, %v1280
    %v1425 = vpack.c.b16 %v1285, %v1283
    %v1426 = vpack.c.b16 %v1286, %v1284
    %v1427 = vpack.c.b16 %v1289, %v1287
    %v1428 = vpack.c.b16 %v1290, %v1288
    %v1429 = vpack.c.b16 %v1293, %v1291
    %v1430 = vpack.c.b16 %v1294, %v1292
    %v1431 = vpack.c.b16 %v1297, %v1295
    %v1432 = vpack.c.b16 %v1298, %v1296
    %v1433 = vpack.c.b16 %v1301, %v1299
    %v1434 = vpack.c.b16 %v1302, %v1300
    %v1435 = vpack.c.b16 %v1305, %v1303
    %v1436 = vpack.c.b16 %v1306, %v1304
    %v1437 = vpack.c.b16 %v1309, %v1307
    %v1438 = vpack.c.b16 %v1310, %v1308
    %v1439 = vpack.c.b16 %v1313, %v1311
    %v1440 = vpack.c.b16 %v1314, %v1312
    %v1441 = vpack.c.b16 %v1317, %v1315
    %v1442 = vpack.c.b16 %v1318, %v1316
    %v1443 = vpack.c.b16 %v1321, %v1319
    %v1444 = vpack.c.b16 %v1322, %v1320
    %v1445 = vpack.c.b16 %v1325, %v1323
    %v1446 = vpack.c.b16 %v1326, %v1324
    %v1447 = vpack.c.b16 %v1329, %v1327
    %v1448 = vpack.c.b16 %v1330, %v1328
    %v1449 = vpack.c.b16 %v1333, %v1331
    %v1450 = vpack.c.b16 %v1334, %v1332
    %v1451 = vpack.c.b16 %v1337, %v1335
    %v1452 = vpack.c.b16 %v1338, %v1336
    %v1453 = vpack.c.b16 %v1341, %v1339
    %v1454 = vpack.c.b16 %v1342, %v1340
    %v1455 = vpack.c.b16 %v1345, %v1343
    %v1456 = vpack.c.b16 %v1346, %v1344
    %v1457 = vpack.c.b16 %v1349, %v1347
    %v1458 = vpack.c.b16 %v1350, %v1348
    %v1459 = vpack.c.b16 %v1353, %v1351
    %v1460 = vpack.c.b16 %v1354, %v1352
    %v1461 = vpack.c.b16 %v1357, %v1355
    %v1462 = vpack.c.b16 %v1358, %v1356
    %v1463 = vpack.c.b16 %v1361, %v1359
    %v1464 = vpack.c.b16 %v1362, %v1360
    %v1465 = vpack.c.b16 %v1365, %v1363
    %v1466 = vpack.c.b16 %v1366, %v1364
    %v1467 = vpack.c.b16 %v1369, %v1367
    %v1468 = vpack.c.b16 %v1370, %v1368
    %v1469 = vpack.c.b16 %v1373, %v1371
    %v1470 = vpack.c.b16 %v1374, %v1372
    %v1471 = vpack.c.b16 %v1377, %v1375
    %v1472 = vpack.c.b16 %v1378, %v1376
    %v1473 = vpack.c.b16 %v1381, %v1379
    %v1474 = vpack.c.b16 %v1382, %v1380
    %v1475 = vpack.c.b16 %v1385, %v1383
    %v1476 = vpack.c.b16 %v1386, %v1384
    %v1477 = vpack.c.b16 %v1389, %v1387
    %v1478 = vpack.c.b16 %v1390, %v1388
    %v1479 = vpack.c.b16 %v1393, %v1391
    %v1480 = vpack.c.b16 %v1394, %v1392
    %v1481 = vpack.c.b16 %v1397, %v1395
    %v1482 = vpack.c.b16 %v1398, %v1396
    %v1483 = vpack.c.b16 %v1401, %v1399
    %v1484 = vpack.c.b16 %v1402, %v1400
    %v1485 = vpack.c.b16 %v1405, %v1403
    %v1486 = vpack.c.b16 %v1406, %v1404
    %1567 = vmatprep.subr.bf16.mxu0 %v1408
    %1568 = vmatpush1.bf16.msra.mxu0 %v1407
    %1569 = vmatprep.subr.bf16.mxu0 %v1410
    %1570 = vmatpush1.bf16.msra.mxu0 %v1409
    %1571 = vmatprep.subr.bf16.mxu0 %v1412
    %1572 = vmatpush1.bf16.msra.mxu0 %v1411
    %1573 = vmatprep.subr.bf16.mxu0 %v1414
    %1574 = vmatpush1.bf16.msra.mxu0 %v1413
    %1575 = vmatprep.subr.bf16.mxu0 %v1416
    %1576 = vmatpush1.bf16.msra.mxu0 %v1415
    %1577 = vmatprep.subr.bf16.mxu0 %v1418
    %1578 = vmatpush1.bf16.msra.mxu0 %v1417
    %1579 = vmatprep.subr.bf16.mxu0 %v1420
    %1580 = vmatpush1.bf16.msra.mxu0 %v1419
    %1581 = vmatprep.subr.bf16.mxu0 %v1422
    %1582 = vmatpush1.bf16.msra.mxu0 %v1421
    %1583 = vmatprep.subr.bf16.mxu0 %v1424
    %1584 = vmatpush1.bf16.msra.mxu0 %v1423
    %1585 = vmatprep.subr.bf16.mxu0 %v1426
    %1586 = vmatpush1.bf16.msra.mxu0 %v1425
    %1587 = vmatprep.subr.bf16.mxu0 %v1428
    %1588 = vmatpush1.bf16.msra.mxu0 %v1427
    %1589 = vmatprep.subr.bf16.mxu0 %v1430
    %1590 = vmatpush1.bf16.msra.mxu0 %v1429
    %1591 = vmatprep.subr.bf16.mxu0 %v1432
    %1592 = vmatpush1.bf16.msra.mxu0 %v1431
    %1593 = vmatprep.subr.bf16.mxu0 %v1434
    %1594 = vmatpush1.bf16.msra.mxu0 %v1433
    %1595 = vmatprep.subr.bf16.mxu0 %v1436
    %1596 = vmatpush1.bf16.msra.mxu0 %v1435
    %1597 = vmatprep.subr.bf16.mxu0 %v1438
    %1598 = vmatpush1.bf16.msra.mxu0 %v1437
    %1599 = vmatprep.mubr.bf16.mxu0 %v1083
    %1600 = vmatmul.mubr.bf16.gmra.mrb[0].mxu0 %v1082
    %v1601 = vpop.f32.mrb[0].mxu0
    %v1602 = vadd.f32 0.0, %v1601
    %v1603 = vpop.f32.mrb[0].mxu0
    %v1604 = vadd.f32 0.0, %v1603
    %v1605 = vpop.f32.mrb[0].mxu0
    %v1606 = vadd.f32 0.0, %v1605
    %v1607 = vpop.f32.mrb[0].mxu0
    %v1608 = vadd.f32 0.0, %v1607
    %1609 = vdwg.mxu0
    %1610 = vmatprep.subr.bf16.mxu0 %v1440
    %1611 = vmatpush1.bf16.msra.mxu0 %v1439
    %1612 = vmatprep.subr.bf16.mxu0 %v1442
    %1613 = vmatpush1.bf16.msra.mxu0 %v1441
    %1614 = vmatprep.subr.bf16.mxu0 %v1444
    %1615 = vmatpush1.bf16.msra.mxu0 %v1443
    %1616 = vmatprep.subr.bf16.mxu0 %v1446
    %1617 = vmatpush1.bf16.msra.mxu0 %v1445
    %1618 = vmatprep.subr.bf16.mxu0 %v1448
    %1619 = vmatpush1.bf16.msra.mxu0 %v1447
    %1620 = vmatprep.subr.bf16.mxu0 %v1450
    %1621 = vmatpush1.bf16.msra.mxu0 %v1449
    %1622 = vmatprep.subr.bf16.mxu0 %v1452
    %1623 = vmatpush1.bf16.msra.mxu0 %v1451
    %1624 = vmatprep.subr.bf16.mxu0 %v1454
    %1625 = vmatpush1.bf16.msra.mxu0 %v1453
    %1626 = vmatprep.subr.bf16.mxu0 %v1456
    %1627 = vmatpush1.bf16.msra.mxu0 %v1455
    %1628 = vmatprep.subr.bf16.mxu0 %v1458
    %1629 = vmatpush1.bf16.msra.mxu0 %v1457
    %1630 = vmatprep.subr.bf16.mxu0 %v1460
    %1631 = vmatpush1.bf16.msra.mxu0 %v1459
    %1632 = vmatprep.subr.bf16.mxu0 %v1462
    %1633 = vmatpush1.bf16.msra.mxu0 %v1461
    %1634 = vmatprep.subr.bf16.mxu0 %v1464
    %1635 = vmatpush1.bf16.msra.mxu0 %v1463
    %1636 = vmatprep.subr.bf16.mxu0 %v1466
    %1637 = vmatpush1.bf16.msra.mxu0 %v1465
    %1638 = vmatprep.subr.bf16.mxu0 %v1468
    %1639 = vmatpush1.bf16.msra.mxu0 %v1467
    %1640 = vmatprep.subr.bf16.mxu0 %v1470
    %1641 = vmatpush1.bf16.msra.mxu0 %v1469
    %1642 = vmatprep.mubr.bf16.mxu0 %v1085
    %1643 = vmatmul.mubr.bf16.gmra.mrb[0].mxu0 %v1084
    %v1644 = vpop.f32.mrb[0].mxu0
    %v1645 = vadd.f32 %v1602, %v1644
    %v1646 = vpop.f32.mrb[0].mxu0
    %v1647 = vadd.f32 %v1604, %v1646
    %v1648 = vpop.f32.mrb[0].mxu0
    %v1649 = vadd.f32 %v1606, %v1648
    %v1650 = vpop.f32.mrb[0].mxu0
    %v1651 = vadd.f32 %v1608, %v1650
    %1652 = vdwg.mxu0
    %1653 = vmatprep.subr.bf16.mxu0 %v1472
    %1654 = vmatpush1.bf16.msra.mxu0 %v1471
    %1655 = vmatprep.subr.bf16.mxu0 %v1474
    %1656 = vmatpush1.bf16.msra.mxu0 %v1473
    %1657 = vmatprep.subr.bf16.mxu0 %v1476
    %1658 = vmatpush1.bf16.msra.mxu0 %v1475
    %1659 = vmatprep.subr.bf16.mxu0 %v1478
    %1660 = vmatpush1.bf16.msra.mxu0 %v1477
    %1661 = vmatprep.subr.bf16.mxu0 %v1480
    %1662 = vmatpush1.bf16.msra.mxu0 %v1479
    %1663 = vmatprep.subr.bf16.mxu0 %v1482
    %1664 = vmatpush1.bf16.msra.mxu0 %v1481
    %1665 = vmatprep.subr.bf16.mxu0 %v1484
    %1666 = vmatpush1.bf16.msra.mxu0 %v1483
    %1667 = vmatprep.subr.bf16.mxu0 %v1486
    %1668 = vmatpush1.bf16.msra.mxu0 %v1485
    %1669 = vmatprep.subr.bf16.mxu0 0
    %1670 = vmatpush1.bf16.msra.mxu0 0
    %1671 = vmatprep.subr.bf16.mxu0 0
    %1672 = vmatpush1.bf16.msra.mxu0 0
    %1673 = vmatprep.subr.bf16.mxu0 0
    %1674 = vmatpush1.bf16.msra.mxu0 0
    %1675 = vmatprep.subr.bf16.mxu0 0
    %1676 = vmatpush1.bf16.msra.mxu0 0
    %1677 = vmatprep.subr.bf16.mxu0 0
    %1678 = vmatpush1.bf16.msra.mxu0 0
    %1679 = vmatprep.subr.bf16.mxu0 0
    %1680 = vmatpush1.bf16.msra.mxu0 0
    %1681 = vmatprep.subr.bf16.mxu0 0
    %1682 = vmatpush1.bf16.msra.mxu0 0
    %1683 = vmatprep.subr.bf16.mxu0 0
    %1684 = vmatpush1.bf16.msra.mxu0 0
    %1685 = vmatprep.mubr.bf16.mxu0 0
    %1686 = vmatmul.mubr.bf16.gmra.mrb[0].mxu0 %v1086
    %v1687 = vpop.f32.mrb[0].mxu0
    %v1688 = vadd.f32 %v1645, %v1687
    %v1689 = vpop.f32.mrb[0].mxu0
    %v1690 = vadd.f32 %v1647, %v1689
    %v1691 = vpop.f32.mrb[0].mxu0
    %v1692 = vadd.f32 %v1649, %v1691
    %v1693 = vpop.f32.mrb[0].mxu0
    %v1694 = vadd.f32 %v1651, %v1693
    %1695 = vdwg.mxu0
    %v1696 = vmax.f32 %v1688, 0.0
    %v1697 = vmax.f32 %v1690, 0.0
    %v1698 = vmax.f32 %v1692, 0.0
    %v1699 = vmax.f32 %v1694, 0.0
    %v1700 = vpack.c.bf16 %v1698, %v1696
    %v1701 = vpack.c.bf16 %v1699, %v1697
    %v1702 = vld [vmem:[%s17] sm:$0xff]
    %v1703 = vld [vmem:[%s17 + $0x8] sm:$0xff]
    %v1704 = vld [vmem:[%s17 + $0x10] sm:$0xff]
    %v1705 = vld [vmem:[%s17 + $0x18] sm:$0xff]
    %v1706 = vld [vmem:[%s17 + $0x20] sm:$0xff]
    %v1707 = vld [vmem:[%s17 + $0x28] sm:$0xff]
    %v1708 = vld [vmem:[%s17 + $0x30] sm:$0xff]
    %v1709 = vld [vmem:[%s17 + $0x38] sm:$0xff]
    %v1710 = vld [vmem:[%s17 + $0x40] sm:$0xff]
    %v1711 = vld [vmem:[%s17 + $0x48] sm:$0xff]
    %v1712 = vld [vmem:[%s17 + $0x50] sm:$0xff]
    %v1713 = vld [vmem:[%s17 + $0x58] sm:$0xff]
    %v1714 = vld [vmem:[%s17 + $0x60] sm:$0xff]
    %v1715 = vld [vmem:[%s17 + $0x68] sm:$0xff]
    %v1716 = vld [vmem:[%s17 + $0x70] sm:$0xff]
    %v1717 = vld [vmem:[%s17 + $0x78] sm:$0xff]
    %v1718 = vld [vmem:[%s17 + $0x80] sm:$0xff]
    %v1719 = vld [vmem:[%s17 + $0x88] sm:$0xff]
    %v1720 = vld [vmem:[%s17 + $0x90] sm:$0xff]
    %v1721 = vld [vmem:[%s17 + $0x98] sm:$0xff]
    %v1722 = vld [vmem:[%s17 + $0xa0] sm:$0xff]
    %v1723 = vld [vmem:[%s17 + $0xa8] sm:$0xff]
    %v1724 = vld [vmem:[%s17 + $0xb0] sm:$0xff]
    %v1725 = vld [vmem:[%s17 + $0xb8] sm:$0xff]
    %v1726 = vld [vmem:[%s17 + $0xc0] sm:$0xff]
    %v1727 = vld [vmem:[%s17 + $0xc8] sm:$0xff]
    %v1728 = vld [vmem:[%s17 + $0xd0] sm:$0xff]
    %v1729 = vld [vmem:[%s17 + $0xd8] sm:$0xff]
    %v1730 = vld [vmem:[%s17 + $0xe0] sm:$0xff]
    %v1731 = vld [vmem:[%s17 + $0xe8] sm:$0xff]
    %v1732 = vld [vmem:[%s17 + $0xf0] sm:$0xff]
    %v1733 = vld [vmem:[%s17 + $0xf8] sm:$0xff]
    %v1734 = vld [vmem:[%s17 + $0x100] sm:$0xff]
    %v1735 = vld [vmem:[%s17 + $0x108] sm:$0xff]
    %v1736 = vld [vmem:[%s17 + $0x110] sm:$0xff]
    %v1737 = vld [vmem:[%s17 + $0x118] sm:$0xff]
    %v1738 = vld [vmem:[%s17 + $0x120] sm:$0xff]
    %v1739 = vld [vmem:[%s17 + $0x128] sm:$0xff]
    %v1740 = vld [vmem:[%s17 + $0x130] sm:$0xff]
    %v1741 = vld [vmem:[%s17 + $0x138] sm:$0xff]
    %v1742 = vld [vmem:[#allocation14] sm:$0xf]
    %v1744 = vlaneseq
    %v1745 = vshrl.u32 %v1744, 7
    %v1746 = vsub.s32 0, %v1745
    %v1747 = vrot.slane %v1742, %v1746
    %v1748 = vlaneseq
    %v1749 = vshrl.u32 %v1748, 7
    %v1750 = vsub.s32 1, %v1749
    %v1751 = vrot.slane %v1742, %v1750
    %v1752 = vlaneseq
    %v1753 = vshrl.u32 %v1752, 7
    %v1754 = vsub.s32 2, %v1753
    %v1755 = vrot.slane %v1742, %v1754
    %v1756 = vlaneseq
    %v1757 = vshrl.u32 %v1756, 7
    %v1758 = vsub.s32 3, %v1757
    %v1759 = vrot.slane %v1742, %v1758
    %v1804 = vunpack.c.l.b16 %v1702
    %v1805 = vunpack.c.h.b16 %v1702
    %v1806 = vunpack.c.l.b16 %v1703
    %v1807 = vunpack.c.h.b16 %v1703
    %v1808 = vunpack.c.l.b16 %v1704
    %v1809 = vunpack.c.h.b16 %v1704
    %v1810 = vunpack.c.l.b16 %v1705
    %v1811 = vunpack.c.h.b16 %v1705
    %v1812 = vunpack.c.l.b16 %v1706
    %v1813 = vunpack.c.h.b16 %v1706
    %v1814 = vunpack.c.l.b16 %v1707
    %v1815 = vunpack.c.h.b16 %v1707
    %v1816 = vunpack.c.l.b16 %v1708
    %v1817 = vunpack.c.h.b16 %v1708
    %v1818 = vunpack.c.l.b16 %v1709
    %v1819 = vunpack.c.h.b16 %v1709
    %v1820 = vunpack.c.l.b16 %v1710
    %v1821 = vunpack.c.h.b16 %v1710
    %v1822 = vunpack.c.l.b16 %v1711
    %v1823 = vunpack.c.h.b16 %v1711
    %v1824 = vunpack.c.l.b16 %v1712
    %v1825 = vunpack.c.h.b16 %v1712
    %v1826 = vunpack.c.l.b16 %v1713
    %v1827 = vunpack.c.h.b16 %v1713
    %v1828 = vunpack.c.l.b16 %v1714
    %v1829 = vunpack.c.h.b16 %v1714
    %v1830 = vunpack.c.l.b16 %v1715
    %v1831 = vunpack.c.h.b16 %v1715
    %v1832 = vunpack.c.l.b16 %v1716
    %v1833 = vunpack.c.h.b16 %v1716
    %v1834 = vunpack.c.l.b16 %v1717
    %v1835 = vunpack.c.h.b16 %v1717
    %v1836 = vunpack.c.l.b16 %v1718
    %v1837 = vunpack.c.h.b16 %v1718
    %v1838 = vunpack.c.l.b16 %v1719
    %v1839 = vunpack.c.h.b16 %v1719
    %v1840 = vunpack.c.l.b16 %v1720
    %v1841 = vunpack.c.h.b16 %v1720
    %v1842 = vunpack.c.l.b16 %v1721
    %v1843 = vunpack.c.h.b16 %v1721
    %v1844 = vunpack.c.l.b16 %v1722
    %v1845 = vunpack.c.h.b16 %v1722
    %v1846 = vunpack.c.l.b16 %v1723
    %v1847 = vunpack.c.h.b16 %v1723
    %v1848 = vunpack.c.l.b16 %v1724
    %v1849 = vunpack.c.h.b16 %v1724
    %v1850 = vunpack.c.l.b16 %v1725
    %v1851 = vunpack.c.h.b16 %v1725
    %v1852 = vunpack.c.l.b16 %v1726
    %v1853 = vunpack.c.h.b16 %v1726
    %v1854 = vunpack.c.l.b16 %v1727
    %v1855 = vunpack.c.h.b16 %v1727
    %v1856 = vunpack.c.l.b16 %v1728
    %v1857 = vunpack.c.h.b16 %v1728
    %v1858 = vunpack.c.l.b16 %v1729
    %v1859 = vunpack.c.h.b16 %v1729
    %v1860 = vunpack.c.l.b16 %v1730
    %v1861 = vunpack.c.h.b16 %v1730
    %v1862 = vunpack.c.l.b16 %v1731
    %v1863 = vunpack.c.h.b16 %v1731
    %v1864 = vunpack.c.l.b16 %v1732
    %v1865 = vunpack.c.h.b16 %v1732
    %v1866 = vunpack.c.l.b16 %v1733
    %v1867 = vunpack.c.h.b16 %v1733
    %v1868 = vunpack.c.l.b16 %v1734
    %v1869 = vunpack.c.h.b16 %v1734
    %v1870 = vunpack.c.l.b16 %v1735
    %v1871 = vunpack.c.h.b16 %v1735
    %v1872 = vunpack.c.l.b16 %v1736
    %v1873 = vunpack.c.h.b16 %v1736
    %v1874 = vunpack.c.l.b16 %v1737
    %v1875 = vunpack.c.h.b16 %v1737
    %v1876 = vunpack.c.l.b16 %v1738
    %v1877 = vunpack.c.h.b16 %v1738
    %v1878 = vunpack.c.l.b16 %v1739
    %v1879 = vunpack.c.h.b16 %v1739
    %v1880 = vunpack.c.l.b16 %v1740
    %v1881 = vunpack.c.h.b16 %v1740
    %v1882 = vunpack.c.l.b16 %v1741
    %v1883 = vunpack.c.h.b16 %v1741
    %v1884 = vpack.c.b16 %v1808, %v1804
    %v1885 = vpack.c.b16 %v1809, %v1805
    %v1886 = vpack.c.b16 %v1810, %v1806
    %v1887 = vpack.c.b16 %v1811, %v1807
    %v1888 = vpack.c.b16 %v1816, %v1812
    %v1889 = vpack.c.b16 %v1817, %v1813
    %v1890 = vpack.c.b16 %v1818, %v1814
    %v1891 = vpack.c.b16 %v1819, %v1815
    %v1892 = vpack.c.b16 %v1824, %v1820
    %v1893 = vpack.c.b16 %v1825, %v1821
    %v1894 = vpack.c.b16 %v1826, %v1822
    %v1895 = vpack.c.b16 %v1827, %v1823
    %v1896 = vpack.c.b16 %v1832, %v1828
    %v1897 = vpack.c.b16 %v1833, %v1829
    %v1898 = vpack.c.b16 %v1834, %v1830
    %v1899 = vpack.c.b16 %v1835, %v1831
    %v1900 = vpack.c.b16 %v1840, %v1836
    %v1901 = vpack.c.b16 %v1841, %v1837
    %v1902 = vpack.c.b16 %v1842, %v1838
    %v1903 = vpack.c.b16 %v1843, %v1839
    %v1904 = vpack.c.b16 %v1848, %v1844
    %v1905 = vpack.c.b16 %v1849, %v1845
    %v1906 = vpack.c.b16 %v1850, %v1846
    %v1907 = vpack.c.b16 %v1851, %v1847
    %v1908 = vpack.c.b16 %v1856, %v1852
    %v1909 = vpack.c.b16 %v1857, %v1853
    %v1910 = vpack.c.b16 %v1858, %v1854
    %v1911 = vpack.c.b16 %v1859, %v1855
    %v1912 = vpack.c.b16 %v1864, %v1860
    %v1913 = vpack.c.b16 %v1865, %v1861
    %v1914 = vpack.c.b16 %v1866, %v1862
    %v1915 = vpack.c.b16 %v1867, %v1863
    %v1916 = vpack.c.b16 %v1872, %v1868
    %v1917 = vpack.c.b16 %v1873, %v1869
    %v1918 = vpack.c.b16 %v1874, %v1870
    %v1919 = vpack.c.b16 %v1875, %v1871
    %v1920 = vpack.c.b16 %v1880, %v1876
    %v1921 = vpack.c.b16 %v1881, %v1877
    %v1922 = vpack.c.b16 %v1882, %v1878
    %v1923 = vpack.c.b16 %v1883, %v1879
    %vm1964 = vcmask 261120
    %v1966 = vsel %vm1964, %v1701, 0
    %1968 = vmatprep.subr.bf16.mxu0 %v1885
    %1969 = vmatpush1.bf16.msra.mxu0 %v1884
    %1970 = vmatprep.subr.bf16.mxu0 %v1889
    %1971 = vmatpush1.bf16.msra.mxu0 %v1888
    %1972 = vmatprep.subr.bf16.mxu0 %v1893
    %1973 = vmatpush1.bf16.msra.mxu0 %v1892
    %1974 = vmatprep.subr.bf16.mxu0 %v1897
    %1975 = vmatpush1.bf16.msra.mxu0 %v1896
    %1976 = vmatprep.subr.bf16.mxu0 %v1901
    %1977 = vmatpush1.bf16.msra.mxu0 %v1900
    %1978 = vmatprep.subr.bf16.mxu0 %v1905
    %1979 = vmatpush1.bf16.msra.mxu0 %v1904
    %1980 = vmatprep.subr.bf16.mxu0 %v1909
    %1981 = vmatpush1.bf16.msra.mxu0 %v1908
    %1982 = vmatprep.subr.bf16.mxu0 %v1913
    %1983 = vmatpush1.bf16.msra.mxu0 %v1912
    %1984 = vmatprep.subr.bf16.mxu0 %v1917
    %1985 = vmatpush1.bf16.msra.mxu0 %v1916
    %1986 = vmatprep.subr.bf16.mxu0 %v1921
    %1987 = vmatpush1.bf16.msra.mxu0 %v1920
    %1988 = vmatprep.subr.bf16.mxu0 0
    %1989 = vmatpush1.bf16.msra.mxu0 0
    %1990 = vmatprep.subr.bf16.mxu0 0
    %1991 = vmatpush1.bf16.msra.mxu0 0
    %1992 = vmatprep.subr.bf16.mxu0 0
    %1993 = vmatpush1.bf16.msra.mxu0 0
    %1994 = vmatprep.subr.bf16.mxu0 0
    %1995 = vmatpush1.bf16.msra.mxu0 0
    %1996 = vmatprep.subr.bf16.mxu0 0
    %1997 = vmatpush1.bf16.msra.mxu0 0
    %1998 = vmatprep.subr.bf16.mxu0 0
    %1999 = vmatpush1.bf16.msra.mxu0 0
    %2000 = vmatprep.mubr.bf16.mxu0 %v1966
    %2001 = vmatmul.mubr.bf16.gmra.mrb[0].mxu0 %v1700
    %v2002 = vpop.f32.mrb[0].mxu0
    %v2003 = vadd.f32 %v1747, %v2002
    %v2004 = vpop.f32.mrb[0].mxu0
    %v2005 = vadd.f32 %v1751, %v2004
    %v2006 = vpop.f32.mrb[0].mxu0
    %v2007 = vadd.f32 %v1747, %v2006
    %v2008 = vpop.f32.mrb[0].mxu0
    %v2009 = vadd.f32 %v1751, %v2008
    %2010 = vdwg.mxu0
    %2011 = vmatprep.subr.bf16.mxu0 %v1887
    %2012 = vmatpush1.bf16.msra.mxu0 %v1886
    %2013 = vmatprep.subr.bf16.mxu0 %v1891
    %2014 = vmatpush1.bf16.msra.mxu0 %v1890
    %2015 = vmatprep.subr.bf16.mxu0 %v1895
    %2016 = vmatpush1.bf16.msra.mxu0 %v1894
    %2017 = vmatprep.subr.bf16.mxu0 %v1899
    %2018 = vmatpush1.bf16.msra.mxu0 %v1898
    %2019 = vmatprep.subr.bf16.mxu0 %v1903
    %2020 = vmatpush1.bf16.msra.mxu0 %v1902
    %2021 = vmatprep.subr.bf16.mxu0 %v1907
    %2022 = vmatpush1.bf16.msra.mxu0 %v1906
    %2023 = vmatprep.subr.bf16.mxu0 %v1911
    %2024 = vmatpush1.bf16.msra.mxu0 %v1910
    %2025 = vmatprep.subr.bf16.mxu0 %v1915
    %2026 = vmatpush1.bf16.msra.mxu0 %v1914
    %2027 = vmatprep.subr.bf16.mxu0 %v1919
    %2028 = vmatpush1.bf16.msra.mxu0 %v1918
    %2029 = vmatprep.subr.bf16.mxu0 %v1923
    %2030 = vmatpush1.bf16.msra.mxu0 %v1922
    %2031 = vmatprep.subr.bf16.mxu0 0
    %2032 = vmatpush1.bf16.msra.mxu0 0
    %2033 = vmatprep.subr.bf16.mxu0 0
    %2034 = vmatpush1.bf16.msra.mxu0 0
    %2035 = vmatprep.subr.bf16.mxu0 0
    %2036 = vmatpush1.bf16.msra.mxu0 0
    %2037 = vmatprep.subr.bf16.mxu0 0
    %2038 = vmatpush1.bf16.msra.mxu0 0
    %2039 = vmatprep.subr.bf16.mxu0 0
    %2040 = vmatpush1.bf16.msra.mxu0 0
    %2041 = vmatprep.subr.bf16.mxu0 0
    %2042 = vmatpush1.bf16.msra.mxu0 0
    %2043 = vmatprep.mubr.bf16.mxu0 %v1966
    %2044 = vmatmul.mubr.bf16.gmra.mrb[0].mxu0 %v1700
    %v2045 = vpop.f32.mrb[0].mxu0
    %v2046 = vadd.f32 %v1755, %v2045
    %v2047 = vpop.f32.mrb[0].mxu0
    %v2048 = vadd.f32 %v1759, %v2047
    %v2049 = vpop.f32.mrb[0].mxu0
    %v2050 = vadd.f32 %v1755, %v2049
    %v2051 = vpop.f32.mrb[0].mxu0
    %v2052 = vadd.f32 %v1759, %v2051
    %2053 = vdwg.mxu0
    %v2054 = vld [vmem:[%s19] sm:$0xff]
    %v2055 = vld [vmem:[%s19 + $0x8] sm:$0xff]
    %v2056 = vld [vmem:[%s19 + $0x10] sm:$0xff]
    %v2057 = vld [vmem:[%s19 + $0x18] sm:$0xff]
    %v2058 = vld [vmem:[%s19 + $0x20] sm:$0xff]
    %v2059 = vld [vmem:[%s19 + $0x28] sm:$0xff]
    %v2060 = vld [vmem:[%s19 + $0x30] sm:$0xff]
    %v2061 = vld [vmem:[%s19 + $0x38] sm:$0xff]
    %v2062 = vld [vmem:[%s19 + $0x40] sm:$0xff]
    %v2063 = vld [vmem:[%s19 + $0x48] sm:$0xff]
    %v2064 = vld [vmem:[%s19 + $0x50] sm:$0xff]
    %v2065 = vld [vmem:[%s19 + $0x58] sm:$0xff]
    %v2066 = vld [vmem:[%s19 + $0x60] sm:$0xff]
    %v2067 = vld [vmem:[%s19 + $0x68] sm:$0xff]
    %v2068 = vld [vmem:[%s19 + $0x70] sm:$0xff]
    %v2069 = vld [vmem:[%s19 + $0x78] sm:$0xff]
    %v2070 = vld [vmem:[%s19 + $0x80] sm:$0xff]
    %v2071 = vld [vmem:[%s19 + $0x88] sm:$0xff]
    %v2072 = vld [vmem:[%s19 + $0x90] sm:$0xff]
    %v2073 = vld [vmem:[%s19 + $0x98] sm:$0xff]
    %v2074 = vld [vmem:[%s19 + $0xa0] sm:$0xff]
    %v2075 = vld [vmem:[%s19 + $0xa8] sm:$0xff]
    %v2076 = vld [vmem:[%s19 + $0xb0] sm:$0xff]
    %v2077 = vld [vmem:[%s19 + $0xb8] sm:$0xff]
    %v2078 = vld [vmem:[%s19 + $0xc0] sm:$0xff]
    %v2079 = vld [vmem:[%s19 + $0xc8] sm:$0xff]
    %v2080 = vld [vmem:[%s19 + $0xd0] sm:$0xff]
    %v2081 = vld [vmem:[%s19 + $0xd8] sm:$0xff]
    %v2082 = vld [vmem:[%s19 + $0xe0] sm:$0xff]
    %v2083 = vld [vmem:[%s19 + $0xe8] sm:$0xff]
    %v2084 = vld [vmem:[%s19 + $0xf0] sm:$0xff]
    %v2085 = vld [vmem:[%s19 + $0xf8] sm:$0xff]
    %v2086 = vld [vmem:[%s19 + $0x100] sm:$0xff]
    %v2087 = vld [vmem:[%s19 + $0x108] sm:$0xff]
    %v2088 = vld [vmem:[%s19 + $0x110] sm:$0xff]
    %v2089 = vld [vmem:[%s19 + $0x118] sm:$0xff]
    %v2090 = vld [vmem:[%s19 + $0x120] sm:$0xff]
    %v2091 = vld [vmem:[%s19 + $0x128] sm:$0xff]
    %v2092 = vld [vmem:[%s19 + $0x130] sm:$0xff]
    %v2093 = vld [vmem:[%s19 + $0x138] sm:$0xff]
    %v2094 = vld [vmem:[#allocation16] sm:$0xf]
    %v2096 = vlaneseq
    %v2097 = vshrl.u32 %v2096, 7
    %v2098 = vsub.s32 0, %v2097
    %v2099 = vrot.slane %v2094, %v2098
    %v2100 = vlaneseq
    %v2101 = vshrl.u32 %v2100, 7
    %v2102 = vsub.s32 1, %v2101
    %v2103 = vrot.slane %v2094, %v2102
    %v2104 = vlaneseq
    %v2105 = vshrl.u32 %v2104, 7
    %v2106 = vsub.s32 2, %v2105
    %v2107 = vrot.slane %v2094, %v2106
    %v2108 = vlaneseq
    %v2109 = vshrl.u32 %v2108, 7
    %v2110 = vsub.s32 3, %v2109
    %v2111 = vrot.slane %v2094, %v2110
    %v2156 = vunpack.c.l.b16 %v2054
    %v2157 = vunpack.c.h.b16 %v2054
    %v2158 = vunpack.c.l.b16 %v2055
    %v2159 = vunpack.c.h.b16 %v2055
    %v2160 = vunpack.c.l.b16 %v2056
    %v2161 = vunpack.c.h.b16 %v2056
    %v2162 = vunpack.c.l.b16 %v2057
    %v2163 = vunpack.c.h.b16 %v2057
    %v2164 = vunpack.c.l.b16 %v2058
    %v2165 = vunpack.c.h.b16 %v2058
    %v2166 = vunpack.c.l.b16 %v2059
    %v2167 = vunpack.c.h.b16 %v2059
    %v2168 = vunpack.c.l.b16 %v2060
    %v2169 = vunpack.c.h.b16 %v2060
    %v2170 = vunpack.c.l.b16 %v2061
    %v2171 = vunpack.c.h.b16 %v2061
    %v2172 = vunpack.c.l.b16 %v2062
    %v2173 = vunpack.c.h.b16 %v2062
    %v2174 = vunpack.c.l.b16 %v2063
    %v2175 = vunpack.c.h.b16 %v2063
    %v2176 = vunpack.c.l.b16 %v2064
    %v2177 = vunpack.c.h.b16 %v2064
    %v2178 = vunpack.c.l.b16 %v2065
    %v2179 = vunpack.c.h.b16 %v2065
    %v2180 = vunpack.c.l.b16 %v2066
    %v2181 = vunpack.c.h.b16 %v2066
    %v2182 = vunpack.c.l.b16 %v2067
    %v2183 = vunpack.c.h.b16 %v2067
    %v2184 = vunpack.c.l.b16 %v2068
    %v2185 = vunpack.c.h.b16 %v2068
    %v2186 = vunpack.c.l.b16 %v2069
    %v2187 = vunpack.c.h.b16 %v2069
    %v2188 = vunpack.c.l.b16 %v2070
    %v2189 = vunpack.c.h.b16 %v2070
    %v2190 = vunpack.c.l.b16 %v2071
    %v2191 = vunpack.c.h.b16 %v2071
    %v2192 = vunpack.c.l.b16 %v2072
    %v2193 = vunpack.c.h.b16 %v2072
    %v2194 = vunpack.c.l.b16 %v2073
    %v2195 = vunpack.c.h.b16 %v2073
    %v2196 = vunpack.c.l.b16 %v2074
    %v2197 = vunpack.c.h.b16 %v2074
    %v2198 = vunpack.c.l.b16 %v2075
    %v2199 = vunpack.c.h.b16 %v2075
    %v2200 = vunpack.c.l.b16 %v2076
    %v2201 = vunpack.c.h.b16 %v2076
    %v2202 = vunpack.c.l.b16 %v2077
    %v2203 = vunpack.c.h.b16 %v2077
    %v2204 = vunpack.c.l.b16 %v2078
    %v2205 = vunpack.c.h.b16 %v2078
    %v2206 = vunpack.c.l.b16 %v2079
    %v2207 = vunpack.c.h.b16 %v2079
    %v2208 = vunpack.c.l.b16 %v2080
    %v2209 = vunpack.c.h.b16 %v2080
    %v2210 = vunpack.c.l.b16 %v2081
    %v2211 = vunpack.c.h.b16 %v2081
    %v2212 = vunpack.c.l.b16 %v2082
    %v2213 = vunpack.c.h.b16 %v2082
    %v2214 = vunpack.c.l.b16 %v2083
    %v2215 = vunpack.c.h.b16 %v2083
    %v2216 = vunpack.c.l.b16 %v2084
    %v2217 = vunpack.c.h.b16 %v2084
    %v2218 = vunpack.c.l.b16 %v2085
    %v2219 = vunpack.c.h.b16 %v2085
    %v2220 = vunpack.c.l.b16 %v2086
    %v2221 = vunpack.c.h.b16 %v2086
    %v2222 = vunpack.c.l.b16 %v2087
    %v2223 = vunpack.c.h.b16 %v2087
    %v2224 = vunpack.c.l.b16 %v2088
    %v2225 = vunpack.c.h.b16 %v2088
    %v2226 = vunpack.c.l.b16 %v2089
    %v2227 = vunpack.c.h.b16 %v2089
    %v2228 = vunpack.c.l.b16 %v2090
    %v2229 = vunpack.c.h.b16 %v2090
    %v2230 = vunpack.c.l.b16 %v2091
    %v2231 = vunpack.c.h.b16 %v2091
    %v2232 = vunpack.c.l.b16 %v2092
    %v2233 = vunpack.c.h.b16 %v2092
    %v2234 = vunpack.c.l.b16 %v2093
    %v2235 = vunpack.c.h.b16 %v2093
    %v2236 = vpack.c.b16 %v2160, %v2156
    %v2237 = vpack.c.b16 %v2161, %v2157
    %v2238 = vpack.c.b16 %v2162, %v2158
    %v2239 = vpack.c.b16 %v2163, %v2159
    %v2240 = vpack.c.b16 %v2168, %v2164
    %v2241 = vpack.c.b16 %v2169, %v2165
    %v2242 = vpack.c.b16 %v2170, %v2166
    %v2243 = vpack.c.b16 %v2171, %v2167
    %v2244 = vpack.c.b16 %v2176, %v2172
    %v2245 = vpack.c.b16 %v2177, %v2173
    %v2246 = vpack.c.b16 %v2178, %v2174
    %v2247 = vpack.c.b16 %v2179, %v2175
    %v2248 = vpack.c.b16 %v2184, %v2180
    %v2249 = vpack.c.b16 %v2185, %v2181
    %v2250 = vpack.c.b16 %v2186, %v2182
    %v2251 = vpack.c.b16 %v2187, %v2183
    %v2252 = vpack.c.b16 %v2192, %v2188
    %v2253 = vpack.c.b16 %v2193, %v2189
    %v2254 = vpack.c.b16 %v2194, %v2190
    %v2255 = vpack.c.b16 %v2195, %v2191
    %v2256 = vpack.c.b16 %v2200, %v2196
    %v2257 = vpack.c.b16 %v2201, %v2197
    %v2258 = vpack.c.b16 %v2202, %v2198
    %v2259 = vpack.c.b16 %v2203, %v2199
    %v2260 = vpack.c.b16 %v2208, %v2204
    %v2261 = vpack.c.b16 %v2209, %v2205
    %v2262 = vpack.c.b16 %v2210, %v2206
    %v2263 = vpack.c.b16 %v2211, %v2207
    %v2264 = vpack.c.b16 %v2216, %v2212
    %v2265 = vpack.c.b16 %v2217, %v2213
    %v2266 = vpack.c.b16 %v2218, %v2214
    %v2267 = vpack.c.b16 %v2219, %v2215
    %v2268 = vpack.c.b16 %v2224, %v2220
    %v2269 = vpack.c.b16 %v2225, %v2221
    %v2270 = vpack.c.b16 %v2226, %v2222
    %v2271 = vpack.c.b16 %v2227, %v2223
    %v2272 = vpack.c.b16 %v2232, %v2228
    %v2273 = vpack.c.b16 %v2233, %v2229
    %v2274 = vpack.c.b16 %v2234, %v2230
    %v2275 = vpack.c.b16 %v2235, %v2231
    %2316 = vmatprep.subr.bf16.mxu0 %v2237
    %2317 = vmatpush1.bf16.msra.mxu0 %v2236
    %2318 = vmatprep.subr.bf16.mxu0 %v2241
    %2319 = vmatpush1.bf16.msra.mxu0 %v2240
    %2320 = vmatprep.subr.bf16.mxu0 %v2245
    %2321 = vmatpush1.bf16.msra.mxu0 %v2244
    %2322 = vmatprep.subr.bf16.mxu0 %v2249
    %2323 = vmatpush1.bf16.msra.mxu0 %v2248
    %2324 = vmatprep.subr.bf16.mxu0 %v2253
    %2325 = vmatpush1.bf16.msra.mxu0 %v2252
    %2326 = vmatprep.subr.bf16.mxu0 %v2257
    %2327 = vmatpush1.bf16.msra.mxu0 %v2256
    %2328 = vmatprep.subr.bf16.mxu0 %v2261
    %2329 = vmatpush1.bf16.msra.mxu0 %v2260
    %2330 = vmatprep.subr.bf16.mxu0 %v2265
    %2331 = vmatpush1.bf16.msra.mxu0 %v2264
    %2332 = vmatprep.subr.bf16.mxu0 %v2269
    %2333 = vmatpush1.bf16.msra.mxu0 %v2268
    %2334 = vmatprep.subr.bf16.mxu0 %v2273
    %2335 = vmatpush1.bf16.msra.mxu0 %v2272
    %2336 = vmatprep.subr.bf16.mxu0 0
    %2337 = vmatpush1.bf16.msra.mxu0 0
    %2338 = vmatprep.subr.bf16.mxu0 0
    %2339 = vmatpush1.bf16.msra.mxu0 0
    %2340 = vmatprep.subr.bf16.mxu0 0
    %2341 = vmatpush1.bf16.msra.mxu0 0
    %2342 = vmatprep.subr.bf16.mxu0 0
    %2343 = vmatpush1.bf16.msra.mxu0 0
    %2344 = vmatprep.subr.bf16.mxu0 0
    %2345 = vmatpush1.bf16.msra.mxu0 0
    %2346 = vmatprep.subr.bf16.mxu0 0
    %2347 = vmatpush1.bf16.msra.mxu0 0
    %2348 = vmatprep.mubr.bf16.mxu0 %v1966
    %2349 = vmatmul.mubr.bf16.gmra.mrb[0].mxu0 %v1700
    %v2350 = vpop.f32.mrb[0].mxu0
    %v2351 = vadd.f32 %v2099, %v2350
    %v2352 = vpop.f32.mrb[0].mxu0
    %v2353 = vadd.f32 %v2103, %v2352
    %v2354 = vpop.f32.mrb[0].mxu0
    %v2355 = vadd.f32 %v2099, %v2354
    %v2356 = vpop.f32.mrb[0].mxu0
    %v2357 = vadd.f32 %v2103, %v2356
    %2358 = vdwg.mxu0
    %2359 = vmatprep.subr.bf16.mxu0 %v2239
    %2360 = vmatpush1.bf16.msra.mxu0 %v2238
    %2361 = vmatprep.subr.bf16.mxu0 %v2243
    %2362 = vmatpush1.bf16.msra.mxu0 %v2242
    %2363 = vmatprep.subr.bf16.mxu0 %v2247
    %2364 = vmatpush1.bf16.msra.mxu0 %v2246
    %2365 = vmatprep.subr.bf16.mxu0 %v2251
    %2366 = vmatpush1.bf16.msra.mxu0 %v2250
    %2367 = vmatprep.subr.bf16.mxu0 %v2255
    %2368 = vmatpush1.bf16.msra.mxu0 %v2254
    %2369 = vmatprep.subr.bf16.mxu0 %v2259
    %2370 = vmatpush1.bf16.msra.mxu0 %v2258
    %2371 = vmatprep.subr.bf16.mxu0 %v2263
    %2372 = vmatpush1.bf16.msra.mxu0 %v2262
    %2373 = vmatprep.subr.bf16.mxu0 %v2267
    %2374 = vmatpush1.bf16.msra.mxu0 %v2266
    %2375 = vmatprep.subr.bf16.mxu0 %v2271
    %2376 = vmatpush1.bf16.msra.mxu0 %v2270
    %2377 = vmatprep.subr.bf16.mxu0 %v2275
    %2378 = vmatpush1.bf16.msra.mxu0 %v2274
    %2379 = vmatprep.subr.bf16.mxu0 0
    %2380 = vmatpush1.bf16.msra.mxu0 0
    %2381 = vmatprep.subr.bf16.mxu0 0
    %2382 = vmatpush1.bf16.msra.mxu0 0
    %2383 = vmatprep.subr.bf16.mxu0 0
    %2384 = vmatpush1.bf16.msra.mxu0 0
    %2385 = vmatprep.subr.bf16.mxu0 0
    %2386 = vmatpush1.bf16.msra.mxu0 0
    %2387 = vmatprep.subr.bf16.mxu0 0
    %2388 = vmatpush1.bf16.msra.mxu0 0
    %2389 = vmatprep.subr.bf16.mxu0 0
    %2390 = vmatpush1.bf16.msra.mxu0 0
    %2391 = vmatprep.mubr.bf16.mxu0 %v1966
    %2392 = vmatmul.mubr.bf16.gmra.mrb[0].mxu0 %v1700
    %v2393 = vpop.f32.mrb[0].mxu0
    %v2394 = vadd.f32 %v2107, %v2393
    %v2395 = vpop.f32.mrb[0].mxu0
    %v2396 = vadd.f32 %v2111, %v2395
    %v2397 = vpop.f32.mrb[0].mxu0
    %v2398 = vadd.f32 %v2107, %v2397
    %v2399 = vpop.f32.mrb[0].mxu0
    %v2400 = vadd.f32 %v2111, %v2399
    %2401 = vdwg.mxu0
    %v2402 = vxor.u32 %v2351, 2147483648
    %v2403 = vxor.u32 %v2353, 2147483648
    %v2404 = vxor.u32 %v2394, 2147483648
    %v2405 = vxor.u32 %v2396, 2147483648
    %v2406 = vxor.u32 %v2355, 2147483648
    %v2407 = vxor.u32 %v2357, 2147483648
    %v2408 = vxor.u32 %v2398, 2147483648
    %v2409 = vxor.u32 %v2400, 2147483648
    %v2410 = vmul.f32 %v2402, 1.442695
    %v2411 = vpow.pop %v2410
    %v2412 = vmul.f32 %v2403, 1.442695
    %v2413 = vpow.pop %v2412
    %v2414 = vmul.f32 %v2404, 1.442695
    %v2415 = vpow.pop %v2414
    %v2416 = vmul.f32 %v2405, 1.442695
    %v2417 = vpow.pop %v2416
    %v2418 = vmul.f32 %v2406, 1.442695
    %v2419 = vpow.pop %v2418
    %v2420 = vmul.f32 %v2407, 1.442695
    %v2421 = vpow.pop %v2420
    %v2422 = vmul.f32 %v2408, 1.442695
    %v2423 = vpow.pop %v2422
    %v2424 = vmul.f32 %v2409, 1.442695
    %v2425 = vpow.pop %v2424
    %v2426 = vadd.f32 %v2411, 1.0
    %v2427 = vadd.f32 %v2413, 1.0
    %v2428 = vadd.f32 %v2415, 1.0
    %v2429 = vadd.f32 %v2417, 1.0
    %v2430 = vadd.f32 %v2419, 1.0
    %v2431 = vadd.f32 %v2421, 1.0
    %v2432 = vadd.f32 %v2423, 1.0
    %v2433 = vadd.f32 %v2425, 1.0
    %v2434 = vrcp.pop %v2426
    %v2435 = vmul.f32 1.0, %v2434
    %v2436 = vrcp.pop %v2427
    %v2437 = vmul.f32 1.0, %v2436
    %v2438 = vrcp.pop %v2428
    %v2439 = vmul.f32 1.0, %v2438
    %v2440 = vrcp.pop %v2429
    %v2441 = vmul.f32 1.0, %v2440
    %v2442 = vrcp.pop %v2430
    %v2443 = vmul.f32 1.0, %v2442
    %v2444 = vrcp.pop %v2431
    %v2445 = vmul.f32 1.0, %v2444
    %v2446 = vrcp.pop %v2432
    %v2447 = vmul.f32 1.0, %v2446
    %v2448 = vrcp.pop %v2433
    %v2449 = vmul.f32 1.0, %v2448
    %v2450 = vadd.f32 %v2003, %v2435
    %v2451 = vadd.f32 %v2005, %v2437
    %v2452 = vadd.f32 %v2046, %v2439
    %v2453 = vadd.f32 %v2048, %v2441
    %v2454 = vadd.f32 %v2007, %v2443
    %v2455 = vadd.f32 %v2009, %v2445
    %v2456 = vadd.f32 %v2050, %v2447
    %v2457 = vadd.f32 %v2052, %v2449
    %v2458 = vmax.f32 %v2450, 0.0
    %v2459 = vmax.f32 %v2451, 0.0
    %v2460 = vmax.f32 %v2452, 0.0
    %v2461 = vmax.f32 %v2453, 0.0
    %v2462 = vmax.f32 %v2454, 0.0
    %v2463 = vmax.f32 %v2455, 0.0
    %v2464 = vmax.f32 %v2456, 0.0
    %v2465 = vmax.f32 %v2457, 0.0
    %v2467 = vsel %vm951, %v352, 0
    %v2470 = vsel %vm951, %v353, 0
    %2472 = vmatprep.subr.mxu0 %v2459
    %2473 = vmatpush1.msra.mxu0 %v2458
    %2474 = vmatprep.subr.mxu0 %v2463
    %2475 = vmatpush1.msra.mxu0 %v2462
    %2476 = vmatprep.subr.mxu0 0.0
    %2477 = vmatpush1.msra.mxu0 0.0
    %2478 = vmatprep.subr.mxu0 0.0
    %2479 = vmatpush1.msra.mxu0 0.0
    %2480 = vmatprep.subr.mxu0 0.0
    %2481 = vmatpush1.msra.mxu0 0.0
    %2482 = vmatprep.subr.mxu0 0.0
    %2483 = vmatpush1.msra.mxu0 0.0
    %2484 = vmatprep.subr.mxu0 0.0
    %2485 = vmatpush1.msra.mxu0 0.0
    %2486 = vmatprep.subr.mxu0 0.0
    %2487 = vmatpush1.msra.mxu0 0.0
    %2488 = vmatprep.subr.mxu0 0.0
    %2489 = vmatpush1.msra.mxu0 0.0
    %2490 = vmatprep.subr.mxu0 0.0
    %2491 = vmatpush1.msra.mxu0 0.0
    %2492 = vmatprep.subr.mxu0 0.0
    %2493 = vmatpush1.msra.mxu0 0.0
    %2494 = vmatprep.subr.mxu0 0.0
    %2495 = vmatpush1.msra.mxu0 0.0
    %2496 = vmatprep.subr.mxu0 0.0
    %2497 = vmatpush1.msra.mxu0 0.0
    %2498 = vmatprep.subr.mxu0 0.0
    %2499 = vmatpush1.msra.mxu0 0.0
    %2500 = vmatprep.subr.mxu0 0.0
    %2501 = vmatpush1.msra.mxu0 0.0
    %2502 = vmatprep.subr.mxu0 0.0
    %2503 = vmatpush1.msra.mxu0 0.0
    %2504 = vmatprep.subr.mxu0 0.0
    %2505 = vmatpush1.msra.mxu0 0.0
    %2506 = vmatprep.subr.mxu0 0.0
    %2507 = vmatpush1.msra.mxu0 0.0
    %2508 = vmatprep.subr.mxu0 0.0
    %2509 = vmatpush1.msra.mxu0 0.0
    %2510 = vmatprep.subr.mxu0 0.0
    %2511 = vmatpush1.msra.mxu0 0.0
    %2512 = vmatprep.subr.mxu0 0.0
    %2513 = vmatpush1.msra.mxu0 0.0
    %2514 = vmatprep.subr.mxu0 0.0
    %2515 = vmatpush1.msra.mxu0 0.0
    %2516 = vmatprep.subr.mxu0 0.0
    %2517 = vmatpush1.msra.mxu0 0.0
    %2518 = vmatprep.subr.mxu0 0.0
    %2519 = vmatpush1.msra.mxu0 0.0
    %2520 = vmatprep.subr.mxu0 0.0
    %2521 = vmatpush1.msra.mxu0 0.0
    %2522 = vmatprep.subr.mxu0 0.0
    %2523 = vmatpush1.msra.mxu0 0.0
    %2524 = vmatprep.subr.mxu0 0.0
    %2525 = vmatpush1.msra.mxu0 0.0
    %2526 = vmatprep.subr.mxu0 0.0
    %2527 = vmatpush1.msra.mxu0 0.0
    %2528 = vmatprep.subr.mxu0 0.0
    %2529 = vmatpush1.msra.mxu0 0.0
    %2530 = vmatprep.subr.mxu0 0.0
    %2531 = vmatpush1.msra.mxu0 0.0
    %2532 = vmatprep.subr.mxu0 0.0
    %2533 = vmatpush1.msra.mxu0 0.0
    %2534 = vmatprep.subr.mxu0 0.0
    %2535 = vmatpush1.msra.mxu0 0.0
    %2536 = vmatprep.mubr.f32.mxu0 0.0
    %2537 = vmatmul.mubr.f32.gmra.mrb[0].mxu0 %v2467
    %v2538 = vpop.f32.mrb[0].mxu0
    %v2539 = vadd.f32 0.0, %v2538
    %v2540 = vpop.f32.mrb[0].mxu0
    %v2541 = vadd.f32 0.0, %v2540
    %2542 = vmatprep.mubr.f32.mxu0 0.0
    %2543 = vmatmul.mubr.f32.gmra.mrb[0].mxu0 %v2470
    %v2544 = vpop.f32.mrb[0].mxu0
    %v2545 = vadd.f32 0.0, %v2544
    %v2546 = vpop.f32.mrb[0].mxu0
    %v2547 = vadd.f32 0.0, %v2546
    %2548 = vdwg.mxu0
    %2549 = vmatprep.subr.mxu0 %v2461
    %2550 = vmatpush1.msra.mxu0 %v2460
    %2551 = vmatprep.subr.mxu0 %v2465
    %2552 = vmatpush1.msra.mxu0 %v2464
    %2553 = vmatprep.subr.mxu0 0.0
    %2554 = vmatpush1.msra.mxu0 0.0
    %2555 = vmatprep.subr.mxu0 0.0
    %2556 = vmatpush1.msra.mxu0 0.0
    %2557 = vmatprep.subr.mxu0 0.0
    %2558 = vmatpush1.msra.mxu0 0.0
    %2559 = vmatprep.subr.mxu0 0.0
    %2560 = vmatpush1.msra.mxu0 0.0
    %2561 = vmatprep.subr.mxu0 0.0
    %2562 = vmatpush1.msra.mxu0 0.0
    %2563 = vmatprep.subr.mxu0 0.0
    %2564 = vmatpush1.msra.mxu0 0.0
    %2565 = vmatprep.subr.mxu0 0.0
    %2566 = vmatpush1.msra.mxu0 0.0
    %2567 = vmatprep.subr.mxu0 0.0
    %2568 = vmatpush1.msra.mxu0 0.0
    %2569 = vmatprep.subr.mxu0 0.0
    %2570 = vmatpush1.msra.mxu0 0.0
    %2571 = vmatprep.subr.mxu0 0.0
    %2572 = vmatpush1.msra.mxu0 0.0
    %2573 = vmatprep.subr.mxu0 0.0
    %2574 = vmatpush1.msra.mxu0 0.0
    %2575 = vmatprep.subr.mxu0 0.0
    %2576 = vmatpush1.msra.mxu0 0.0
    %2577 = vmatprep.subr.mxu0 0.0
    %2578 = vmatpush1.msra.mxu0 0.0
    %2579 = vmatprep.subr.mxu0 0.0
    %2580 = vmatpush1.msra.mxu0 0.0
    %2581 = vmatprep.subr.mxu0 0.0
    %2582 = vmatpush1.msra.mxu0 0.0
    %2583 = vmatprep.subr.mxu0 0.0
    %2584 = vmatpush1.msra.mxu0 0.0
    %2585 = vmatprep.subr.mxu0 0.0
    %2586 = vmatpush1.msra.mxu0 0.0
    %2587 = vmatprep.subr.mxu0 0.0
    %2588 = vmatpush1.msra.mxu0 0.0
    %2589 = vmatprep.subr.mxu0 0.0
    %2590 = vmatpush1.msra.mxu0 0.0
    %2591 = vmatprep.subr.mxu0 0.0
    %2592 = vmatpush1.msra.mxu0 0.0
    %2593 = vmatprep.subr.mxu0 0.0
    %2594 = vmatpush1.msra.mxu0 0.0
    %2595 = vmatprep.subr.mxu0 0.0
    %2596 = vmatpush1.msra.mxu0 0.0
    %2597 = vmatprep.subr.mxu0 0.0
    %2598 = vmatpush1.msra.mxu0 0.0
    %2599 = vmatprep.subr.mxu0 0.0
    %2600 = vmatpush1.msra.mxu0 0.0
    %2601 = vmatprep.subr.mxu0 0.0
    %2602 = vmatpush1.msra.mxu0 0.0
    %2603 = vmatprep.subr.mxu0 0.0
    %2604 = vmatpush1.msra.mxu0 0.0
    %2605 = vmatprep.subr.mxu0 0.0
    %2606 = vmatpush1.msra.mxu0 0.0
    %2607 = vmatprep.subr.mxu0 0.0
    %2608 = vmatpush1.msra.mxu0 0.0
    %2609 = vmatprep.subr.mxu0 0.0
    %2610 = vmatpush1.msra.mxu0 0.0
    %2611 = vmatprep.subr.mxu0 0.0
    %2612 = vmatpush1.msra.mxu0 0.0
    %2613 = vmatprep.mubr.f32.mxu0 0.0
    %2614 = vmatmul.mubr.f32.gmra.mrb[0].mxu0 %v2467
    %v2615 = vpop.f32.mrb[0].mxu0
    %v2616 = vadd.f32 0.0, %v2615
    %v2617 = vpop.f32.mrb[0].mxu0
    %v2618 = vadd.f32 0.0, %v2617
    %2619 = vmatprep.mubr.f32.mxu0 0.0
    %2620 = vmatmul.mubr.f32.gmra.mrb[0].mxu0 %v2470
    %v2621 = vpop.f32.mrb[0].mxu0
    %v2622 = vadd.f32 0.0, %v2621
    %v2623 = vpop.f32.mrb[0].mxu0
    %v2624 = vadd.f32 0.0, %v2623
    %2625 = vdwg.mxu0
    %v2626 = vmul.f32 %v2458, %v2458
    %v2627 = vmul.f32 %v2459, %v2459
    %v2628 = vmul.f32 %v2460, %v2460
    %v2629 = vmul.f32 %v2461, %v2461
    %v2630 = vmul.f32 %v2462, %v2462
    %v2631 = vmul.f32 %v2463, %v2463
    %v2632 = vmul.f32 %v2464, %v2464
    %v2633 = vmul.f32 %v2465, %v2465
    %2634 = vmatprep.subr.mxu0 %v2627
    %2635 = vmatpush1.msra.mxu0 %v2626
    %2636 = vmatprep.subr.mxu0 %v2631
    %2637 = vmatpush1.msra.mxu0 %v2630
    %2638 = vmatprep.subr.mxu0 0.0
    %2639 = vmatpush1.msra.mxu0 0.0
    %2640 = vmatprep.subr.mxu0 0.0
    %2641 = vmatpush1.msra.mxu0 0.0
    %2642 = vmatprep.subr.mxu0 0.0
    %2643 = vmatpush1.msra.mxu0 0.0
    %2644 = vmatprep.subr.mxu0 0.0
    %2645 = vmatpush1.msra.mxu0 0.0
    %2646 = vmatprep.subr.mxu0 0.0
    %2647 = vmatpush1.msra.mxu0 0.0
    %2648 = vmatprep.subr.mxu0 0.0
    %2649 = vmatpush1.msra.mxu0 0.0
    %2650 = vmatprep.subr.mxu0 0.0
    %2651 = vmatpush1.msra.mxu0 0.0
    %2652 = vmatprep.subr.mxu0 0.0
    %2653 = vmatpush1.msra.mxu0 0.0
    %2654 = vmatprep.subr.mxu0 0.0
    %2655 = vmatpush1.msra.mxu0 0.0
    %2656 = vmatprep.subr.mxu0 0.0
    %2657 = vmatpush1.msra.mxu0 0.0
    %2658 = vmatprep.subr.mxu0 0.0
    %2659 = vmatpush1.msra.mxu0 0.0
    %2660 = vmatprep.subr.mxu0 0.0
    %2661 = vmatpush1.msra.mxu0 0.0
    %2662 = vmatprep.subr.mxu0 0.0
    %2663 = vmatpush1.msra.mxu0 0.0
    %2664 = vmatprep.subr.mxu0 0.0
    %2665 = vmatpush1.msra.mxu0 0.0
    %2666 = vmatprep.subr.mxu0 0.0
    %2667 = vmatpush1.msra.mxu0 0.0
    %2668 = vmatprep.subr.mxu0 0.0
    %2669 = vmatpush1.msra.mxu0 0.0
    %2670 = vmatprep.subr.mxu0 0.0
    %2671 = vmatpush1.msra.mxu0 0.0
    %2672 = vmatprep.subr.mxu0 0.0
    %2673 = vmatpush1.msra.mxu0 0.0
    %2674 = vmatprep.subr.mxu0 0.0
    %2675 = vmatpush1.msra.mxu0 0.0
    %2676 = vmatprep.subr.mxu0 0.0
    %2677 = vmatpush1.msra.mxu0 0.0
    %2678 = vmatprep.subr.mxu0 0.0
    %2679 = vmatpush1.msra.mxu0 0.0
    %2680 = vmatprep.subr.mxu0 0.0
    %2681 = vmatpush1.msra.mxu0 0.0
    %2682 = vmatprep.subr.mxu0 0.0
    %2683 = vmatpush1.msra.mxu0 0.0
    %2684 = vmatprep.subr.mxu0 0.0
    %2685 = vmatpush1.msra.mxu0 0.0
    %2686 = vmatprep.subr.mxu0 0.0
    %2687 = vmatpush1.msra.mxu0 0.0
    %2688 = vmatprep.subr.mxu0 0.0
    %2689 = vmatpush1.msra.mxu0 0.0
    %2690 = vmatprep.subr.mxu0 0.0
    %2691 = vmatpush1.msra.mxu0 0.0
    %2692 = vmatprep.subr.mxu0 0.0
    %2693 = vmatpush1.msra.mxu0 0.0
    %2694 = vmatprep.subr.mxu0 0.0
    %2695 = vmatpush1.msra.mxu0 0.0
    %2696 = vmatprep.subr.mxu0 0.0
    %2697 = vmatpush1.msra.mxu0 0.0
    %2698 = vmatprep.mubr.f32.mxu0 0.0
    %2699 = vmatmul.mubr.f32.gmra.mrb[0].mxu0 %v2467
    %v2700 = vpop.f32.mrb[0].mxu0
    %v2701 = vadd.f32 0.0, %v2700
    %v2702 = vpop.f32.mrb[0].mxu0
    %v2703 = vadd.f32 0.0, %v2702
    %2704 = vmatprep.mubr.f32.mxu0 0.0
    %2705 = vmatmul.mubr.f32.gmra.mrb[0].mxu0 %v2470
    %v2706 = vpop.f32.mrb[0].mxu0
    %v2707 = vadd.f32 0.0, %v2706
    %v2708 = vpop.f32.mrb[0].mxu0
    %v2709 = vadd.f32 0.0, %v2708
    %2710 = vdwg.mxu0
    %2711 = vmatprep.subr.mxu0 %v2629
    %2712 = vmatpush1.msra.mxu0 %v2628
    %2713 = vmatprep.subr.mxu0 %v2633
    %2714 = vmatpush1.msra.mxu0 %v2632
    %2715 = vmatprep.subr.mxu0 0.0
    %2716 = vmatpush1.msra.mxu0 0.0
    %2717 = vmatprep.subr.mxu0 0.0
    %2718 = vmatpush1.msra.mxu0 0.0
    %2719 = vmatprep.subr.mxu0 0.0
    %2720 = vmatpush1.msra.mxu0 0.0
    %2721 = vmatprep.subr.mxu0 0.0
    %2722 = vmatpush1.msra.mxu0 0.0
    %2723 = vmatprep.subr.mxu0 0.0
    %2724 = vmatpush1.msra.mxu0 0.0
    %2725 = vmatprep.subr.mxu0 0.0
    %2726 = vmatpush1.msra.mxu0 0.0
    %2727 = vmatprep.subr.mxu0 0.0
    %2728 = vmatpush1.msra.mxu0 0.0
    %2729 = vmatprep.subr.mxu0 0.0
    %2730 = vmatpush1.msra.mxu0 0.0
    %2731 = vmatprep.subr.mxu0 0.0
    %2732 = vmatpush1.msra.mxu0 0.0
    %2733 = vmatprep.subr.mxu0 0.0
    %2734 = vmatpush1.msra.mxu0 0.0
    %2735 = vmatprep.subr.mxu0 0.0
    %2736 = vmatpush1.msra.mxu0 0.0
    %2737 = vmatprep.subr.mxu0 0.0
    %2738 = vmatpush1.msra.mxu0 0.0
    %2739 = vmatprep.subr.mxu0 0.0
    %2740 = vmatpush1.msra.mxu0 0.0
    %2741 = vmatprep.subr.mxu0 0.0
    %2742 = vmatpush1.msra.mxu0 0.0
    %2743 = vmatprep.subr.mxu0 0.0
    %2744 = vmatpush1.msra.mxu0 0.0
    %2745 = vmatprep.subr.mxu0 0.0
    %2746 = vmatpush1.msra.mxu0 0.0
    %2747 = vmatprep.subr.mxu0 0.0
    %2748 = vmatpush1.msra.mxu0 0.0
    %2749 = vmatprep.subr.mxu0 0.0
    %2750 = vmatpush1.msra.mxu0 0.0
    %2751 = vmatprep.subr.mxu0 0.0
    %2752 = vmatpush1.msra.mxu0 0.0
    %2753 = vmatprep.subr.mxu0 0.0
    %2754 = vmatpush1.msra.mxu0 0.0
    %2755 = vmatprep.subr.mxu0 0.0
    %2756 = vmatpush1.msra.mxu0 0.0
    %2757 = vmatprep.subr.mxu0 0.0
    %2758 = vmatpush1.msra.mxu0 0.0
    %2759 = vmatprep.subr.mxu0 0.0
    %2760 = vmatpush1.msra.mxu0 0.0
    %2761 = vmatprep.subr.mxu0 0.0
    %2762 = vmatpush1.msra.mxu0 0.0
    %2763 = vmatprep.subr.mxu0 0.0
    %2764 = vmatpush1.msra.mxu0 0.0
    %2765 = vmatprep.subr.mxu0 0.0
    %2766 = vmatpush1.msra.mxu0 0.0
    %2767 = vmatprep.subr.mxu0 0.0
    %2768 = vmatpush1.msra.mxu0 0.0
    %2769 = vmatprep.subr.mxu0 0.0
    %2770 = vmatpush1.msra.mxu0 0.0
    %2771 = vmatprep.subr.mxu0 0.0
    %2772 = vmatpush1.msra.mxu0 0.0
    %2773 = vmatprep.subr.mxu0 0.0
    %2774 = vmatpush1.msra.mxu0 0.0
    %2775 = vmatprep.mubr.f32.mxu0 0.0
    %2776 = vmatmul.mubr.f32.gmra.mrb[0].mxu0 %v2467
    %v2777 = vpop.f32.mrb[0].mxu0
    %v2778 = vadd.f32 0.0, %v2777
    %v2779 = vpop.f32.mrb[0].mxu0
    %v2780 = vadd.f32 0.0, %v2779
    %2781 = vmatprep.mubr.f32.mxu0 0.0
    %2782 = vmatmul.mubr.f32.gmra.mrb[0].mxu0 %v2470
    %v2783 = vpop.f32.mrb[0].mxu0
    %v2784 = vadd.f32 0.0, %v2783
    %v2785 = vpop.f32.mrb[0].mxu0
    %v2786 = vadd.f32 0.0, %v2785
    %2787 = vdwg.mxu0
    %v2788 = vadd.f32 %v2539, %v2541
    %v2789 = vadd.f32 %v2788, %v2616
    %v2790 = vadd.f32 %v2789, %v2618
    %2791 = vadd.xlane.f32.xlu0 %v2790
    %v2792 = vpop.xlane.xlu0 %2791
    %v2793 = vadd.f32 %v2545, %v2547
    %v2794 = vadd.f32 %v2793, %v2622
    %v2795 = vadd.f32 %v2794, %v2624
    %2796 = vadd.xlane.f32.xlu0 %v2795
    %v2797 = vpop.xlane.xlu0 %2796
    %v2798 = vrcp.pop 512.0
    %v2799 = vmul.f32 %v2792, %v2798
    %v2800 = vmul.f32 %v2797, %v2798
    %v2801 = vadd.f32 %v2701, %v2703
    %v2802 = vadd.f32 %v2801, %v2778
    %v2803 = vadd.f32 %v2802, %v2780
    %2804 = vadd.xlane.f32.xlu0 %v2803
    %v2805 = vpop.xlane.xlu0 %2804
    %v2806 = vadd.f32 %v2707, %v2709
    %v2807 = vadd.f32 %v2806, %v2784
    %v2808 = vadd.f32 %v2807, %v2786
    %2809 = vadd.xlane.f32.xlu0 %v2808
    %v2810 = vpop.xlane.xlu0 %2809
    %v2811 = vmul.f32 %v2805, %v2798
    %v2812 = vmul.f32 %v2810, %v2798
    %v2813 = vmul.f32 %v2799, %v2799
    %v2814 = vmul.f32 %v2800, %v2800
    %v2815 = vsub.f32 %v2811, %v2813
    %v2816 = vsub.f32 %v2812, %v2814
    %v2817 = vmax.f32 %v2815, 0.0
    %v2818 = vmax.f32 %v2816, 0.0
    %v2819 = vsub.f32 %v2458, %v2799
    %v2820 = vsub.f32 %v2459, %v2799
    %v2821 = vsub.f32 %v2460, %v2799
    %v2822 = vsub.f32 %v2461, %v2799
    %v2823 = vsub.f32 %v2462, %v2800
    %v2824 = vsub.f32 %v2463, %v2800
    %v2825 = vsub.f32 %v2464, %v2800
    %v2826 = vsub.f32 %v2465, %v2800
    %v2827 = vadd.f32 %v2817, 1e-05
    %v2828 = vadd.f32 %v2818, 1e-05
    %v2829 = vrsqrt.pop %v2827
    %v2830 = vrsqrt.pop %v2828
    %v2831 = vmul.f32 %v2819, %v2829
    %v2832 = vmul.f32 %v2820, %v2829
    %v2833 = vmul.f32 %v2821, %v2829
    %v2834 = vmul.f32 %v2822, %v2829
    %v2835 = vmul.f32 %v2823, %v2830
    %v2836 = vmul.f32 %v2824, %v2830
    %v2837 = vmul.f32 %v2825, %v2830
    %v2838 = vmul.f32 %v2826, %v2830
    %v2839 = vld [vmem:[%s25] sm:$0xff]
    %v2840 = vld [vmem:[%s25 + $0x8] sm:$0xff]
    %2842 = vset.pattern.permute.xlu0 0
    %2843 = vperm.xlu0 %2842, %v2839
    %v2844 = vpop.permute.xlu0 %2843
    %2847 = vset.pattern.permute.xlu0 0
    %2848 = vperm.xlu0 %2847, %v2840
    %v2849 = vpop.permute.xlu0 %2848
    %v2851 = vmul.f32 %v2831, %v2844
    %v2852 = vmul.f32 %v2832, %v2844
    %v2853 = vmul.f32 %v2833, %v2844
    %v2854 = vmul.f32 %v2834, %v2844
    %v2855 = vmul.f32 %v2835, %v2849
    %v2856 = vmul.f32 %v2836, %v2849
    %v2857 = vmul.f32 %v2837, %v2849
    %v2858 = vmul.f32 %v2838, %v2849
    %v2859 = vld [vmem:[%s27] sm:$0xff]
    %v2860 = vld [vmem:[%s27 + $0x8] sm:$0xff]
    %2862 = vset.pattern.permute.xlu0 0
    %2863 = vperm.xlu0 %2862, %v2859
    %v2864 = vpop.permute.xlu0 %2863
    %2867 = vset.pattern.permute.xlu0 0
    %2868 = vperm.xlu0 %2867, %v2860
    %v2869 = vpop.permute.xlu0 %2868
    %v2871 = vadd.f32 %v2851, %v2864
    %v2872 = vadd.f32 %v2852, %v2864
    %v2873 = vadd.f32 %v2853, %v2864
    %v2874 = vadd.f32 %v2854, %v2864
    %v2875 = vadd.f32 %v2855, %v2869
    %v2876 = vadd.f32 %v2856, %v2869
    %v2877 = vadd.f32 %v2857, %v2869
    %v2878 = vadd.f32 %v2858, %v2869
    %v2879 = vpack.c.bf16 %v2875, %v2871
    %v2880 = vpack.c.bf16 %v2876, %v2872
    %v2881 = vpack.c.bf16 %v2877, %v2873
    %v2882 = vpack.c.bf16 %v2878, %v2874
    %v2883 = vld [vmem:[%s29] sm:$0xff]
    %v2884 = vld [vmem:[%s29 + $0x8] sm:$0xf]
    %v2885 = vld [vmem:[%s29 + $0xc] sm:$0xff]
    %v2886 = vld [vmem:[%s29 + $0x14] sm:$0xf]
    %v2887 = vld [vmem:[%s29 + $0x18] sm:$0xff]
    %v2888 = vld [vmem:[%s29 + $0x20] sm:$0xf]
    %v2889 = vld [vmem:[%s29 + $0x24] sm:$0xff]
    %v2890 = vld [vmem:[%s29 + $0x2c] sm:$0xf]
    %v2891 = vld [vmem:[%s29 + $0x30] sm:$0xff]
    %v2892 = vld [vmem:[%s29 + $0x38] sm:$0xf]
    %v2893 = vld [vmem:[%s29 + $0x3c] sm:$0xff]
    %v2894 = vld [vmem:[%s29 + $0x44] sm:$0xf]
    %v2895 = vld [vmem:[%s29 + $0x48] sm:$0xff]
    %v2896 = vld [vmem:[%s29 + $0x50] sm:$0xf]
    %v2897 = vld [vmem:[%s29 + $0x54] sm:$0xff]
    %v2898 = vld [vmem:[%s29 + $0x5c] sm:$0xf]
    %v2899 = vld [vmem:[%s29 + $0x60] sm:$0xff]
    %v2900 = vld [vmem:[%s29 + $0x68] sm:$0xf]
    %v2901 = vld [vmem:[%s29 + $0x6c] sm:$0xff]
    %v2902 = vld [vmem:[%s29 + $0x74] sm:$0xf]
    %v2903 = vld [vmem:[%s29 + $0x78] sm:$0xff]
    %v2904 = vld [vmem:[%s29 + $0x80] sm:$0xf]
    %v2905 = vld [vmem:[%s29 + $0x84] sm:$0xff]
    %v2906 = vld [vmem:[%s29 + $0x8c] sm:$0xf]
    %v2907 = vld [vmem:[%s29 + $0x90] sm:$0xff]
    %v2908 = vld [vmem:[%s29 + $0x98] sm:$0xf]
    %v2909 = vld [vmem:[%s29 + $0x9c] sm:$0xff]
    %v2910 = vld [vmem:[%s29 + $0xa4] sm:$0xf]
    %v2911 = vld [vmem:[%s29 + $0xa8] sm:$0xff]
    %v2912 = vld [vmem:[%s29 + $0xb0] sm:$0xf]
    %v2913 = vld [vmem:[%s29 + $0xb4] sm:$0xff]
    %v2914 = vld [vmem:[%s29 + $0xbc] sm:$0xf]
    %v2915 = vld [vmem:[%s29 + $0xc0] sm:$0xff]
    %v2916 = vld [vmem:[%s29 + $0xc8] sm:$0xf]
    %v2917 = vld [vmem:[%s29 + $0xcc] sm:$0xff]
    %v2918 = vld [vmem:[%s29 + $0xd4] sm:$0xf]
    %v2919 = vld [vmem:[%s29 + $0xd8] sm:$0xff]
    %v2920 = vld [vmem:[%s29 + $0xe0] sm:$0xf]
    %v2921 = vld [vmem:[%s29 + $0xe4] sm:$0xff]
    %v2922 = vld [vmem:[%s29 + $0xec] sm:$0xf]
    %v2923 = vld [vmem:[%s29 + $0xf0] sm:$0xff]
    %v2924 = vld [vmem:[%s29 + $0xf8] sm:$0xf]
    %v2925 = vld [vmem:[%s29 + $0xfc] sm:$0xff]
    %v2926 = vld [vmem:[%s29 + $0x104] sm:$0xf]
    %v2927 = vld [vmem:[%s29 + $0x108] sm:$0xff]
    %v2928 = vld [vmem:[%s29 + $0x110] sm:$0xf]
    %v2929 = vld [vmem:[%s29 + $0x114] sm:$0xff]
    %v2930 = vld [vmem:[%s29 + $0x11c] sm:$0xf]
    %v2931 = vld [vmem:[%s29 + $0x120] sm:$0xff]
    %v2932 = vld [vmem:[%s29 + $0x128] sm:$0xf]
    %v2933 = vld [vmem:[%s29 + $0x12c] sm:$0xff]
    %v2934 = vld [vmem:[%s29 + $0x134] sm:$0xf]
    %v2935 = vld [vmem:[%s29 + $0x138] sm:$0xff]
    %v2936 = vld [vmem:[%s29 + $0x140] sm:$0xf]
    %v2937 = vld [vmem:[%s29 + $0x144] sm:$0xff]
    %v2938 = vld [vmem:[%s29 + $0x14c] sm:$0xf]
    %v2939 = vld [vmem:[%s29 + $0x150] sm:$0xff]
    %v2940 = vld [vmem:[%s29 + $0x158] sm:$0xf]
    %v2941 = vld [vmem:[%s29 + $0x15c] sm:$0xff]
    %v2942 = vld [vmem:[%s29 + $0x164] sm:$0xf]
    %v2943 = vld [vmem:[%s29 + $0x168] sm:$0xff]
    %v2944 = vld [vmem:[%s29 + $0x170] sm:$0xf]
    %v2945 = vld [vmem:[%s29 + $0x174] sm:$0xff]
    %v2946 = vld [vmem:[%s29 + $0x17c] sm:$0xf]
    %v2947 = vld [vmem:[%s29 + $0x180] sm:$0xff]
    %v2948 = vld [vmem:[%s29 + $0x188] sm:$0xf]
    %v2949 = vld [vmem:[%s29 + $0x18c] sm:$0xff]
    %v2950 = vld [vmem:[%s29 + $0x194] sm:$0xf]
    %v2951 = vld [vmem:[%s29 + $0x198] sm:$0xff]
    %v2952 = vld [vmem:[%s29 + $0x1a0] sm:$0xf]
    %v2953 = vld [vmem:[%s29 + $0x1a4] sm:$0xff]
    %v2954 = vld [vmem:[%s29 + $0x1ac] sm:$0xf]
    %v2955 = vld [vmem:[%s29 + $0x1b0] sm:$0xff]
    %v2956 = vld [vmem:[%s29 + $0x1b8] sm:$0xf]
    %v2957 = vld [vmem:[%s29 + $0x1bc] sm:$0xff]
    %v2958 = vld [vmem:[%s29 + $0x1c4] sm:$0xf]
    %v2959 = vld [vmem:[%s29 + $0x1c8] sm:$0xff]
    %v2960 = vld [vmem:[%s29 + $0x1d0] sm:$0xf]
    %v2961 = vld [vmem:[%s29 + $0x1d4] sm:$0xff]
    %v2962 = vld [vmem:[%s29 + $0x1dc] sm:$0xf]
    %v2963 = vld [vmem:[%s29 + $0x1e0] sm:$0xff]
    %v2964 = vld [vmem:[%s29 + $0x1e8] sm:$0xf]
    %v2965 = vld [vmem:[%s29 + $0x1ec] sm:$0xff]
    %v2966 = vld [vmem:[%s29 + $0x1f4] sm:$0xf]
    %v2967 = vld [vmem:[%s29 + $0x1f8] sm:$0xff]
    %v2968 = vld [vmem:[%s29 + $0x200] sm:$0xf]
    %v2969 = vld [vmem:[%s29 + $0x204] sm:$0xff]
    %v2970 = vld [vmem:[%s29 + $0x20c] sm:$0xf]
    %v2971 = vld [vmem:[%s29 + $0x210] sm:$0xff]
    %v2972 = vld [vmem:[%s29 + $0x218] sm:$0xf]
    %v2973 = vld [vmem:[%s29 + $0x21c] sm:$0xff]
    %v2974 = vld [vmem:[%s29 + $0x224] sm:$0xf]
    %v2975 = vld [vmem:[%s29 + $0x228] sm:$0xff]
    %v2976 = vld [vmem:[%s29 + $0x230] sm:$0xf]
    %v2977 = vld [vmem:[%s29 + $0x234] sm:$0xff]
    %v2978 = vld [vmem:[%s29 + $0x23c] sm:$0xf]
    %v2979 = vld [vmem:[%s29 + $0x240] sm:$0xff]
    %v2980 = vld [vmem:[%s29 + $0x248] sm:$0xf]
    %v2981 = vld [vmem:[%s29 + $0x24c] sm:$0xff]
    %v2982 = vld [vmem:[%s29 + $0x254] sm:$0xf]
    %v2983 = vld [vmem:[%s29 + $0x258] sm:$0xff]
    %v2984 = vld [vmem:[%s29 + $0x260] sm:$0xf]
    %v2985 = vld [vmem:[%s29 + $0x264] sm:$0xff]
    %v2986 = vld [vmem:[%s29 + $0x26c] sm:$0xf]
    %v2987 = vld [vmem:[%s29 + $0x270] sm:$0xff]
    %v2988 = vld [vmem:[%s29 + $0x278] sm:$0xf]
    %v2989 = vld [vmem:[%s29 + $0x27c] sm:$0xff]
    %v2990 = vld [vmem:[%s29 + $0x284] sm:$0xf]
    %v2991 = vld [vmem:[%s29 + $0x288] sm:$0xff]
    %v2992 = vld [vmem:[%s29 + $0x290] sm:$0xf]
    %v2993 = vld [vmem:[%s29 + $0x294] sm:$0xff]
    %v2994 = vld [vmem:[%s29 + $0x29c] sm:$0xf]
    %v2995 = vld [vmem:[%s29 + $0x2a0] sm:$0xff]
    %v2996 = vld [vmem:[%s29 + $0x2a8] sm:$0xf]
    %v2997 = vld [vmem:[%s29 + $0x2ac] sm:$0xff]
    %v2998 = vld [vmem:[%s29 + $0x2b4] sm:$0xf]
    %v2999 = vld [vmem:[%s29 + $0x2b8] sm:$0xff]
    %v3000 = vld [vmem:[%s29 + $0x2c0] sm:$0xf]
    %v3001 = vld [vmem:[%s29 + $0x2c4] sm:$0xff]
    %v3002 = vld [vmem:[%s29 + $0x2cc] sm:$0xf]
    %v3003 = vld [vmem:[%s29 + $0x2d0] sm:$0xff]
    %v3004 = vld [vmem:[%s29 + $0x2d8] sm:$0xf]
    %v3005 = vld [vmem:[%s29 + $0x2dc] sm:$0xff]
    %v3006 = vld [vmem:[%s29 + $0x2e4] sm:$0xf]
    %v3007 = vld [vmem:[%s29 + $0x2e8] sm:$0xff]
    %v3008 = vld [vmem:[%s29 + $0x2f0] sm:$0xf]
    %v3009 = vld [vmem:[%s29 + $0x2f4] sm:$0xff]
    %v3010 = vld [vmem:[%s29 + $0x2fc] sm:$0xf]
    %v3011 = vld [vmem:[#allocation19] sm:$0x7]
    %v3013 = vlaneseq
    %v3014 = vshrl.u32 %v3013, 7
    %v3015 = vsub.s32 0, %v3014
    %v3016 = vrot.slane %v3011, %v3015
    %v3017 = vlaneseq
    %v3018 = vshrl.u32 %v3017, 7
    %v3019 = vsub.s32 1, %v3018
    %v3020 = vrot.slane %v3011, %v3019
    %v3021 = vlaneseq
    %v3022 = vshrl.u32 %v3021, 7
    %v3023 = vsub.s32 2, %v3022
    %v3024 = vrot.slane %v3011, %v3023
    %v3156 = vunpack.c.l.b16 %v2883
    %v3157 = vunpack.c.h.b16 %v2883
    %v3158 = vunpack.c.l.b16 %v2884
    %v3159 = vunpack.c.l.b16 %v2885
    %v3160 = vunpack.c.h.b16 %v2885
    %v3161 = vunpack.c.l.b16 %v2886
    %v3162 = vunpack.c.l.b16 %v2887
    %v3163 = vunpack.c.h.b16 %v2887
    %v3164 = vunpack.c.l.b16 %v2888
    %v3165 = vunpack.c.l.b16 %v2889
    %v3166 = vunpack.c.h.b16 %v2889
    %v3167 = vunpack.c.l.b16 %v2890
    %v3168 = vunpack.c.l.b16 %v2891
    %v3169 = vunpack.c.h.b16 %v2891
    %v3170 = vunpack.c.l.b16 %v2892
    %v3171 = vunpack.c.l.b16 %v2893
    %v3172 = vunpack.c.h.b16 %v2893
    %v3173 = vunpack.c.l.b16 %v2894
    %v3174 = vunpack.c.l.b16 %v2895
    %v3175 = vunpack.c.h.b16 %v2895
    %v3176 = vunpack.c.l.b16 %v2896
    %v3177 = vunpack.c.l.b16 %v2897
    %v3178 = vunpack.c.h.b16 %v2897
    %v3179 = vunpack.c.l.b16 %v2898
    %v3180 = vunpack.c.l.b16 %v2899
    %v3181 = vunpack.c.h.b16 %v2899
    %v3182 = vunpack.c.l.b16 %v2900
    %v3183 = vunpack.c.l.b16 %v2901
    %v3184 = vunpack.c.h.b16 %v2901
    %v3185 = vunpack.c.l.b16 %v2902
    %v3186 = vunpack.c.l.b16 %v2903
    %v3187 = vunpack.c.h.b16 %v2903
    %v3188 = vunpack.c.l.b16 %v2904
    %v3189 = vunpack.c.l.b16 %v2905
    %v3190 = vunpack.c.h.b16 %v2905
    %v3191 = vunpack.c.l.b16 %v2906
    %v3192 = vunpack.c.l.b16 %v2907
    %v3193 = vunpack.c.h.b16 %v2907
    %v3194 = vunpack.c.l.b16 %v2908
    %v3195 = vunpack.c.l.b16 %v2909
    %v3196 = vunpack.c.h.b16 %v2909
    %v3197 = vunpack.c.l.b16 %v2910
    %v3198 = vunpack.c.l.b16 %v2911
    %v3199 = vunpack.c.h.b16 %v2911
    %v3200 = vunpack.c.l.b16 %v2912
    %v3201 = vunpack.c.l.b16 %v2913
    %v3202 = vunpack.c.h.b16 %v2913
    %v3203 = vunpack.c.l.b16 %v2914
    %v3204 = vunpack.c.l.b16 %v2915
    %v3205 = vunpack.c.h.b16 %v2915
    %v3206 = vunpack.c.l.b16 %v2916
    %v3207 = vunpack.c.l.b16 %v2917
    %v3208 = vunpack.c.h.b16 %v2917
    %v3209 = vunpack.c.l.b16 %v2918
    %v3210 = vunpack.c.l.b16 %v2919
    %v3211 = vunpack.c.h.b16 %v2919
    %v3212 = vunpack.c.l.b16 %v2920
    %v3213 = vunpack.c.l.b16 %v2921
    %v3214 = vunpack.c.h.b16 %v2921
    %v3215 = vunpack.c.l.b16 %v2922
    %v3216 = vunpack.c.l.b16 %v2923
    %v3217 = vunpack.c.h.b16 %v2923
    %v3218 = vunpack.c.l.b16 %v2924
    %v3219 = vunpack.c.l.b16 %v2925
    %v3220 = vunpack.c.h.b16 %v2925
    %v3221 = vunpack.c.l.b16 %v2926
    %v3222 = vunpack.c.l.b16 %v2927
    %v3223 = vunpack.c.h.b16 %v2927
    %v3224 = vunpack.c.l.b16 %v2928
    %v3225 = vunpack.c.l.b16 %v2929
    %v3226 = vunpack.c.h.b16 %v2929
    %v3227 = vunpack.c.l.b16 %v2930
    %v3228 = vunpack.c.l.b16 %v2931
    %v3229 = vunpack.c.h.b16 %v2931
    %v3230 = vunpack.c.l.b16 %v2932
    %v3231 = vunpack.c.l.b16 %v2933
    %v3232 = vunpack.c.h.b16 %v2933
    %v3233 = vunpack.c.l.b16 %v2934
    %v3234 = vunpack.c.l.b16 %v2935
    %v3235 = vunpack.c.h.b16 %v2935
    %v3236 = vunpack.c.l.b16 %v2936
    %v3237 = vunpack.c.l.b16 %v2937
    %v3238 = vunpack.c.h.b16 %v2937
    %v3239 = vunpack.c.l.b16 %v2938
    %v3240 = vunpack.c.l.b16 %v2939
    %v3241 = vunpack.c.h.b16 %v2939
    %v3242 = vunpack.c.l.b16 %v2940
    %v3243 = vunpack.c.l.b16 %v2941
    %v3244 = vunpack.c.h.b16 %v2941
    %v3245 = vunpack.c.l.b16 %v2942
    %v3246 = vunpack.c.l.b16 %v2943
    %v3247 = vunpack.c.h.b16 %v2943
    %v3248 = vunpack.c.l.b16 %v2944
    %v3249 = vunpack.c.l.b16 %v2945
    %v3250 = vunpack.c.h.b16 %v2945
    %v3251 = vunpack.c.l.b16 %v2946
    %v3252 = vunpack.c.l.b16 %v2947
    %v3253 = vunpack.c.h.b16 %v2947
    %v3254 = vunpack.c.l.b16 %v2948
    %v3255 = vunpack.c.l.b16 %v2949
    %v3256 = vunpack.c.h.b16 %v2949
    %v3257 = vunpack.c.l.b16 %v2950
    %v3258 = vunpack.c.l.b16 %v2951
    %v3259 = vunpack.c.h.b16 %v2951
    %v3260 = vunpack.c.l.b16 %v2952
    %v3261 = vunpack.c.l.b16 %v2953
    %v3262 = vunpack.c.h.b16 %v2953
    %v3263 = vunpack.c.l.b16 %v2954
    %v3264 = vunpack.c.l.b16 %v2955
    %v3265 = vunpack.c.h.b16 %v2955
    %v3266 = vunpack.c.l.b16 %v2956
    %v3267 = vunpack.c.l.b16 %v2957
    %v3268 = vunpack.c.h.b16 %v2957
    %v3269 = vunpack.c.l.b16 %v2958
    %v3270 = vunpack.c.l.b16 %v2959
    %v3271 = vunpack.c.h.b16 %v2959
    %v3272 = vunpack.c.l.b16 %v2960
    %v3273 = vunpack.c.l.b16 %v2961
    %v3274 = vunpack.c.h.b16 %v2961
    %v3275 = vunpack.c.l.b16 %v2962
    %v3276 = vunpack.c.l.b16 %v2963
    %v3277 = vunpack.c.h.b16 %v2963
    %v3278 = vunpack.c.l.b16 %v2964
    %v3279 = vunpack.c.l.b16 %v2965
    %v3280 = vunpack.c.h.b16 %v2965
    %v3281 = vunpack.c.l.b16 %v2966
    %v3282 = vunpack.c.l.b16 %v2967
    %v3283 = vunpack.c.h.b16 %v2967
    %v3284 = vunpack.c.l.b16 %v2968
    %v3285 = vunpack.c.l.b16 %v2969
    %v3286 = vunpack.c.h.b16 %v2969
    %v3287 = vunpack.c.l.b16 %v2970
    %v3288 = vunpack.c.l.b16 %v2971
    %v3289 = vunpack.c.h.b16 %v2971
    %v3290 = vunpack.c.l.b16 %v2972
    %v3291 = vunpack.c.l.b16 %v2973
    %v3292 = vunpack.c.h.b16 %v2973
    %v3293 = vunpack.c.l.b16 %v2974
    %v3294 = vunpack.c.l.b16 %v2975
    %v3295 = vunpack.c.h.b16 %v2975
    %v3296 = vunpack.c.l.b16 %v2976
    %v3297 = vunpack.c.l.b16 %v2977
    %v3298 = vunpack.c.h.b16 %v2977
    %v3299 = vunpack.c.l.b16 %v2978
    %v3300 = vunpack.c.l.b16 %v2979
    %v3301 = vunpack.c.h.b16 %v2979
    %v3302 = vunpack.c.l.b16 %v2980
    %v3303 = vunpack.c.l.b16 %v2981
    %v3304 = vunpack.c.h.b16 %v2981
    %v3305 = vunpack.c.l.b16 %v2982
    %v3306 = vunpack.c.l.b16 %v2983
    %v3307 = vunpack.c.h.b16 %v2983
    %v3308 = vunpack.c.l.b16 %v2984
    %v3309 = vunpack.c.l.b16 %v2985
    %v3310 = vunpack.c.h.b16 %v2985
    %v3311 = vunpack.c.l.b16 %v2986
    %v3312 = vunpack.c.l.b16 %v2987
    %v3313 = vunpack.c.h.b16 %v2987
    %v3314 = vunpack.c.l.b16 %v2988
    %v3315 = vunpack.c.l.b16 %v2989
    %v3316 = vunpack.c.h.b16 %v2989
    %v3317 = vunpack.c.l.b16 %v2990
    %v3318 = vunpack.c.l.b16 %v2991
    %v3319 = vunpack.c.h.b16 %v2991
    %v3320 = vunpack.c.l.b16 %v2992
    %v3321 = vunpack.c.l.b16 %v2993
    %v3322 = vunpack.c.h.b16 %v2993
    %v3323 = vunpack.c.l.b16 %v2994
    %v3324 = vunpack.c.l.b16 %v2995
    %v3325 = vunpack.c.h.b16 %v2995
    %v3326 = vunpack.c.l.b16 %v2996
    %v3327 = vunpack.c.l.b16 %v2997
    %v3328 = vunpack.c.h.b16 %v2997
    %v3329 = vunpack.c.l.b16 %v2998
    %v3330 = vunpack.c.l.b16 %v2999
    %v3331 = vunpack.c.h.b16 %v2999
    %v3332 = vunpack.c.l.b16 %v3000
    %v3333 = vunpack.c.l.b16 %v3001
    %v3334 = vunpack.c.h.b16 %v3001
    %v3335 = vunpack.c.l.b16 %v3002
    %v3336 = vunpack.c.l.b16 %v3003
    %v3337 = vunpack.c.h.b16 %v3003
    %v3338 = vunpack.c.l.b16 %v3004
    %v3339 = vunpack.c.l.b16 %v3005
    %v3340 = vunpack.c.h.b16 %v3005
    %v3341 = vunpack.c.l.b16 %v3006
    %v3342 = vunpack.c.l.b16 %v3007
    %v3343 = vunpack.c.h.b16 %v3007
    %v3344 = vunpack.c.l.b16 %v3008
    %v3345 = vunpack.c.l.b16 %v3009
    %v3346 = vunpack.c.h.b16 %v3009
    %v3347 = vunpack.c.l.b16 %v3010
    %v3348 = vpack.c.b16 %v3159, %v3156
    %v3349 = vpack.c.b16 %v3160, %v3157
    %v3350 = vpack.c.b16 %v3161, %v3158
    %v3351 = vpack.c.b16 %v3165, %v3162
    %v3352 = vpack.c.b16 %v3166, %v3163
    %v3353 = vpack.c.b16 %v3167, %v3164
    %v3354 = vpack.c.b16 %v3171, %v3168
    %v3355 = vpack.c.b16 %v3172, %v3169
    %v3356 = vpack.c.b16 %v3173, %v3170
    %v3357 = vpack.c.b16 %v3177, %v3174
    %v3358 = vpack.c.b16 %v3178, %v3175
    %v3359 = vpack.c.b16 %v3179, %v3176
    %v3360 = vpack.c.b16 %v3183, %v3180
    %v3361 = vpack.c.b16 %v3184, %v3181
    %v3362 = vpack.c.b16 %v3185, %v3182
    %v3363 = vpack.c.b16 %v3189, %v3186
    %v3364 = vpack.c.b16 %v3190, %v3187
    %v3365 = vpack.c.b16 %v3191, %v3188
    %v3366 = vpack.c.b16 %v3195, %v3192
    %v3367 = vpack.c.b16 %v3196, %v3193
    %v3368 = vpack.c.b16 %v3197, %v3194
    %v3369 = vpack.c.b16 %v3201, %v3198
    %v3370 = vpack.c.b16 %v3202, %v3199
    %v3371 = vpack.c.b16 %v3203, %v3200
    %v3372 = vpack.c.b16 %v3207, %v3204
    %v3373 = vpack.c.b16 %v3208, %v3205
    %v3374 = vpack.c.b16 %v3209, %v3206
    %v3375 = vpack.c.b16 %v3213, %v3210
    %v3376 = vpack.c.b16 %v3214, %v3211
    %v3377 = vpack.c.b16 %v3215, %v3212
    %v3378 = vpack.c.b16 %v3219, %v3216
    %v3379 = vpack.c.b16 %v3220, %v3217
    %v3380 = vpack.c.b16 %v3221, %v3218
    %v3381 = vpack.c.b16 %v3225, %v3222
    %v3382 = vpack.c.b16 %v3226, %v3223
    %v3383 = vpack.c.b16 %v3227, %v3224
    %v3384 = vpack.c.b16 %v3231, %v3228
    %v3385 = vpack.c.b16 %v3232, %v3229
    %v3386 = vpack.c.b16 %v3233, %v3230
    %v3387 = vpack.c.b16 %v3237, %v3234
    %v3388 = vpack.c.b16 %v3238, %v3235
    %v3389 = vpack.c.b16 %v3239, %v3236
    %v3390 = vpack.c.b16 %v3243, %v3240
    %v3391 = vpack.c.b16 %v3244, %v3241
    %v3392 = vpack.c.b16 %v3245, %v3242
    %v3393 = vpack.c.b16 %v3249, %v3246
    %v3394 = vpack.c.b16 %v3250, %v3247
    %v3395 = vpack.c.b16 %v3251, %v3248
    %v3396 = vpack.c.b16 %v3255, %v3252
    %v3397 = vpack.c.b16 %v3256, %v3253
    %v3398 = vpack.c.b16 %v3257, %v3254
    %v3399 = vpack.c.b16 %v3261, %v3258
    %v3400 = vpack.c.b16 %v3262, %v3259
    %v3401 = vpack.c.b16 %v3263, %v3260
    %v3402 = vpack.c.b16 %v3267, %v3264
    %v3403 = vpack.c.b16 %v3268, %v3265
    %v3404 = vpack.c.b16 %v3269, %v3266
    %v3405 = vpack.c.b16 %v3273, %v3270
    %v3406 = vpack.c.b16 %v3274, %v3271
    %v3407 = vpack.c.b16 %v3275, %v3272
    %v3408 = vpack.c.b16 %v3279, %v3276
    %v3409 = vpack.c.b16 %v3280, %v3277
    %v3410 = vpack.c.b16 %v3281, %v3278
    %v3411 = vpack.c.b16 %v3285, %v3282
    %v3412 = vpack.c.b16 %v3286, %v3283
    %v3413 = vpack.c.b16 %v3287, %v3284
    %v3414 = vpack.c.b16 %v3291, %v3288
    %v3415 = vpack.c.b16 %v3292, %v3289
    %v3416 = vpack.c.b16 %v3293, %v3290
    %v3417 = vpack.c.b16 %v3297, %v3294
    %v3418 = vpack.c.b16 %v3298, %v3295
    %v3419 = vpack.c.b16 %v3299, %v3296
    %v3420 = vpack.c.b16 %v3303, %v3300
    %v3421 = vpack.c.b16 %v3304, %v3301
    %v3422 = vpack.c.b16 %v3305, %v3302
    %v3423 = vpack.c.b16 %v3309, %v3306
    %v3424 = vpack.c.b16 %v3310, %v3307
    %v3425 = vpack.c.b16 %v3311, %v3308
    %v3426 = vpack.c.b16 %v3315, %v3312
    %v3427 = vpack.c.b16 %v3316, %v3313
    %v3428 = vpack.c.b16 %v3317, %v3314
    %v3429 = vpack.c.b16 %v3321, %v3318
    %v3430 = vpack.c.b16 %v3322, %v3319
    %v3431 = vpack.c.b16 %v3323, %v3320
    %v3432 = vpack.c.b16 %v3327, %v3324
    %v3433 = vpack.c.b16 %v3328, %v3325
    %v3434 = vpack.c.b16 %v3329, %v3326
    %v3435 = vpack.c.b16 %v3333, %v3330
    %v3436 = vpack.c.b16 %v3334, %v3331
    %v3437 = vpack.c.b16 %v3335, %v3332
    %v3438 = vpack.c.b16 %v3339, %v3336
    %v3439 = vpack.c.b16 %v3340, %v3337
    %v3440 = vpack.c.b16 %v3341, %v3338
    %v3441 = vpack.c.b16 %v3345, %v3342
    %v3442 = vpack.c.b16 %v3346, %v3343
    %v3443 = vpack.c.b16 %v3347, %v3344
    %3540 = vmatprep.subr.bf16.mxu0 %v3349
    %3541 = vmatpush1.bf16.msra.mxu0 %v3348
    %3542 = vmatprep.subr.bf16.mxu0 %v3352
    %3543 = vmatpush1.bf16.msra.mxu0 %v3351
    %3544 = vmatprep.subr.bf16.mxu0 %v3355
    %3545 = vmatpush1.bf16.msra.mxu0 %v3354
    %3546 = vmatprep.subr.bf16.mxu0 %v3358
    %3547 = vmatpush1.bf16.msra.mxu0 %v3357
    %3548 = vmatprep.subr.bf16.mxu0 %v3361
    %3549 = vmatpush1.bf16.msra.mxu0 %v3360
    %3550 = vmatprep.subr.bf16.mxu0 %v3364
    %3551 = vmatpush1.bf16.msra.mxu0 %v3363
    %3552 = vmatprep.subr.bf16.mxu0 %v3367
    %3553 = vmatpush1.bf16.msra.mxu0 %v3366
    %3554 = vmatprep.subr.bf16.mxu0 %v3370
    %3555 = vmatpush1.bf16.msra.mxu0 %v3369
    %3556 = vmatprep.subr.bf16.mxu0 %v3373
    %3557 = vmatpush1.bf16.msra.mxu0 %v3372
    %3558 = vmatprep.subr.bf16.mxu0 %v3376
    %3559 = vmatpush1.bf16.msra.mxu0 %v3375
    %3560 = vmatprep.subr.bf16.mxu0 %v3379
    %3561 = vmatpush1.bf16.msra.mxu0 %v3378
    %3562 = vmatprep.subr.bf16.mxu0 %v3382
    %3563 = vmatpush1.bf16.msra.mxu0 %v3381
    %3564 = vmatprep.subr.bf16.mxu0 %v3385
    %3565 = vmatpush1.bf16.msra.mxu0 %v3384
    %3566 = vmatprep.subr.bf16.mxu0 %v3388
    %3567 = vmatpush1.bf16.msra.mxu0 %v3387
    %3568 = vmatprep.subr.bf16.mxu0 %v3391
    %3569 = vmatpush1.bf16.msra.mxu0 %v3390
    %3570 = vmatprep.subr.bf16.mxu0 %v3394
    %3571 = vmatpush1.bf16.msra.mxu0 %v3393
    %3572 = vmatprep.mubr.bf16.mxu0 %v2880
    %3573 = vmatmul.mubr.bf16.gmra.mrb[0].mxu0 %v2879
    %v3574 = vpop.f32.mrb[0].mxu0
    %v3575 = vadd.f32 %v3016, %v3574
    %v3576 = vpop.f32.mrb[0].mxu0
    %v3577 = vadd.f32 %v3020, %v3576
    %v3578 = vpop.f32.mrb[0].mxu0
    %v3579 = vadd.f32 %v3016, %v3578
    %v3580 = vpop.f32.mrb[0].mxu0
    %v3581 = vadd.f32 %v3020, %v3580
    %3582 = vdwg.mxu0
    %3583 = vmatprep.subr.bf16.mxu0 %v3397
    %3584 = vmatpush1.bf16.msra.mxu0 %v3396
    %3585 = vmatprep.subr.bf16.mxu0 %v3400
    %3586 = vmatpush1.bf16.msra.mxu0 %v3399
    %3587 = vmatprep.subr.bf16.mxu0 %v3403
    %3588 = vmatpush1.bf16.msra.mxu0 %v3402
    %3589 = vmatprep.subr.bf16.mxu0 %v3406
    %3590 = vmatpush1.bf16.msra.mxu0 %v3405
    %3591 = vmatprep.subr.bf16.mxu0 %v3409
    %3592 = vmatpush1.bf16.msra.mxu0 %v3408
    %3593 = vmatprep.subr.bf16.mxu0 %v3412
    %3594 = vmatpush1.bf16.msra.mxu0 %v3411
    %3595 = vmatprep.subr.bf16.mxu0 %v3415
    %3596 = vmatpush1.bf16.msra.mxu0 %v3414
    %3597 = vmatprep.subr.bf16.mxu0 %v3418
    %3598 = vmatpush1.bf16.msra.mxu0 %v3417
    %3599 = vmatprep.subr.bf16.mxu0 %v3421
    %3600 = vmatpush1.bf16.msra.mxu0 %v3420
    %3601 = vmatprep.subr.bf16.mxu0 %v3424
    %3602 = vmatpush1.bf16.msra.mxu0 %v3423
    %3603 = vmatprep.subr.bf16.mxu0 %v3427
    %3604 = vmatpush1.bf16.msra.mxu0 %v3426
    %3605 = vmatprep.subr.bf16.mxu0 %v3430
    %3606 = vmatpush1.bf16.msra.mxu0 %v3429
    %3607 = vmatprep.subr.bf16.mxu0 %v3433
    %3608 = vmatpush1.bf16.msra.mxu0 %v3432
    %3609 = vmatprep.subr.bf16.mxu0 %v3436
    %3610 = vmatpush1.bf16.msra.mxu0 %v3435
    %3611 = vmatprep.subr.bf16.mxu0 %v3439
    %3612 = vmatpush1.bf16.msra.mxu0 %v3438
    %3613 = vmatprep.subr.bf16.mxu0 %v3442
    %3614 = vmatpush1.bf16.msra.mxu0 %v3441
    %3615 = vmatprep.mubr.bf16.mxu0 %v2882
    %3616 = vmatmul.mubr.bf16.gmra.mrb[0].mxu0 %v2881
    %v3617 = vpop.f32.mrb[0].mxu0
    %v3618 = vadd.f32 %v3575, %v3617
    %v3619 = vpop.f32.mrb[0].mxu0
    %v3620 = vadd.f32 %v3577, %v3619
    %v3621 = vpop.f32.mrb[0].mxu0
    %v3622 = vadd.f32 %v3579, %v3621
    %v3623 = vpop.f32.mrb[0].mxu0
    %v3624 = vadd.f32 %v3581, %v3623
    %3625 = vdwg.mxu0
    %3626 = vmatprep.subr.bf16.mxu0 0
    %3627 = vmatpush1.bf16.msra.mxu0 %v3350
    %3628 = vmatprep.subr.bf16.mxu0 0
    %3629 = vmatpush1.bf16.msra.mxu0 %v3353
    %3630 = vmatprep.subr.bf16.mxu0 0
    %3631 = vmatpush1.bf16.msra.mxu0 %v3356
    %3632 = vmatprep.subr.bf16.mxu0 0
    %3633 = vmatpush1.bf16.msra.mxu0 %v3359
    %3634 = vmatprep.subr.bf16.mxu0 0
    %3635 = vmatpush1.bf16.msra.mxu0 %v3362
    %3636 = vmatprep.subr.bf16.mxu0 0
    %3637 = vmatpush1.bf16.msra.mxu0 %v3365
    %3638 = vmatprep.subr.bf16.mxu0 0
    %3639 = vmatpush1.bf16.msra.mxu0 %v3368
    %3640 = vmatprep.subr.bf16.mxu0 0
    %3641 = vmatpush1.bf16.msra.mxu0 %v3371
    %3642 = vmatprep.subr.bf16.mxu0 0
    %3643 = vmatpush1.bf16.msra.mxu0 %v3374
    %3644 = vmatprep.subr.bf16.mxu0 0
    %3645 = vmatpush1.bf16.msra.mxu0 %v3377
    %3646 = vmatprep.subr.bf16.mxu0 0
    %3647 = vmatpush1.bf16.msra.mxu0 %v3380
    %3648 = vmatprep.subr.bf16.mxu0 0
    %3649 = vmatpush1.bf16.msra.mxu0 %v3383
    %3650 = vmatprep.subr.bf16.mxu0 0
    %3651 = vmatpush1.bf16.msra.mxu0 %v3386
    %3652 = vmatprep.subr.bf16.mxu0 0
    %3653 = vmatpush1.bf16.msra.mxu0 %v3389
    %3654 = vmatprep.subr.bf16.mxu0 0
    %3655 = vmatpush1.bf16.msra.mxu0 %v3392
    %3656 = vmatprep.subr.bf16.mxu0 0
    %3657 = vmatpush1.bf16.msra.mxu0 %v3395
    %3658 = vmatprep.mubr.bf16.mxu0 %v2880
    %3659 = vmatmul.mubr.bf16.gmra.mrb[0].mxu0 %v2879
    %v3660 = vpop.f32.mrb[0].mxu0
    %v3661 = vadd.f32 %v3024, %v3660
    %v3662 = vpop.f32.mrb[0].mxu0
    %v3663 = vpop.f32.mrb[0].mxu0
    %v3664 = vadd.f32 %v3024, %v3663
    %v3665 = vpop.f32.mrb[0].mxu0
    %3666 = vdwg.mxu0
    %3667 = vmatprep.subr.bf16.mxu0 0
    %3668 = vmatpush1.bf16.msra.mxu0 %v3398
    %3669 = vmatprep.subr.bf16.mxu0 0
    %3670 = vmatpush1.bf16.msra.mxu0 %v3401
    %3671 = vmatprep.subr.bf16.mxu0 0
    %3672 = vmatpush1.bf16.msra.mxu0 %v3404
    %3673 = vmatprep.subr.bf16.mxu0 0
    %3674 = vmatpush1.bf16.msra.mxu0 %v3407
    %3675 = vmatprep.subr.bf16.mxu0 0
    %3676 = vmatpush1.bf16.msra.mxu0 %v3410
    %3677 = vmatprep.subr.bf16.mxu0 0
    %3678 = vmatpush1.bf16.msra.mxu0 %v3413
    %3679 = vmatprep.subr.bf16.mxu0 0
    %3680 = vmatpush1.bf16.msra.mxu0 %v3416
    %3681 = vmatprep.subr.bf16.mxu0 0
    %3682 = vmatpush1.bf16.msra.mxu0 %v3419
    %3683 = vmatprep.subr.bf16.mxu0 0
    %3684 = vmatpush1.bf16.msra.mxu0 %v3422
    %3685 = vmatprep.subr.bf16.mxu0 0
    %3686 = vmatpush1.bf16.msra.mxu0 %v3425
    %3687 = vmatprep.subr.bf16.mxu0 0
    %3688 = vmatpush1.bf16.msra.mxu0 %v3428
    %3689 = vmatprep.subr.bf16.mxu0 0
    %3690 = vmatpush1.bf16.msra.mxu0 %v3431
    %3691 = vmatprep.subr.bf16.mxu0 0
    %3692 = vmatpush1.bf16.msra.mxu0 %v3434
    %3693 = vmatprep.subr.bf16.mxu0 0
    %3694 = vmatpush1.bf16.msra.mxu0 %v3437
    %3695 = vmatprep.subr.bf16.mxu0 0
    %3696 = vmatpush1.bf16.msra.mxu0 %v3440
    %3697 = vmatprep.subr.bf16.mxu0 0
    %3698 = vmatpush1.bf16.msra.mxu0 %v3443
    %3699 = vmatprep.mubr.bf16.mxu0 %v2882
    %3700 = vmatmul.mubr.bf16.gmra.mrb[0].mxu0 %v2881
    %v3701 = vpop.f32.mrb[0].mxu0
    %v3702 = vadd.f32 %v3661, %v3701
    %v3703 = vpop.f32.mrb[0].mxu0
    %v3704 = vpop.f32.mrb[0].mxu0
    %v3705 = vadd.f32 %v3664, %v3704
    %v3706 = vpop.f32.mrb[0].mxu0
    %3707 = vdwg.mxu0
    %v3708 = vld [vmem:[#allocation17] sm:$0xff]
    %v3709 = vld [vmem:[#allocation17 + $0x8] sm:$0xf]
    %v3710 = vld [vmem:[#allocation17 + $0xc] sm:$0xff]
    %v3711 = vld [vmem:[#allocation17 + $0x14] sm:$0xf]
    %v3712 = vld [vmem:[#allocation17 + $0x18] sm:$0xff]
    %v3713 = vld [vmem:[#allocation17 + $0x20] sm:$0xf]
    %v3714 = vld [vmem:[#allocation17 + $0x24] sm:$0xff]
    %v3715 = vld [vmem:[#allocation17 + $0x2c] sm:$0xf]
    %v3716 = vld [vmem:[#allocation17 + $0x30] sm:$0xff]
    %v3717 = vld [vmem:[#allocation17 + $0x38] sm:$0xf]
    %v3718 = vld [vmem:[#allocation17 + $0x3c] sm:$0xff]
    %v3719 = vld [vmem:[#allocation17 + $0x44] sm:$0xf]
    %v3720 = vld [vmem:[#allocation17 + $0x48] sm:$0xff]
    %v3721 = vld [vmem:[#allocation17 + $0x50] sm:$0xf]
    %v3722 = vld [vmem:[#allocation17 + $0x54] sm:$0xff]
    %v3723 = vld [vmem:[#allocation17 + $0x5c] sm:$0xf]
    %v3724 = vld [vmem:[#allocation17 + $0x60] sm:$0xff]
    %v3725 = vld [vmem:[#allocation17 + $0x68] sm:$0xf]
    %v3726 = vld [vmem:[#allocation17 + $0x6c] sm:$0xff]
    %v3727 = vld [vmem:[#allocation17 + $0x74] sm:$0xf]
    %v3728 = vld [vmem:[#allocation17 + $0x78] sm:$0xff]
    %v3729 = vld [vmem:[#allocation17 + $0x80] sm:$0xf]
    %v3730 = vld [vmem:[#allocation17 + $0x84] sm:$0xff]
    %v3731 = vld [vmem:[#allocation17 + $0x8c] sm:$0xf]
    %v3732 = vld [vmem:[#allocation17 + $0x90] sm:$0xff]
    %v3733 = vld [vmem:[#allocation17 + $0x98] sm:$0xf]
    %v3734 = vld [vmem:[#allocation17 + $0x9c] sm:$0xff]
    %v3735 = vld [vmem:[#allocation17 + $0xa4] sm:$0xf]
    %v3736 = vld [vmem:[#allocation17 + $0xa8] sm:$0xff]
    %v3737 = vld [vmem:[#allocation17 + $0xb0] sm:$0xf]
    %v3738 = vld [vmem:[#allocation17 + $0xb4] sm:$0xff]
    %v3739 = vld [vmem:[#allocation17 + $0xbc] sm:$0xf]
    %v3740 = vld [vmem:[#allocation17 + $0xc0] sm:$0xff]
    %v3741 = vld [vmem:[#allocation17 + $0xc8] sm:$0xf]
    %v3742 = vld [vmem:[#allocation17 + $0xcc] sm:$0xff]
    %v3743 = vld [vmem:[#allocation17 + $0xd4] sm:$0xf]
    %v3744 = vld [vmem:[#allocation17 + $0xd8] sm:$0xff]
    %v3745 = vld [vmem:[#allocation17 + $0xe0] sm:$0xf]
    %v3746 = vld [vmem:[#allocation17 + $0xe4] sm:$0xff]
    %v3747 = vld [vmem:[#allocation17 + $0xec] sm:$0xf]
    %v3748 = vld [vmem:[#allocation17 + $0xf0] sm:$0xff]
    %v3749 = vld [vmem:[#allocation17 + $0xf8] sm:$0xf]
    %v3750 = vld [vmem:[#allocation17 + $0xfc] sm:$0xff]
    %v3751 = vld [vmem:[#allocation17 + $0x104] sm:$0xf]
    %v3752 = vld [vmem:[#allocation17 + $0x108] sm:$0xff]
    %v3753 = vld [vmem:[#allocation17 + $0x110] sm:$0xf]
    %v3754 = vld [vmem:[#allocation17 + $0x114] sm:$0xff]
    %v3755 = vld [vmem:[#allocation17 + $0x11c] sm:$0xf]
    %v3756 = vld [vmem:[#allocation17 + $0x120] sm:$0xff]
    %v3757 = vld [vmem:[#allocation17 + $0x128] sm:$0xf]
    %v3758 = vld [vmem:[#allocation17 + $0x12c] sm:$0xff]
    %v3759 = vld [vmem:[#allocation17 + $0x134] sm:$0xf]
    %v3760 = vld [vmem:[#allocation17 + $0x138] sm:$0xff]
    %v3761 = vld [vmem:[#allocation17 + $0x140] sm:$0xf]
    %v3762 = vld [vmem:[#allocation17 + $0x144] sm:$0xff]
    %v3763 = vld [vmem:[#allocation17 + $0x14c] sm:$0xf]
    %v3764 = vld [vmem:[#allocation17 + $0x150] sm:$0xff]
    %v3765 = vld [vmem:[#allocation17 + $0x158] sm:$0xf]
    %v3766 = vld [vmem:[#allocation17 + $0x15c] sm:$0xff]
    %v3767 = vld [vmem:[#allocation17 + $0x164] sm:$0xf]
    %v3768 = vld [vmem:[#allocation17 + $0x168] sm:$0xff]
    %v3769 = vld [vmem:[#allocation17 + $0x170] sm:$0xf]
    %v3770 = vld [vmem:[#allocation17 + $0x174] sm:$0xff]
    %v3771 = vld [vmem:[#allocation17 + $0x17c] sm:$0xf]
    %v3772 = vld [vmem:[#allocation17 + $0x180] sm:$0xff]
    %v3773 = vld [vmem:[#allocation17 + $0x188] sm:$0xf]
    %v3774 = vld [vmem:[#allocation17 + $0x18c] sm:$0xff]
    %v3775 = vld [vmem:[#allocation17 + $0x194] sm:$0xf]
    %v3776 = vld [vmem:[#allocation17 + $0x198] sm:$0xff]
    %v3777 = vld [vmem:[#allocation17 + $0x1a0] sm:$0xf]
    %v3778 = vld [vmem:[#allocation17 + $0x1a4] sm:$0xff]
    %v3779 = vld [vmem:[#allocation17 + $0x1ac] sm:$0xf]
    %v3780 = vld [vmem:[#allocation17 + $0x1b0] sm:$0xff]
    %v3781 = vld [vmem:[#allocation17 + $0x1b8] sm:$0xf]
    %v3782 = vld [vmem:[#allocation17 + $0x1bc] sm:$0xff]
    %v3783 = vld [vmem:[#allocation17 + $0x1c4] sm:$0xf]
    %v3784 = vld [vmem:[#allocation17 + $0x1c8] sm:$0xff]
    %v3785 = vld [vmem:[#allocation17 + $0x1d0] sm:$0xf]
    %v3786 = vld [vmem:[#allocation17 + $0x1d4] sm:$0xff]
    %v3787 = vld [vmem:[#allocation17 + $0x1dc] sm:$0xf]
    %v3788 = vld [vmem:[#allocation17 + $0x1e0] sm:$0xff]
    %v3789 = vld [vmem:[#allocation17 + $0x1e8] sm:$0xf]
    %v3790 = vld [vmem:[#allocation17 + $0x1ec] sm:$0xff]
    %v3791 = vld [vmem:[#allocation17 + $0x1f4] sm:$0xf]
    %v3792 = vld [vmem:[#allocation17 + $0x1f8] sm:$0xff]
    %v3793 = vld [vmem:[#allocation17 + $0x200] sm:$0xf]
    %v3794 = vld [vmem:[#allocation17 + $0x204] sm:$0xff]
    %v3795 = vld [vmem:[#allocation17 + $0x20c] sm:$0xf]
    %v3796 = vld [vmem:[#allocation17 + $0x210] sm:$0xff]
    %v3797 = vld [vmem:[#allocation17 + $0x218] sm:$0xf]
    %v3798 = vld [vmem:[#allocation17 + $0x21c] sm:$0xff]
    %v3799 = vld [vmem:[#allocation17 + $0x224] sm:$0xf]
    %v3800 = vld [vmem:[#allocation17 + $0x228] sm:$0xff]
    %v3801 = vld [vmem:[#allocation17 + $0x230] sm:$0xf]
    %v3802 = vld [vmem:[#allocation17 + $0x234] sm:$0xff]
    %v3803 = vld [vmem:[#allocation17 + $0x23c] sm:$0xf]
    %v3804 = vld [vmem:[#allocation17 + $0x240] sm:$0xff]
    %v3805 = vld [vmem:[#allocation17 + $0x248] sm:$0xf]
    %v3806 = vld [vmem:[#allocation17 + $0x24c] sm:$0xff]
    %v3807 = vld [vmem:[#allocation17 + $0x254] sm:$0xf]
    %v3808 = vld [vmem:[#allocation17 + $0x258] sm:$0xff]
    %v3809 = vld [vmem:[#allocation17 + $0x260] sm:$0xf]
    %v3810 = vld [vmem:[#allocation17 + $0x264] sm:$0xff]
    %v3811 = vld [vmem:[#allocation17 + $0x26c] sm:$0xf]
    %v3812 = vld [vmem:[#allocation17 + $0x270] sm:$0xff]
    %v3813 = vld [vmem:[#allocation17 + $0x278] sm:$0xf]
    %v3814 = vld [vmem:[#allocation17 + $0x27c] sm:$0xff]
    %v3815 = vld [vmem:[#allocation17 + $0x284] sm:$0xf]
    %v3816 = vld [vmem:[#allocation17 + $0x288] sm:$0xff]
    %v3817 = vld [vmem:[#allocation17 + $0x290] sm:$0xf]
    %v3818 = vld [vmem:[#allocation17 + $0x294] sm:$0xff]
    %v3819 = vld [vmem:[#allocation17 + $0x29c] sm:$0xf]
    %v3820 = vld [vmem:[#allocation17 + $0x2a0] sm:$0xff]
    %v3821 = vld [vmem:[#allocation17 + $0x2a8] sm:$0xf]
    %v3822 = vld [vmem:[#allocation17 + $0x2ac] sm:$0xff]
    %v3823 = vld [vmem:[#allocation17 + $0x2b4] sm:$0xf]
    %v3824 = vld [vmem:[#allocation17 + $0x2b8] sm:$0xff]
    %v3825 = vld [vmem:[#allocation17 + $0x2c0] sm:$0xf]
    %v3826 = vld [vmem:[#allocation17 + $0x2c4] sm:$0xff]
    %v3827 = vld [vmem:[#allocation17 + $0x2cc] sm:$0xf]
    %v3828 = vld [vmem:[#allocation17 + $0x2d0] sm:$0xff]
    %v3829 = vld [vmem:[#allocation17 + $0x2d8] sm:$0xf]
    %v3830 = vld [vmem:[#allocation17 + $0x2dc] sm:$0xff]
    %v3831 = vld [vmem:[#allocation17 + $0x2e4] sm:$0xf]
    %v3832 = vld [vmem:[#allocation17 + $0x2e8] sm:$0xff]
    %v3833 = vld [vmem:[#allocation17 + $0x2f0] sm:$0xf]
    %v3834 = vld [vmem:[#allocation17 + $0x2f4] sm:$0xff]
    %v3835 = vld [vmem:[#allocation17 + $0x2fc] sm:$0xf]
    %v3836 = vld [vmem:[#allocation20] sm:$0x7]
    %v3838 = vlaneseq
    %v3839 = vshrl.u32 %v3838, 7
    %v3840 = vsub.s32 0, %v3839
    %v3841 = vrot.slane %v3836, %v3840
    %v3842 = vlaneseq
    %v3843 = vshrl.u32 %v3842, 7
    %v3844 = vsub.s32 1, %v3843
    %v3845 = vrot.slane %v3836, %v3844
    %v3846 = vlaneseq
    %v3847 = vshrl.u32 %v3846, 7
    %v3848 = vsub.s32 2, %v3847
    %v3849 = vrot.slane %v3836, %v3848
    %v3981 = vunpack.c.l.b16 %v3708
    %v3982 = vunpack.c.h.b16 %v3708
    %v3983 = vunpack.c.l.b16 %v3709
    %v3984 = vunpack.c.l.b16 %v3710
    %v3985 = vunpack.c.h.b16 %v3710
    %v3986 = vunpack.c.l.b16 %v3711
    %v3987 = vunpack.c.l.b16 %v3712
    %v3988 = vunpack.c.h.b16 %v3712
    %v3989 = vunpack.c.l.b16 %v3713
    %v3990 = vunpack.c.l.b16 %v3714
    %v3991 = vunpack.c.h.b16 %v3714
    %v3992 = vunpack.c.l.b16 %v3715
    %v3993 = vunpack.c.l.b16 %v3716
    %v3994 = vunpack.c.h.b16 %v3716
    %v3995 = vunpack.c.l.b16 %v3717
    %v3996 = vunpack.c.l.b16 %v3718
    %v3997 = vunpack.c.h.b16 %v3718
    %v3998 = vunpack.c.l.b16 %v3719
    %v3999 = vunpack.c.l.b16 %v3720
    %v4000 = vunpack.c.h.b16 %v3720
    %v4001 = vunpack.c.l.b16 %v3721
    %v4002 = vunpack.c.l.b16 %v3722
    %v4003 = vunpack.c.h.b16 %v3722
    %v4004 = vunpack.c.l.b16 %v3723
    %v4005 = vunpack.c.l.b16 %v3724
    %v4006 = vunpack.c.h.b16 %v3724
    %v4007 = vunpack.c.l.b16 %v3725
    %v4008 = vunpack.c.l.b16 %v3726
    %v4009 = vunpack.c.h.b16 %v3726
    %v4010 = vunpack.c.l.b16 %v3727
    %v4011 = vunpack.c.l.b16 %v3728
    %v4012 = vunpack.c.h.b16 %v3728
    %v4013 = vunpack.c.l.b16 %v3729
    %v4014 = vunpack.c.l.b16 %v3730
    %v4015 = vunpack.c.h.b16 %v3730
    %v4016 = vunpack.c.l.b16 %v3731
    %v4017 = vunpack.c.l.b16 %v3732
    %v4018 = vunpack.c.h.b16 %v3732
    %v4019 = vunpack.c.l.b16 %v3733
    %v4020 = vunpack.c.l.b16 %v3734
    %v4021 = vunpack.c.h.b16 %v3734
    %v4022 = vunpack.c.l.b16 %v3735
    %v4023 = vunpack.c.l.b16 %v3736
    %v4024 = vunpack.c.h.b16 %v3736
    %v4025 = vunpack.c.l.b16 %v3737
    %v4026 = vunpack.c.l.b16 %v3738
    %v4027 = vunpack.c.h.b16 %v3738
    %v4028 = vunpack.c.l.b16 %v3739
    %v4029 = vunpack.c.l.b16 %v3740
    %v4030 = vunpack.c.h.b16 %v3740
    %v4031 = vunpack.c.l.b16 %v3741
    %v4032 = vunpack.c.l.b16 %v3742
    %v4033 = vunpack.c.h.b16 %v3742
    %v4034 = vunpack.c.l.b16 %v3743
    %v4035 = vunpack.c.l.b16 %v3744
    %v4036 = vunpack.c.h.b16 %v3744
    %v4037 = vunpack.c.l.b16 %v3745
    %v4038 = vunpack.c.l.b16 %v3746
    %v4039 = vunpack.c.h.b16 %v3746
    %v4040 = vunpack.c.l.b16 %v3747
    %v4041 = vunpack.c.l.b16 %v3748
    %v4042 = vunpack.c.h.b16 %v3748
    %v4043 = vunpack.c.l.b16 %v3749
    %v4044 = vunpack.c.l.b16 %v3750
    %v4045 = vunpack.c.h.b16 %v3750
    %v4046 = vunpack.c.l.b16 %v3751
    %v4047 = vunpack.c.l.b16 %v3752
    %v4048 = vunpack.c.h.b16 %v3752
    %v4049 = vunpack.c.l.b16 %v3753
    %v4050 = vunpack.c.l.b16 %v3754
    %v4051 = vunpack.c.h.b16 %v3754
    %v4052 = vunpack.c.l.b16 %v3755
    %v4053 = vunpack.c.l.b16 %v3756
    %v4054 = vunpack.c.h.b16 %v3756
    %v4055 = vunpack.c.l.b16 %v3757
    %v4056 = vunpack.c.l.b16 %v3758
    %v4057 = vunpack.c.h.b16 %v3758
    %v4058 = vunpack.c.l.b16 %v3759
    %v4059 = vunpack.c.l.b16 %v3760
    %v4060 = vunpack.c.h.b16 %v3760
    %v4061 = vunpack.c.l.b16 %v3761
    %v4062 = vunpack.c.l.b16 %v3762
    %v4063 = vunpack.c.h.b16 %v3762
    %v4064 = vunpack.c.l.b16 %v3763
    %v4065 = vunpack.c.l.b16 %v3764
    %v4066 = vunpack.c.h.b16 %v3764
    %v4067 = vunpack.c.l.b16 %v3765
    %v4068 = vunpack.c.l.b16 %v3766
    %v4069 = vunpack.c.h.b16 %v3766
    %v4070 = vunpack.c.l.b16 %v3767
    %v4071 = vunpack.c.l.b16 %v3768
    %v4072 = vunpack.c.h.b16 %v3768
    %v4073 = vunpack.c.l.b16 %v3769
    %v4074 = vunpack.c.l.b16 %v3770
    %v4075 = vunpack.c.h.b16 %v3770
    %v4076 = vunpack.c.l.b16 %v3771
    %v4077 = vunpack.c.l.b16 %v3772
    %v4078 = vunpack.c.h.b16 %v3772
    %v4079 = vunpack.c.l.b16 %v3773
    %v4080 = vunpack.c.l.b16 %v3774
    %v4081 = vunpack.c.h.b16 %v3774
    %v4082 = vunpack.c.l.b16 %v3775
    %v4083 = vunpack.c.l.b16 %v3776
    %v4084 = vunpack.c.h.b16 %v3776
    %v4085 = vunpack.c.l.b16 %v3777
    %v4086 = vunpack.c.l.b16 %v3778
    %v4087 = vunpack.c.h.b16 %v3778
    %v4088 = vunpack.c.l.b16 %v3779
    %v4089 = vunpack.c.l.b16 %v3780
    %v4090 = vunpack.c.h.b16 %v3780
    %v4091 = vunpack.c.l.b16 %v3781
    %v4092 = vunpack.c.l.b16 %v3782
    %v4093 = vunpack.c.h.b16 %v3782
    %v4094 = vunpack.c.l.b16 %v3783
    %v4095 = vunpack.c.l.b16 %v3784
    %v4096 = vunpack.c.h.b16 %v3784
    %v4097 = vunpack.c.l.b16 %v3785
    %v4098 = vunpack.c.l.b16 %v3786
    %v4099 = vunpack.c.h.b16 %v3786
    %v4100 = vunpack.c.l.b16 %v3787
    %v4101 = vunpack.c.l.b16 %v3788
    %v4102 = vunpack.c.h.b16 %v3788
    %v4103 = vunpack.c.l.b16 %v3789
    %v4104 = vunpack.c.l.b16 %v3790
    %v4105 = vunpack.c.h.b16 %v3790
    %v4106 = vunpack.c.l.b16 %v3791
    %v4107 = vunpack.c.l.b16 %v3792
    %v4108 = vunpack.c.h.b16 %v3792
    %v4109 = vunpack.c.l.b16 %v3793
    %v4110 = vunpack.c.l.b16 %v3794
    %v4111 = vunpack.c.h.b16 %v3794
    %v4112 = vunpack.c.l.b16 %v3795
    %v4113 = vunpack.c.l.b16 %v3796
    %v4114 = vunpack.c.h.b16 %v3796
    %v4115 = vunpack.c.l.b16 %v3797
    %v4116 = vunpack.c.l.b16 %v3798
    %v4117 = vunpack.c.h.b16 %v3798
    %v4118 = vunpack.c.l.b16 %v3799
    %v4119 = vunpack.c.l.b16 %v3800
    %v4120 = vunpack.c.h.b16 %v3800
    %v4121 = vunpack.c.l.b16 %v3801
    %v4122 = vunpack.c.l.b16 %v3802
    %v4123 = vunpack.c.h.b16 %v3802
    %v4124 = vunpack.c.l.b16 %v3803
    %v4125 = vunpack.c.l.b16 %v3804
    %v4126 = vunpack.c.h.b16 %v3804
    %v4127 = vunpack.c.l.b16 %v3805
    %v4128 = vunpack.c.l.b16 %v3806
    %v4129 = vunpack.c.h.b16 %v3806
    %v4130 = vunpack.c.l.b16 %v3807
    %v4131 = vunpack.c.l.b16 %v3808
    %v4132 = vunpack.c.h.b16 %v3808
    %v4133 = vunpack.c.l.b16 %v3809
    %v4134 = vunpack.c.l.b16 %v3810
    %v4135 = vunpack.c.h.b16 %v3810
    %v4136 = vunpack.c.l.b16 %v3811
    %v4137 = vunpack.c.l.b16 %v3812
    %v4138 = vunpack.c.h.b16 %v3812
    %v4139 = vunpack.c.l.b16 %v3813
    %v4140 = vunpack.c.l.b16 %v3814
    %v4141 = vunpack.c.h.b16 %v3814
    %v4142 = vunpack.c.l.b16 %v3815
    %v4143 = vunpack.c.l.b16 %v3816
    %v4144 = vunpack.c.h.b16 %v3816
    %v4145 = vunpack.c.l.b16 %v3817
    %v4146 = vunpack.c.l.b16 %v3818
    %v4147 = vunpack.c.h.b16 %v3818
    %v4148 = vunpack.c.l.b16 %v3819
    %v4149 = vunpack.c.l.b16 %v3820
    %v4150 = vunpack.c.h.b16 %v3820
    %v4151 = vunpack.c.l.b16 %v3821
    %v4152 = vunpack.c.l.b16 %v3822
    %v4153 = vunpack.c.h.b16 %v3822
    %v4154 = vunpack.c.l.b16 %v3823
    %v4155 = vunpack.c.l.b16 %v3824
    %v4156 = vunpack.c.h.b16 %v3824
    %v4157 = vunpack.c.l.b16 %v3825
    %v4158 = vunpack.c.l.b16 %v3826
    %v4159 = vunpack.c.h.b16 %v3826
    %v4160 = vunpack.c.l.b16 %v3827
    %v4161 = vunpack.c.l.b16 %v3828
    %v4162 = vunpack.c.h.b16 %v3828
    %v4163 = vunpack.c.l.b16 %v3829
    %v4164 = vunpack.c.l.b16 %v3830
    %v4165 = vunpack.c.h.b16 %v3830
    %v4166 = vunpack.c.l.b16 %v3831
    %v4167 = vunpack.c.l.b16 %v3832
    %v4168 = vunpack.c.h.b16 %v3832
    %v4169 = vunpack.c.l.b16 %v3833
    %v4170 = vunpack.c.l.b16 %v3834
    %v4171 = vunpack.c.h.b16 %v3834
    %v4172 = vunpack.c.l.b16 %v3835
    %v4173 = vpack.c.b16 %v3984, %v3981
    %v4174 = vpack.c.b16 %v3985, %v3982
    %v4175 = vpack.c.b16 %v3986, %v3983
    %v4176 = vpack.c.b16 %v3990, %v3987
    %v4177 = vpack.c.b16 %v3991, %v3988
    %v4178 = vpack.c.b16 %v3992, %v3989
    %v4179 = vpack.c.b16 %v3996, %v3993
    %v4180 = vpack.c.b16 %v3997, %v3994
    %v4181 = vpack.c.b16 %v3998, %v3995
    %v4182 = vpack.c.b16 %v4002, %v3999
    %v4183 = vpack.c.b16 %v4003, %v4000
    %v4184 = vpack.c.b16 %v4004, %v4001
    %v4185 = vpack.c.b16 %v4008, %v4005
    %v4186 = vpack.c.b16 %v4009, %v4006
    %v4187 = vpack.c.b16 %v4010, %v4007
    %v4188 = vpack.c.b16 %v4014, %v4011
    %v4189 = vpack.c.b16 %v4015, %v4012
    %v4190 = vpack.c.b16 %v4016, %v4013
    %v4191 = vpack.c.b16 %v4020, %v4017
    %v4192 = vpack.c.b16 %v4021, %v4018
    %v4193 = vpack.c.b16 %v4022, %v4019
    %v4194 = vpack.c.b16 %v4026, %v4023
    %v4195 = vpack.c.b16 %v4027, %v4024
    %v4196 = vpack.c.b16 %v4028, %v4025
    %v4197 = vpack.c.b16 %v4032, %v4029
    %v4198 = vpack.c.b16 %v4033, %v4030
    %v4199 = vpack.c.b16 %v4034, %v4031
    %v4200 = vpack.c.b16 %v4038, %v4035
    %v4201 = vpack.c.b16 %v4039, %v4036
    %v4202 = vpack.c.b16 %v4040, %v4037
    %v4203 = vpack.c.b16 %v4044, %v4041
    %v4204 = vpack.c.b16 %v4045, %v4042
    %v4205 = vpack.c.b16 %v4046, %v4043
    %v4206 = vpack.c.b16 %v4050, %v4047
    %v4207 = vpack.c.b16 %v4051, %v4048
    %v4208 = vpack.c.b16 %v4052, %v4049
    %v4209 = vpack.c.b16 %v4056, %v4053
    %v4210 = vpack.c.b16 %v4057, %v4054
    %v4211 = vpack.c.b16 %v4058, %v4055
    %v4212 = vpack.c.b16 %v4062, %v4059
    %v4213 = vpack.c.b16 %v4063, %v4060
    %v4214 = vpack.c.b16 %v4064, %v4061
    %v4215 = vpack.c.b16 %v4068, %v4065
    %v4216 = vpack.c.b16 %v4069, %v4066
    %v4217 = vpack.c.b16 %v4070, %v4067
    %v4218 = vpack.c.b16 %v4074, %v4071
    %v4219 = vpack.c.b16 %v4075, %v4072
    %v4220 = vpack.c.b16 %v4076, %v4073
    %v4221 = vpack.c.b16 %v4080, %v4077
    %v4222 = vpack.c.b16 %v4081, %v4078
    %v4223 = vpack.c.b16 %v4082, %v4079
    %v4224 = vpack.c.b16 %v4086, %v4083
    %v4225 = vpack.c.b16 %v4087, %v4084
    %v4226 = vpack.c.b16 %v4088, %v4085
    %v4227 = vpack.c.b16 %v4092, %v4089
    %v4228 = vpack.c.b16 %v4093, %v4090
    %v4229 = vpack.c.b16 %v4094, %v4091
    %v4230 = vpack.c.b16 %v4098, %v4095
    %v4231 = vpack.c.b16 %v4099, %v4096
    %v4232 = vpack.c.b16 %v4100, %v4097
    %v4233 = vpack.c.b16 %v4104, %v4101
    %v4234 = vpack.c.b16 %v4105, %v4102
    %v4235 = vpack.c.b16 %v4106, %v4103
    %v4236 = vpack.c.b16 %v4110, %v4107
    %v4237 = vpack.c.b16 %v4111, %v4108
    %v4238 = vpack.c.b16 %v4112, %v4109
    %v4239 = vpack.c.b16 %v4116, %v4113
    %v4240 = vpack.c.b16 %v4117, %v4114
    %v4241 = vpack.c.b16 %v4118, %v4115
    %v4242 = vpack.c.b16 %v4122, %v4119
    %v4243 = vpack.c.b16 %v4123, %v4120
    %v4244 = vpack.c.b16 %v4124, %v4121
    %v4245 = vpack.c.b16 %v4128, %v4125
    %v4246 = vpack.c.b16 %v4129, %v4126
    %v4247 = vpack.c.b16 %v4130, %v4127
    %v4248 = vpack.c.b16 %v4134, %v4131
    %v4249 = vpack.c.b16 %v4135, %v4132
    %v4250 = vpack.c.b16 %v4136, %v4133
    %v4251 = vpack.c.b16 %v4140, %v4137
    %v4252 = vpack.c.b16 %v4141, %v4138
    %v4253 = vpack.c.b16 %v4142, %v4139
    %v4254 = vpack.c.b16 %v4146, %v4143
    %v4255 = vpack.c.b16 %v4147, %v4144
    %v4256 = vpack.c.b16 %v4148, %v4145
    %v4257 = vpack.c.b16 %v4152, %v4149
    %v4258 = vpack.c.b16 %v4153, %v4150
    %v4259 = vpack.c.b16 %v4154, %v4151
    %v4260 = vpack.c.b16 %v4158, %v4155
    %v4261 = vpack.c.b16 %v4159, %v4156
    %v4262 = vpack.c.b16 %v4160, %v4157
    %v4263 = vpack.c.b16 %v4164, %v4161
    %v4264 = vpack.c.b16 %v4165, %v4162
    %v4265 = vpack.c.b16 %v4166, %v4163
    %v4266 = vpack.c.b16 %v4170, %v4167
    %v4267 = vpack.c.b16 %v4171, %v4168
    %v4268 = vpack.c.b16 %v4172, %v4169
    %4365 = vmatprep.subr.bf16.mxu0 %v4174
    %4366 = vmatpush1.bf16.msra.mxu0 %v4173
    %4367 = vmatprep.subr.bf16.mxu0 %v4177
    %4368 = vmatpush1.bf16.msra.mxu0 %v4176
    %4369 = vmatprep.subr.bf16.mxu0 %v4180
    %4370 = vmatpush1.bf16.msra.mxu0 %v4179
    %4371 = vmatprep.subr.bf16.mxu0 %v4183
    %4372 = vmatpush1.bf16.msra.mxu0 %v4182
    %4373 = vmatprep.subr.bf16.mxu0 %v4186
    %4374 = vmatpush1.bf16.msra.mxu0 %v4185
    %4375 = vmatprep.subr.bf16.mxu0 %v4189
    %4376 = vmatpush1.bf16.msra.mxu0 %v4188
    %4377 = vmatprep.subr.bf16.mxu0 %v4192
    %4378 = vmatpush1.bf16.msra.mxu0 %v4191
    %4379 = vmatprep.subr.bf16.mxu0 %v4195
    %4380 = vmatpush1.bf16.msra.mxu0 %v4194
    %4381 = vmatprep.subr.bf16.mxu0 %v4198
    %4382 = vmatpush1.bf16.msra.mxu0 %v4197
    %4383 = vmatprep.subr.bf16.mxu0 %v4201
    %4384 = vmatpush1.bf16.msra.mxu0 %v4200
    %4385 = vmatprep.subr.bf16.mxu0 %v4204
    %4386 = vmatpush1.bf16.msra.mxu0 %v4203
    %4387 = vmatprep.subr.bf16.mxu0 %v4207
    %4388 = vmatpush1.bf16.msra.mxu0 %v4206
    %4389 = vmatprep.subr.bf16.mxu0 %v4210
    %4390 = vmatpush1.bf16.msra.mxu0 %v4209
    %4391 = vmatprep.subr.bf16.mxu0 %v4213
    %4392 = vmatpush1.bf16.msra.mxu0 %v4212
    %4393 = vmatprep.subr.bf16.mxu0 %v4216
    %4394 = vmatpush1.bf16.msra.mxu0 %v4215
    %4395 = vmatprep.subr.bf16.mxu0 %v4219
    %4396 = vmatpush1.bf16.msra.mxu0 %v4218
    %4397 = vmatprep.mubr.bf16.mxu0 %v2880
    %4398 = vmatmul.mubr.bf16.gmra.mrb[0].mxu0 %v2879
    %v4399 = vpop.f32.mrb[0].mxu0
    %v4400 = vadd.f32 %v3841, %v4399
    %v4401 = vpop.f32.mrb[0].mxu0
    %v4402 = vadd.f32 %v3845, %v4401
    %v4403 = vpop.f32.mrb[0].mxu0
    %v4404 = vadd.f32 %v3841, %v4403
    %v4405 = vpop.f32.mrb[0].mxu0
    %v4406 = vadd.f32 %v3845, %v4405
    %4407 = vdwg.mxu0
    %4408 = vmatprep.subr.bf16.mxu0 %v4222
    %4409 = vmatpush1.bf16.msra.mxu0 %v4221
    %4410 = vmatprep.subr.bf16.mxu0 %v4225
    %4411 = vmatpush1.bf16.msra.mxu0 %v4224
    %4412 = vmatprep.subr.bf16.mxu0 %v4228
    %4413 = vmatpush1.bf16.msra.mxu0 %v4227
    %4414 = vmatprep.subr.bf16.mxu0 %v4231
    %4415 = vmatpush1.bf16.msra.mxu0 %v4230
    %4416 = vmatprep.subr.bf16.mxu0 %v4234
    %4417 = vmatpush1.bf16.msra.mxu0 %v4233
    %4418 = vmatprep.subr.bf16.mxu0 %v4237
    %4419 = vmatpush1.bf16.msra.mxu0 %v4236
    %4420 = vmatprep.subr.bf16.mxu0 %v4240
    %4421 = vmatpush1.bf16.msra.mxu0 %v4239
    %4422 = vmatprep.subr.bf16.mxu0 %v4243
    %4423 = vmatpush1.bf16.msra.mxu0 %v4242
    %4424 = vmatprep.subr.bf16.mxu0 %v4246
    %4425 = vmatpush1.bf16.msra.mxu0 %v4245
    %4426 = vmatprep.subr.bf16.mxu0 %v4249
    %4427 = vmatpush1.bf16.msra.mxu0 %v4248
    %4428 = vmatprep.subr.bf16.mxu0 %v4252
    %4429 = vmatpush1.bf16.msra.mxu0 %v4251
    %4430 = vmatprep.subr.bf16.mxu0 %v4255
    %4431 = vmatpush1.bf16.msra.mxu0 %v4254
    %4432 = vmatprep.subr.bf16.mxu0 %v4258
    %4433 = vmatpush1.bf16.msra.mxu0 %v4257
    %4434 = vmatprep.subr.bf16.mxu0 %v4261
    %4435 = vmatpush1.bf16.msra.mxu0 %v4260
    %4436 = vmatprep.subr.bf16.mxu0 %v4264
    %4437 = vmatpush1.bf16.msra.mxu0 %v4263
    %4438 = vmatprep.subr.bf16.mxu0 %v4267
    %4439 = vmatpush1.bf16.msra.mxu0 %v4266
    %4440 = vmatprep.mubr.bf16.mxu0 %v2882
    %4441 = vmatmul.mubr.bf16.gmra.mrb[0].mxu0 %v2881
    %v4442 = vpop.f32.mrb[0].mxu0
    %v4443 = vadd.f32 %v4400, %v4442
    %v4444 = vpop.f32.mrb[0].mxu0
    %v4445 = vadd.f32 %v4402, %v4444
    %v4446 = vpop.f32.mrb[0].mxu0
    %v4447 = vadd.f32 %v4404, %v4446
    %v4448 = vpop.f32.mrb[0].mxu0
    %v4449 = vadd.f32 %v4406, %v4448
    %4450 = vdwg.mxu0
    %4451 = vmatprep.subr.bf16.mxu0 0
    %4452 = vmatpush1.bf16.msra.mxu0 %v4175
    %4453 = vmatprep.subr.bf16.mxu0 0
    %4454 = vmatpush1.bf16.msra.mxu0 %v4178
    %4455 = vmatprep.subr.bf16.mxu0 0
    %4456 = vmatpush1.bf16.msra.mxu0 %v4181
    %4457 = vmatprep.subr.bf16.mxu0 0
    %4458 = vmatpush1.bf16.msra.mxu0 %v4184
    %4459 = vmatprep.subr.bf16.mxu0 0
    %4460 = vmatpush1.bf16.msra.mxu0 %v4187
    %4461 = vmatprep.subr.bf16.mxu0 0
    %4462 = vmatpush1.bf16.msra.mxu0 %v4190
    %4463 = vmatprep.subr.bf16.mxu0 0
    %4464 = vmatpush1.bf16.msra.mxu0 %v4193
    %4465 = vmatprep.subr.bf16.mxu0 0
    %4466 = vmatpush1.bf16.msra.mxu0 %v4196
    %4467 = vmatprep.subr.bf16.mxu0 0
    %4468 = vmatpush1.bf16.msra.mxu0 %v4199
    %4469 = vmatprep.subr.bf16.mxu0 0
    %4470 = vmatpush1.bf16.msra.mxu0 %v4202
    %4471 = vmatprep.subr.bf16.mxu0 0
    %4472 = vmatpush1.bf16.msra.mxu0 %v4205
    %4473 = vmatprep.subr.bf16.mxu0 0
    %4474 = vmatpush1.bf16.msra.mxu0 %v4208
    %4475 = vmatprep.subr.bf16.mxu0 0
    %4476 = vmatpush1.bf16.msra.mxu0 %v4211
    %4477 = vmatprep.subr.bf16.mxu0 0
    %4478 = vmatpush1.bf16.msra.mxu0 %v4214
    %4479 = vmatprep.subr.bf16.mxu0 0
    %4480 = vmatpush1.bf16.msra.mxu0 %v4217
    %4481 = vmatprep.subr.bf16.mxu0 0
    %4482 = vmatpush1.bf16.msra.mxu0 %v4220
    %4483 = vmatprep.mubr.bf16.mxu0 %v2880
    %4484 = vmatmul.mubr.bf16.gmra.mrb[0].mxu0 %v2879
    %v4485 = vpop.f32.mrb[0].mxu0
    %v4486 = vadd.f32 %v3849, %v4485
    %v4487 = vpop.f32.mrb[0].mxu0
    %v4488 = vpop.f32.mrb[0].mxu0
    %v4489 = vadd.f32 %v3849, %v4488
    %v4490 = vpop.f32.mrb[0].mxu0
    %4491 = vdwg.mxu0
    %4492 = vmatprep.subr.bf16.mxu0 0
    %4493 = vmatpush1.bf16.msra.mxu0 %v4223
    %4494 = vmatprep.subr.bf16.mxu0 0
    %4495 = vmatpush1.bf16.msra.mxu0 %v4226
    %4496 = vmatprep.subr.bf16.mxu0 0
    %4497 = vmatpush1.bf16.msra.mxu0 %v4229
    %4498 = vmatprep.subr.bf16.mxu0 0
    %4499 = vmatpush1.bf16.msra.mxu0 %v4232
    %4500 = vmatprep.subr.bf16.mxu0 0
    %4501 = vmatpush1.bf16.msra.mxu0 %v4235
    %4502 = vmatprep.subr.bf16.mxu0 0
    %4503 = vmatpush1.bf16.msra.mxu0 %v4238
    %4504 = vmatprep.subr.bf16.mxu0 0
    %4505 = vmatpush1.bf16.msra.mxu0 %v4241
    %4506 = vmatprep.subr.bf16.mxu0 0
    %4507 = vmatpush1.bf16.msra.mxu0 %v4244
    %4508 = vmatprep.subr.bf16.mxu0 0
    %4509 = vmatpush1.bf16.msra.mxu0 %v4247
    %4510 = vmatprep.subr.bf16.mxu0 0
    %4511 = vmatpush1.bf16.msra.mxu0 %v4250
    %4512 = vmatprep.subr.bf16.mxu0 0
    %4513 = vmatpush1.bf16.msra.mxu0 %v4253
    %4514 = vmatprep.subr.bf16.mxu0 0
    %4515 = vmatpush1.bf16.msra.mxu0 %v4256
    %4516 = vmatprep.subr.bf16.mxu0 0
    %4517 = vmatpush1.bf16.msra.mxu0 %v4259
    %4518 = vmatprep.subr.bf16.mxu0 0
    %4519 = vmatpush1.bf16.msra.mxu0 %v4262
    %4520 = vmatprep.subr.bf16.mxu0 0
    %4521 = vmatpush1.bf16.msra.mxu0 %v4265
    %4522 = vmatprep.subr.bf16.mxu0 0
    %4523 = vmatpush1.bf16.msra.mxu0 %v4268
    %4524 = vmatprep.mubr.bf16.mxu0 %v2882
    %4525 = vmatmul.mubr.bf16.gmra.mrb[0].mxu0 %v2881
    %v4526 = vpop.f32.mrb[0].mxu0
    %v4527 = vadd.f32 %v4486, %v4526
    %v4528 = vpop.f32.mrb[0].mxu0
    %v4529 = vpop.f32.mrb[0].mxu0
    %v4530 = vadd.f32 %v4489, %v4529
    %v4531 = vpop.f32.mrb[0].mxu0
    %4532 = vdwg.mxu0
    %v4533 = vxor.u32 %v4443, 2147483648
    %v4534 = vxor.u32 %v4445, 2147483648
    %v4535 = vxor.u32 %v4527, 2147483648
    %v4536 = vxor.u32 %v4447, 2147483648
    %v4537 = vxor.u32 %v4449, 2147483648
    %v4538 = vxor.u32 %v4530, 2147483648
    %v4539 = vmul.f32 %v4533, 1.442695
    %v4540 = vpow.pop %v4539
    %v4541 = vmul.f32 %v4534, 1.442695
    %v4542 = vpow.pop %v4541
    %v4543 = vmul.f32 %v4535, 1.442695
    %v4544 = vpow.pop %v4543
    %v4545 = vmul.f32 %v4536, 1.442695
    %v4546 = vpow.pop %v4545
    %v4547 = vmul.f32 %v4537, 1.442695
    %v4548 = vpow.pop %v4547
    %v4549 = vmul.f32 %v4538, 1.442695
    %v4550 = vpow.pop %v4549
    %v4551 = vadd.f32 %v4540, 1.0
    %v4552 = vadd.f32 %v4542, 1.0
    %v4553 = vadd.f32 %v4544, 1.0
    %v4554 = vadd.f32 %v4546, 1.0
    %v4555 = vadd.f32 %v4548, 1.0
    %v4556 = vadd.f32 %v4550, 1.0
    %v4557 = vrcp.pop %v4551
    %v4558 = vmul.f32 1.0, %v4557
    %v4559 = vrcp.pop %v4552
    %v4560 = vmul.f32 1.0, %v4559
    %v4561 = vrcp.pop %v4553
    %v4562 = vmul.f32 1.0, %v4561
    %v4563 = vrcp.pop %v4554
    %v4564 = vmul.f32 1.0, %v4563
    %v4565 = vrcp.pop %v4555
    %v4566 = vmul.f32 1.0, %v4565
    %v4567 = vrcp.pop %v4556
    %v4568 = vmul.f32 1.0, %v4567
    %v4569 = vadd.f32 %v3618, %v4558
    %v4570 = vadd.f32 %v3620, %v4560
    %v4571 = vadd.f32 %v3702, %v4562
    %v4572 = vadd.f32 %v3622, %v4564
    %v4573 = vadd.f32 %v3624, %v4566
    %v4574 = vadd.f32 %v3705, %v4568
    %v4575 = vmax.f32 %v4569, 0.0
    %v4576 = vmax.f32 %v4570, 0.0
    %v4577 = vmax.f32 %v4571, 0.0
    %v4578 = vmax.f32 %v4572, 0.0
    %v4579 = vmax.f32 %v4573, 0.0
    %v4580 = vmax.f32 %v4574, 0.0
    %v4581 = vpack.c.bf16 %v4578, %v4575
    %v4582 = vpack.c.bf16 %v4579, %v4576
    %v4583 = vpack.c.bf16 %v4580, %v4577
    %4584 = vmatprep.subr.bf16.mxu0 %v4582
    %4585 = vmatpush1.bf16.msra.mxu0 %v4581
    %4586 = vmatprep.subr.bf16.mxu0 0
    %4587 = vmatpush1.bf16.msra.mxu0 0
    %4588 = vmatprep.subr.bf16.mxu0 0
    %4589 = vmatpush1.bf16.msra.mxu0 0
    %4590 = vmatprep.subr.bf16.mxu0 0
    %4591 = vmatpush1.bf16.msra.mxu0 0
    %4592 = vmatprep.subr.bf16.mxu0 0
    %4593 = vmatpush1.bf16.msra.mxu0 0
    %4594 = vmatprep.subr.bf16.mxu0 0
    %4595 = vmatpush1.bf16.msra.mxu0 0
    %4596 = vmatprep.subr.bf16.mxu0 0
    %4597 = vmatpush1.bf16.msra.mxu0 0
    %4598 = vmatprep.subr.bf16.mxu0 0
    %4599 = vmatpush1.bf16.msra.mxu0 0
    %4600 = vmatprep.subr.bf16.mxu0 0
    %4601 = vmatpush1.bf16.msra.mxu0 0
    %4602 = vmatprep.subr.bf16.mxu0 0
    %4603 = vmatpush1.bf16.msra.mxu0 0
    %4604 = vmatprep.subr.bf16.mxu0 0
    %4605 = vmatpush1.bf16.msra.mxu0 0
    %4606 = vmatprep.subr.bf16.mxu0 0
    %4607 = vmatpush1.bf16.msra.mxu0 0
    %4608 = vmatprep.subr.bf16.mxu0 0
    %4609 = vmatpush1.bf16.msra.mxu0 0
    %4610 = vmatprep.subr.bf16.mxu0 0
    %4611 = vmatpush1.bf16.msra.mxu0 0
    %4612 = vmatprep.subr.bf16.mxu0 0
    %4613 = vmatpush1.bf16.msra.mxu0 0
    %4614 = vmatprep.subr.bf16.mxu0 0
    %4615 = vmatpush1.bf16.msra.mxu0 0
    %4616 = vmatprep.mubr.bf16.mxu0 0
    %4617 = vmatmul.mubr.bf16.gmra.mrb[0].mxu0 %v953
    %v4618 = vpop.f32.mrb[0].mxu0
    %v4619 = vadd.f32 0.0, %v4618
    %v4620 = vpop.f32.mrb[0].mxu0
    %v4621 = vadd.f32 0.0, %v4620
    %v4622 = vpop.f32.mrb[0].mxu0
    %v4623 = vadd.f32 0.0, %v4622
    %v4624 = vpop.f32.mrb[0].mxu0
    %v4625 = vadd.f32 0.0, %v4624
    %4626 = vdwg.mxu0
    %4627 = vmatprep.subr.bf16.mxu0 0
    %4628 = vmatpush1.bf16.msra.mxu0 %v4583
    %4629 = vmatprep.subr.bf16.mxu0 0
    %4630 = vmatpush1.bf16.msra.mxu0 0
    %4631 = vmatprep.subr.bf16.mxu0 0
    %4632 = vmatpush1.bf16.msra.mxu0 0
    %4633 = vmatprep.subr.bf16.mxu0 0
    %4634 = vmatpush1.bf16.msra.mxu0 0
    %4635 = vmatprep.subr.bf16.mxu0 0
    %4636 = vmatpush1.bf16.msra.mxu0 0
    %4637 = vmatprep.subr.bf16.mxu0 0
    %4638 = vmatpush1.bf16.msra.mxu0 0
    %4639 = vmatprep.subr.bf16.mxu0 0
    %4640 = vmatpush1.bf16.msra.mxu0 0
    %4641 = vmatprep.subr.bf16.mxu0 0
    %4642 = vmatpush1.bf16.msra.mxu0 0
    %4643 = vmatprep.subr.bf16.mxu0 0
    %4644 = vmatpush1.bf16.msra.mxu0 0
    %4645 = vmatprep.subr.bf16.mxu0 0
    %4646 = vmatpush1.bf16.msra.mxu0 0
    %4647 = vmatprep.subr.bf16.mxu0 0
    %4648 = vmatpush1.bf16.msra.mxu0 0
    %4649 = vmatprep.subr.bf16.mxu0 0
    %4650 = vmatpush1.bf16.msra.mxu0 0
    %4651 = vmatprep.subr.bf16.mxu0 0
    %4652 = vmatpush1.bf16.msra.mxu0 0
    %4653 = vmatprep.subr.bf16.mxu0 0
    %4654 = vmatpush1.bf16.msra.mxu0 0
    %4655 = vmatprep.subr.bf16.mxu0 0
    %4656 = vmatpush1.bf16.msra.mxu0 0
    %4657 = vmatprep.subr.bf16.mxu0 0
    %4658 = vmatpush1.bf16.msra.mxu0 0
    %4659 = vmatprep.mubr.bf16.mxu0 0
    %4660 = vmatmul.mubr.bf16.gmra.mrb[0].mxu0 %v953
    %v4661 = vpop.f32.mrb[0].mxu0
    %v4662 = vadd.f32 0.0, %v4661
    %v4663 = vpop.f32.mrb[0].mxu0
    %v4664 = vpop.f32.mrb[0].mxu0
    %v4665 = vadd.f32 0.0, %v4664
    %v4666 = vpop.f32.mrb[0].mxu0
    %4667 = vdwg.mxu0
    %v4668 = vpack.c.bf16 %v4623, %v4619
    %v4669 = vpack.c.bf16 %v4625, %v4621
    %v4670 = vpack.c.bf16 %v4665, %v4662
    %v4671 = vld [vmem:[%s37] sm:$0xf]
    %v4672 = vld [vmem:[%s37 + $0x4] sm:$0xf]
    %v4673 = vld [vmem:[%s37 + $0x8] sm:$0xf]
    %v4674 = vld [vmem:[%s37 + $0xc] sm:$0xf]
    %v4675 = vld [vmem:[%s37 + $0x10] sm:$0xf]
    %v4676 = vld [vmem:[%s37 + $0x14] sm:$0xf]
    %v4677 = vld [vmem:[%s37 + $0x18] sm:$0xf]
    %v4678 = vld [vmem:[%s37 + $0x1c] sm:$0xf]
    %v4679 = vld [vmem:[%s37 + $0x20] sm:$0xf]
    %v4680 = vld [vmem:[%s37 + $0x24] sm:$0xf]
    %v4681 = vld [vmem:[%s37 + $0x28] sm:$0xf]
    %v4682 = vld [vmem:[%s37 + $0x2c] sm:$0xf]
    %v4683 = vld [vmem:[%s37 + $0x30] sm:$0xf]
    %v4684 = vld [vmem:[%s37 + $0x34] sm:$0xf]
    %v4685 = vld [vmem:[%s37 + $0x38] sm:$0xf]
    %v4686 = vld [vmem:[%s37 + $0x3c] sm:$0xf]
    %v4687 = vld [vmem:[%s37 + $0x40] sm:$0xf]
    %v4688 = vld [vmem:[%s37 + $0x44] sm:$0xf]
    %v4689 = vld [vmem:[%s37 + $0x48] sm:$0xf]
    %v4690 = vld [vmem:[%s37 + $0x4c] sm:$0xf]
    %v4691 = vld [vmem:[%s37 + $0x50] sm:$0xf]
    %v4692 = vld [vmem:[%s37 + $0x54] sm:$0xf]
    %v4693 = vld [vmem:[%s37 + $0x58] sm:$0xf]
    %v4694 = vld [vmem:[%s37 + $0x5c] sm:$0xf]
    %v4695 = vld [vmem:[%s37 + $0x60] sm:$0xf]
    %v4696 = vld [vmem:[%s37 + $0x64] sm:$0xf]
    %v4697 = vld [vmem:[%s37 + $0x68] sm:$0xf]
    %v4698 = vld [vmem:[%s37 + $0x6c] sm:$0xf]
    %v4699 = vld [vmem:[%s37 + $0x70] sm:$0xf]
    %v4700 = vld [vmem:[%s37 + $0x74] sm:$0xf]
    %v4701 = vld [vmem:[%s37 + $0x78] sm:$0xf]
    %v4702 = vld [vmem:[%s37 + $0x7c] sm:$0xf]
    %v4703 = vld [vmem:[%s37 + $0x80] sm:$0xf]
    %v4704 = vld [vmem:[%s37 + $0x84] sm:$0xf]
    %v4705 = vld [vmem:[%s37 + $0x88] sm:$0xf]
    %v4706 = vld [vmem:[%s37 + $0x8c] sm:$0xf]
    %v4707 = vld [vmem:[%s37 + $0x90] sm:$0xf]
    %v4708 = vld [vmem:[%s37 + $0x94] sm:$0xf]
    %v4709 = vld [vmem:[%s37 + $0x98] sm:$0xf]
    %v4710 = vld [vmem:[%s37 + $0x9c] sm:$0xf]
    %v4711 = vld [vmem:[%s37 + $0xa0] sm:$0xf]
    %v4712 = vld [vmem:[%s37 + $0xa4] sm:$0xf]
    %v4713 = vld [vmem:[%s37 + $0xa8] sm:$0xf]
    %v4714 = vld [vmem:[%s37 + $0xac] sm:$0xf]
    %v4715 = vld [vmem:[%s37 + $0xb0] sm:$0xf]
    %v4716 = vld [vmem:[%s37 + $0xb4] sm:$0xf]
    %v4717 = vld [vmem:[%s37 + $0xb8] sm:$0xf]
    %v4718 = vld [vmem:[%s37 + $0xbc] sm:$0xf]
    %v4767 = vunpack.c.l.b16 %v4671
    %v4768 = vunpack.c.l.b16 %v4672
    %v4769 = vunpack.c.l.b16 %v4673
    %v4770 = vunpack.c.l.b16 %v4674
    %v4771 = vunpack.c.l.b16 %v4675
    %v4772 = vunpack.c.l.b16 %v4676
    %v4773 = vunpack.c.l.b16 %v4677
    %v4774 = vunpack.c.l.b16 %v4678
    %v4775 = vunpack.c.l.b16 %v4679
    %v4776 = vunpack.c.l.b16 %v4680
    %v4777 = vunpack.c.l.b16 %v4681
    %v4778 = vunpack.c.l.b16 %v4682
    %v4779 = vunpack.c.l.b16 %v4683
    %v4780 = vunpack.c.l.b16 %v4684
    %v4781 = vunpack.c.l.b16 %v4685
    %v4782 = vunpack.c.l.b16 %v4686
    %v4783 = vunpack.c.l.b16 %v4687
    %v4784 = vunpack.c.l.b16 %v4688
    %v4785 = vunpack.c.l.b16 %v4689
    %v4786 = vunpack.c.l.b16 %v4690
    %v4787 = vunpack.c.l.b16 %v4691
    %v4788 = vunpack.c.l.b16 %v4692
    %v4789 = vunpack.c.l.b16 %v4693
    %v4790 = vunpack.c.l.b16 %v4694
    %v4791 = vunpack.c.l.b16 %v4695
    %v4792 = vunpack.c.l.b16 %v4696
    %v4793 = vunpack.c.l.b16 %v4697
    %v4794 = vunpack.c.l.b16 %v4698
    %v4795 = vunpack.c.l.b16 %v4699
    %v4796 = vunpack.c.l.b16 %v4700
    %v4797 = vunpack.c.l.b16 %v4701
    %v4798 = vunpack.c.l.b16 %v4702
    %v4799 = vunpack.c.l.b16 %v4703
    %v4800 = vunpack.c.l.b16 %v4704
    %v4801 = vunpack.c.l.b16 %v4705
    %v4802 = vunpack.c.l.b16 %v4706
    %v4803 = vunpack.c.l.b16 %v4707
    %v4804 = vunpack.c.l.b16 %v4708
    %v4805 = vunpack.c.l.b16 %v4709
    %v4806 = vunpack.c.l.b16 %v4710
    %v4807 = vunpack.c.l.b16 %v4711
    %v4808 = vunpack.c.l.b16 %v4712
    %v4809 = vunpack.c.l.b16 %v4713
    %v4810 = vunpack.c.l.b16 %v4714
    %v4811 = vunpack.c.l.b16 %v4715
    %v4812 = vunpack.c.l.b16 %v4716
    %v4813 = vunpack.c.l.b16 %v4717
    %v4814 = vunpack.c.l.b16 %v4718
    %v4815 = vpack.c.b16 %v4768, %v4767
    %v4816 = vpack.c.b16 %v4770, %v4769
    %v4817 = vpack.c.b16 %v4772, %v4771
    %v4818 = vpack.c.b16 %v4774, %v4773
    %v4819 = vpack.c.b16 %v4776, %v4775
    %v4820 = vpack.c.b16 %v4778, %v4777
    %v4821 = vpack.c.b16 %v4780, %v4779
    %v4822 = vpack.c.b16 %v4782, %v4781
    %v4823 = vpack.c.b16 %v4784, %v4783
    %v4824 = vpack.c.b16 %v4786, %v4785
    %v4825 = vpack.c.b16 %v4788, %v4787
    %v4826 = vpack.c.b16 %v4790, %v4789
    %v4827 = vpack.c.b16 %v4792, %v4791
    %v4828 = vpack.c.b16 %v4794, %v4793
    %v4829 = vpack.c.b16 %v4796, %v4795
    %v4830 = vpack.c.b16 %v4798, %v4797
    %v4831 = vpack.c.b16 %v4800, %v4799
    %v4832 = vpack.c.b16 %v4802, %v4801
    %v4833 = vpack.c.b16 %v4804, %v4803
    %v4834 = vpack.c.b16 %v4806, %v4805
    %v4835 = vpack.c.b16 %v4808, %v4807
    %v4836 = vpack.c.b16 %v4810, %v4809
    %v4837 = vpack.c.b16 %v4812, %v4811
    %v4838 = vpack.c.b16 %v4814, %v4813
    %4863 = vmatprep.subr.bf16.mxu0 0
    %4864 = vmatpush1.bf16.msra.mxu0 %v4815
    %4865 = vmatprep.subr.bf16.mxu0 0
    %4866 = vmatpush1.bf16.msra.mxu0 %v4816
    %4867 = vmatprep.subr.bf16.mxu0 0
    %4868 = vmatpush1.bf16.msra.mxu0 %v4817
    %4869 = vmatprep.subr.bf16.mxu0 0
    %4870 = vmatpush1.bf16.msra.mxu0 %v4818
    %4871 = vmatprep.subr.bf16.mxu0 0
    %4872 = vmatpush1.bf16.msra.mxu0 %v4819
    %4873 = vmatprep.subr.bf16.mxu0 0
    %4874 = vmatpush1.bf16.msra.mxu0 %v4820
    %4875 = vmatprep.subr.bf16.mxu0 0
    %4876 = vmatpush1.bf16.msra.mxu0 %v4821
    %4877 = vmatprep.subr.bf16.mxu0 0
    %4878 = vmatpush1.bf16.msra.mxu0 %v4822
    %4879 = vmatprep.subr.bf16.mxu0 0
    %4880 = vmatpush1.bf16.msra.mxu0 %v4823
    %4881 = vmatprep.subr.bf16.mxu0 0
    %4882 = vmatpush1.bf16.msra.mxu0 %v4824
    %4883 = vmatprep.subr.bf16.mxu0 0
    %4884 = vmatpush1.bf16.msra.mxu0 %v4825
    %4885 = vmatprep.subr.bf16.mxu0 0
    %4886 = vmatpush1.bf16.msra.mxu0 %v4826
    %4887 = vmatprep.subr.bf16.mxu0 0
    %4888 = vmatpush1.bf16.msra.mxu0 %v4827
    %4889 = vmatprep.subr.bf16.mxu0 0
    %4890 = vmatpush1.bf16.msra.mxu0 %v4828
    %4891 = vmatprep.subr.bf16.mxu0 0
    %4892 = vmatpush1.bf16.msra.mxu0 %v4829
    %4893 = vmatprep.subr.bf16.mxu0 0
    %4894 = vmatpush1.bf16.msra.mxu0 %v4830
    %4895 = vmatprep.mubr.bf16.mxu0 %v4669
    %4896 = vmatmul.mubr.bf16.gmra.mrb[0].mxu0 %v4668
    %v4897 = vpop.f32.mrb[0].mxu0
    %v4898 = vadd.f32 0.0, %v4897
    %v4899 = vpop.f32.mrb[0].mxu0
    %v4900 = vpop.f32.mrb[0].mxu0
    %v4901 = vadd.f32 0.0, %v4900
    %v4902 = vpop.f32.mrb[0].mxu0
    %4903 = vdwg.mxu0
    %4904 = vmatprep.subr.bf16.mxu0 0
    %4905 = vmatpush1.bf16.msra.mxu0 %v4831
    %4906 = vmatprep.subr.bf16.mxu0 0
    %4907 = vmatpush1.bf16.msra.mxu0 %v4832
    %4908 = vmatprep.subr.bf16.mxu0 0
    %4909 = vmatpush1.bf16.msra.mxu0 %v4833
    %4910 = vmatprep.subr.bf16.mxu0 0
    %4911 = vmatpush1.bf16.msra.mxu0 %v4834
    %4912 = vmatprep.subr.bf16.mxu0 0
    %4913 = vmatpush1.bf16.msra.mxu0 %v4835
    %4914 = vmatprep.subr.bf16.mxu0 0
    %4915 = vmatpush1.bf16.msra.mxu0 %v4836
    %4916 = vmatprep.subr.bf16.mxu0 0
    %4917 = vmatpush1.bf16.msra.mxu0 %v4837
    %4918 = vmatprep.subr.bf16.mxu0 0
    %4919 = vmatpush1.bf16.msra.mxu0 %v4838
    %4920 = vmatprep.subr.bf16.mxu0 0
    %4921 = vmatpush1.bf16.msra.mxu0 0
    %4922 = vmatprep.subr.bf16.mxu0 0
    %4923 = vmatpush1.bf16.msra.mxu0 0
    %4924 = vmatprep.subr.bf16.mxu0 0
    %4925 = vmatpush1.bf16.msra.mxu0 0
    %4926 = vmatprep.subr.bf16.mxu0 0
    %4927 = vmatpush1.bf16.msra.mxu0 0
    %4928 = vmatprep.subr.bf16.mxu0 0
    %4929 = vmatpush1.bf16.msra.mxu0 0
    %4930 = vmatprep.subr.bf16.mxu0 0
    %4931 = vmatpush1.bf16.msra.mxu0 0
    %4932 = vmatprep.subr.bf16.mxu0 0
    %4933 = vmatpush1.bf16.msra.mxu0 0
    %4934 = vmatprep.subr.bf16.mxu0 0
    %4935 = vmatpush1.bf16.msra.mxu0 0
    %4936 = vmatprep.mubr.bf16.mxu0 0
    %4937 = vmatmul.mubr.bf16.gmra.mrb[0].mxu0 %v4670
    %v4938 = vpop.f32.mrb[0].mxu0
    %v4939 = vadd.f32 %v4898, %v4938
    %v4940 = vpop.f32.mrb[0].mxu0
    %v4941 = vpop.f32.mrb[0].mxu0
    %v4942 = vadd.f32 %v4901, %v4941
    %v4943 = vpop.f32.mrb[0].mxu0
    %4944 = vdwg.mxu0
    %v4945 = vmax.f32 %v4939, 0.0
    %v4946 = vmax.f32 %v4942, 0.0
    %v4947 = vpack.c.bf16 %v4946, %v4945
    %v4948 = vld [vmem:[#allocation22] sm:$0xff]
    %v4949 = vld [vmem:[#allocation22 + $0x8] sm:$0xff]
    %v4950 = vld [vmem:[#allocation22 + $0x10] sm:$0xff]
    %v4951 = vld [vmem:[#allocation22 + $0x18] sm:$0xff]
    %v4952 = vld [vmem:[#allocation22 + $0x20] sm:$0xff]
    %v4953 = vld [vmem:[#allocation22 + $0x28] sm:$0xff]
    %v4954 = vld [vmem:[#allocation22 + $0x30] sm:$0xff]
    %v4955 = vld [vmem:[#allocation22 + $0x38] sm:$0xff]
    %v4956 = vld [vmem:[#allocation22 + $0x40] sm:$0xff]
    %v4957 = vld [vmem:[#allocation22 + $0x48] sm:$0xff]
    %v4958 = vld [vmem:[#allocation22 + $0x50] sm:$0xff]
    %v4959 = vld [vmem:[#allocation22 + $0x58] sm:$0xff]
    %v4960 = vld [vmem:[%s43] sm:$0x3]
    %v4962 = vlaneseq
    %v4963 = vshrl.u32 %v4962, 7
    %v4964 = vsub.s32 0, %v4963
    %v4965 = vrot.slane %v4960, %v4964
    %v4966 = vlaneseq
    %v4967 = vshrl.u32 %v4966, 7
    %v4968 = vsub.s32 1, %v4967
    %v4969 = vrot.slane %v4960, %v4968
    %v4984 = vunpack.c.l.b16 %v4948
    %v4985 = vunpack.c.h.b16 %v4948
    %v4986 = vunpack.c.l.b16 %v4949
    %v4987 = vunpack.c.h.b16 %v4949
    %v4988 = vunpack.c.l.b16 %v4950
    %v4989 = vunpack.c.h.b16 %v4950
    %v4990 = vunpack.c.l.b16 %v4951
    %v4991 = vunpack.c.h.b16 %v4951
    %v4992 = vunpack.c.l.b16 %v4952
    %v4993 = vunpack.c.h.b16 %v4952
    %v4994 = vunpack.c.l.b16 %v4953
    %v4995 = vunpack.c.h.b16 %v4953
    %v4996 = vunpack.c.l.b16 %v4954
    %v4997 = vunpack.c.h.b16 %v4954
    %v4998 = vunpack.c.l.b16 %v4955
    %v4999 = vunpack.c.h.b16 %v4955
    %v5000 = vunpack.c.l.b16 %v4956
    %v5001 = vunpack.c.h.b16 %v4956
    %v5002 = vunpack.c.l.b16 %v4957
    %v5003 = vunpack.c.h.b16 %v4957
    %v5004 = vunpack.c.l.b16 %v4958
    %v5005 = vunpack.c.h.b16 %v4958
    %v5006 = vunpack.c.l.b16 %v4959
    %v5007 = vunpack.c.h.b16 %v4959
    %v5008 = vpack.c.b16 %v4986, %v4984
    %v5009 = vpack.c.b16 %v4987, %v4985
    %v5010 = vpack.c.b16 %v4990, %v4988
    %v5011 = vpack.c.b16 %v4991, %v4989
    %v5012 = vpack.c.b16 %v4994, %v4992
    %v5013 = vpack.c.b16 %v4995, %v4993
    %v5014 = vpack.c.b16 %v4998, %v4996
    %v5015 = vpack.c.b16 %v4999, %v4997
    %v5016 = vpack.c.b16 %v5002, %v5000
    %v5017 = vpack.c.b16 %v5003, %v5001
    %v5018 = vpack.c.b16 %v5006, %v5004
    %v5019 = vpack.c.b16 %v5007, %v5005
    %vm5032 = vcmask 785408
    %v5034 = vsel %vm5032, %v4947, 0
    %5036 = vmatprep.subr.bf16.mxu0 %v5009
    %5037 = vmatpush1.bf16.msra.mxu0 %v5008
    %5038 = vmatprep.subr.bf16.mxu0 %v5011
    %5039 = vmatpush1.bf16.msra.mxu0 %v5010
    %5040 = vmatprep.subr.bf16.mxu0 %v5013
    %5041 = vmatpush1.bf16.msra.mxu0 %v5012
    %5042 = vmatprep.subr.bf16.mxu0 %v5015
    %5043 = vmatpush1.bf16.msra.mxu0 %v5014
    %5044 = vmatprep.subr.bf16.mxu0 %v5017
    %5045 = vmatpush1.bf16.msra.mxu0 %v5016
    %5046 = vmatprep.subr.bf16.mxu0 %v5019
    %5047 = vmatpush1.bf16.msra.mxu0 %v5018
    %5048 = vmatprep.subr.bf16.mxu0 0
    %5049 = vmatpush1.bf16.msra.mxu0 0
    %5050 = vmatprep.subr.bf16.mxu0 0
    %5051 = vmatpush1.bf16.msra.mxu0 0
    %5052 = vmatprep.subr.bf16.mxu0 0
    %5053 = vmatpush1.bf16.msra.mxu0 0
    %5054 = vmatprep.subr.bf16.mxu0 0
    %5055 = vmatpush1.bf16.msra.mxu0 0
    %5056 = vmatprep.subr.bf16.mxu0 0
    %5057 = vmatpush1.bf16.msra.mxu0 0
    %5058 = vmatprep.subr.bf16.mxu0 0
    %5059 = vmatpush1.bf16.msra.mxu0 0
    %5060 = vmatprep.subr.bf16.mxu0 0
    %5061 = vmatpush1.bf16.msra.mxu0 0
    %5062 = vmatprep.subr.bf16.mxu0 0
    %5063 = vmatpush1.bf16.msra.mxu0 0
    %5064 = vmatprep.subr.bf16.mxu0 0
    %5065 = vmatpush1.bf16.msra.mxu0 0
    %5066 = vmatprep.subr.bf16.mxu0 0
    %5067 = vmatpush1.bf16.msra.mxu0 0
    %5068 = vmatprep.mubr.bf16.mxu0 0
    %5069 = vmatmul.mubr.bf16.gmra.mrb[0].mxu0 %v5034
    %v5070 = vpop.f32.mrb[0].mxu0
    %v5071 = vadd.f32 %v4965, %v5070
    %v5072 = vpop.f32.mrb[0].mxu0
    %v5073 = vadd.f32 %v4969, %v5072
    %v5074 = vpop.f32.mrb[0].mxu0
    %v5075 = vadd.f32 %v4965, %v5074
    %v5076 = vpop.f32.mrb[0].mxu0
    %v5077 = vadd.f32 %v4969, %v5076
    %5078 = vdwg.mxu0
    %v5079 = vld [vmem:[#allocation23] sm:$0xff]
    %v5080 = vld [vmem:[#allocation23 + $0x8] sm:$0xff]
    %v5081 = vld [vmem:[#allocation23 + $0x10] sm:$0xff]
    %v5082 = vld [vmem:[#allocation23 + $0x18] sm:$0xff]
    %v5083 = vld [vmem:[#allocation23 + $0x20] sm:$0xff]
    %v5084 = vld [vmem:[#allocation23 + $0x28] sm:$0xff]
    %v5085 = vld [vmem:[#allocation23 + $0x30] sm:$0xff]
    %v5086 = vld [vmem:[#allocation23 + $0x38] sm:$0xff]
    %v5087 = vld [vmem:[#allocation23 + $0x40] sm:$0xff]
    %v5088 = vld [vmem:[#allocation23 + $0x48] sm:$0xff]
    %v5089 = vld [vmem:[#allocation23 + $0x50] sm:$0xff]
    %v5090 = vld [vmem:[#allocation23 + $0x58] sm:$0xff]
    %v5091 = vld [vmem:[#allocation25] sm:$0x3]
    %v5093 = vlaneseq
    %v5094 = vshrl.u32 %v5093, 7
    %v5095 = vsub.s32 0, %v5094
    %v5096 = vrot.slane %v5091, %v5095
    %v5097 = vlaneseq
    %v5098 = vshrl.u32 %v5097, 7
    %v5099 = vsub.s32 1, %v5098
    %v5100 = vrot.slane %v5091, %v5099
    %v5115 = vunpack.c.l.b16 %v5079
    %v5116 = vunpack.c.h.b16 %v5079
    %v5117 = vunpack.c.l.b16 %v5080
    %v5118 = vunpack.c.h.b16 %v5080
    %v5119 = vunpack.c.l.b16 %v5081
    %v5120 = vunpack.c.h.b16 %v5081
    %v5121 = vunpack.c.l.b16 %v5082
    %v5122 = vunpack.c.h.b16 %v5082
    %v5123 = vunpack.c.l.b16 %v5083
    %v5124 = vunpack.c.h.b16 %v5083
    %v5125 = vunpack.c.l.b16 %v5084
    %v5126 = vunpack.c.h.b16 %v5084
    %v5127 = vunpack.c.l.b16 %v5085
    %v5128 = vunpack.c.h.b16 %v5085
    %v5129 = vunpack.c.l.b16 %v5086
    %v5130 = vunpack.c.h.b16 %v5086
    %v5131 = vunpack.c.l.b16 %v5087
    %v5132 = vunpack.c.h.b16 %v5087
    %v5133 = vunpack.c.l.b16 %v5088
    %v5134 = vunpack.c.h.b16 %v5088
    %v5135 = vunpack.c.l.b16 %v5089
    %v5136 = vunpack.c.h.b16 %v5089
    %v5137 = vunpack.c.l.b16 %v5090
    %v5138 = vunpack.c.h.b16 %v5090
    %v5139 = vpack.c.b16 %v5117, %v5115
    %v5140 = vpack.c.b16 %v5118, %v5116
    %v5141 = vpack.c.b16 %v5121, %v5119
    %v5142 = vpack.c.b16 %v5122, %v5120
    %v5143 = vpack.c.b16 %v5125, %v5123
    %v5144 = vpack.c.b16 %v5126, %v5124
    %v5145 = vpack.c.b16 %v5129, %v5127
    %v5146 = vpack.c.b16 %v5130, %v5128
    %v5147 = vpack.c.b16 %v5133, %v5131
    %v5148 = vpack.c.b16 %v5134, %v5132
    %v5149 = vpack.c.b16 %v5137, %v5135
    %v5150 = vpack.c.b16 %v5138, %v5136
    %5163 = vmatprep.subr.bf16.mxu0 %v5140
    %5164 = vmatpush1.bf16.msra.mxu0 %v5139
    %5165 = vmatprep.subr.bf16.mxu0 %v5142
    %5166 = vmatpush1.bf16.msra.mxu0 %v5141
    %5167 = vmatprep.subr.bf16.mxu0 %v5144
    %5168 = vmatpush1.bf16.msra.mxu0 %v5143
    %5169 = vmatprep.subr.bf16.mxu0 %v5146
    %5170 = vmatpush1.bf16.msra.mxu0 %v5145
    %5171 = vmatprep.subr.bf16.mxu0 %v5148
    %5172 = vmatpush1.bf16.msra.mxu0 %v5147
    %5173 = vmatprep.subr.bf16.mxu0 %v5150
    %5174 = vmatpush1.bf16.msra.mxu0 %v5149
    %5175 = vmatprep.subr.bf16.mxu0 0
    %5176 = vmatpush1.bf16.msra.mxu0 0
    %5177 = vmatprep.subr.bf16.mxu0 0
    %5178 = vmatpush1.bf16.msra.mxu0 0
    %5179 = vmatprep.subr.bf16.mxu0 0
    %5180 = vmatpush1.bf16.msra.mxu0 0
    %5181 = vmatprep.subr.bf16.mxu0 0
    %5182 = vmatpush1.bf16.msra.mxu0 0
    %5183 = vmatprep.subr.bf16.mxu0 0
    %5184 = vmatpush1.bf16.msra.mxu0 0
    %5185 = vmatprep.subr.bf16.mxu0 0
    %5186 = vmatpush1.bf16.msra.mxu0 0
    %5187 = vmatprep.subr.bf16.mxu0 0
    %5188 = vmatpush1.bf16.msra.mxu0 0
    %5189 = vmatprep.subr.bf16.mxu0 0
    %5190 = vmatpush1.bf16.msra.mxu0 0
    %5191 = vmatprep.subr.bf16.mxu0 0
    %5192 = vmatpush1.bf16.msra.mxu0 0
    %5193 = vmatprep.subr.bf16.mxu0 0
    %5194 = vmatpush1.bf16.msra.mxu0 0
    %5195 = vmatprep.mubr.bf16.mxu0 0
    %5196 = vmatmul.mubr.bf16.gmra.mrb[0].mxu0 %v5034
    %v5197 = vpop.f32.mrb[0].mxu0
    %v5198 = vadd.f32 %v5096, %v5197
    %v5199 = vpop.f32.mrb[0].mxu0
    %v5200 = vadd.f32 %v5100, %v5199
    %v5201 = vpop.f32.mrb[0].mxu0
    %v5202 = vadd.f32 %v5096, %v5201
    %v5203 = vpop.f32.mrb[0].mxu0
    %v5204 = vadd.f32 %v5100, %v5203
    %5205 = vdwg.mxu0
    %v5206 = vxor.u32 %v5198, 2147483648
    %v5207 = vxor.u32 %v5200, 2147483648
    %v5208 = vxor.u32 %v5202, 2147483648
    %v5209 = vxor.u32 %v5204, 2147483648
    %v5210 = vmul.f32 %v5206, 1.442695
    %v5211 = vpow.pop %v5210
    %v5212 = vmul.f32 %v5207, 1.442695
    %v5213 = vpow.pop %v5212
    %v5214 = vmul.f32 %v5208, 1.442695
    %v5215 = vpow.pop %v5214
    %v5216 = vmul.f32 %v5209, 1.442695
    %v5217 = vpow.pop %v5216
    %v5218 = vadd.f32 %v5211, 1.0
    %v5219 = vadd.f32 %v5213, 1.0
    %v5220 = vadd.f32 %v5215, 1.0
    %v5221 = vadd.f32 %v5217, 1.0
    %v5222 = vrcp.pop %v5218
    %v5223 = vmul.f32 1.0, %v5222
    %v5224 = vrcp.pop %v5219
    %v5225 = vmul.f32 1.0, %v5224
    %v5226 = vrcp.pop %v5220
    %v5227 = vmul.f32 1.0, %v5226
    %v5228 = vrcp.pop %v5221
    %v5229 = vmul.f32 1.0, %v5228
    %v5230 = vadd.f32 %v5071, %v5223
    %v5231 = vadd.f32 %v5073, %v5225
    %v5232 = vadd.f32 %v5075, %v5227
    %v5233 = vadd.f32 %v5077, %v5229
    %v5234 = vmax.f32 %v5230, 0.0
    %v5235 = vmax.f32 %v5231, 0.0
    %v5236 = vmax.f32 %v5232, 0.0
    %v5237 = vmax.f32 %v5233, 0.0
    %5238 = vmatprep.subr.mxu0 %v5235
    %5239 = vmatpush1.msra.mxu0 %v5234
    %5240 = vmatprep.subr.mxu0 %v5237
    %5241 = vmatpush1.msra.mxu0 %v5236
    %5242 = vmatprep.subr.mxu0 0.0
    %5243 = vmatpush1.msra.mxu0 0.0
    %5244 = vmatprep.subr.mxu0 0.0
    %5245 = vmatpush1.msra.mxu0 0.0
    %5246 = vmatprep.subr.mxu0 0.0
    %5247 = vmatpush1.msra.mxu0 0.0
    %5248 = vmatprep.subr.mxu0 0.0
    %5249 = vmatpush1.msra.mxu0 0.0
    %5250 = vmatprep.subr.mxu0 0.0
    %5251 = vmatpush1.msra.mxu0 0.0
    %5252 = vmatprep.subr.mxu0 0.0
    %5253 = vmatpush1.msra.mxu0 0.0
    %5254 = vmatprep.subr.mxu0 0.0
    %5255 = vmatpush1.msra.mxu0 0.0
    %5256 = vmatprep.subr.mxu0 0.0
    %5257 = vmatpush1.msra.mxu0 0.0
    %5258 = vmatprep.subr.mxu0 0.0
    %5259 = vmatpush1.msra.mxu0 0.0
    %5260 = vmatprep.subr.mxu0 0.0
    %5261 = vmatpush1.msra.mxu0 0.0
    %5262 = vmatprep.subr.mxu0 0.0
    %5263 = vmatpush1.msra.mxu0 0.0
    %5264 = vmatprep.subr.mxu0 0.0
    %5265 = vmatpush1.msra.mxu0 0.0
    %5266 = vmatprep.subr.mxu0 0.0
    %5267 = vmatpush1.msra.mxu0 0.0
    %5268 = vmatprep.subr.mxu0 0.0
    %5269 = vmatpush1.msra.mxu0 0.0
    %5270 = vmatprep.subr.mxu0 0.0
    %5271 = vmatpush1.msra.mxu0 0.0
    %5272 = vmatprep.subr.mxu0 0.0
    %5273 = vmatpush1.msra.mxu0 0.0
    %5274 = vmatprep.subr.mxu0 0.0
    %5275 = vmatpush1.msra.mxu0 0.0
    %5276 = vmatprep.subr.mxu0 0.0
    %5277 = vmatpush1.msra.mxu0 0.0
    %5278 = vmatprep.subr.mxu0 0.0
    %5279 = vmatpush1.msra.mxu0 0.0
    %5280 = vmatprep.subr.mxu0 0.0
    %5281 = vmatpush1.msra.mxu0 0.0
    %5282 = vmatprep.subr.mxu0 0.0
    %5283 = vmatpush1.msra.mxu0 0.0
    %5284 = vmatprep.subr.mxu0 0.0
    %5285 = vmatpush1.msra.mxu0 0.0
    %5286 = vmatprep.subr.mxu0 0.0
    %5287 = vmatpush1.msra.mxu0 0.0
    %5288 = vmatprep.subr.mxu0 0.0
    %5289 = vmatpush1.msra.mxu0 0.0
    %5290 = vmatprep.subr.mxu0 0.0
    %5291 = vmatpush1.msra.mxu0 0.0
    %5292 = vmatprep.subr.mxu0 0.0
    %5293 = vmatpush1.msra.mxu0 0.0
    %5294 = vmatprep.subr.mxu0 0.0
    %5295 = vmatpush1.msra.mxu0 0.0
    %5296 = vmatprep.subr.mxu0 0.0
    %5297 = vmatpush1.msra.mxu0 0.0
    %5298 = vmatprep.subr.mxu0 0.0
    %5299 = vmatpush1.msra.mxu0 0.0
    %5300 = vmatprep.subr.mxu0 0.0
    %5301 = vmatpush1.msra.mxu0 0.0
    %5302 = vmatprep.mubr.f32.mxu0 0.0
    %5303 = vmatmul.mubr.f32.gmra.mrb[0].mxu0 %v2467
    %v5304 = vpop.f32.mrb[0].mxu0
    %v5305 = vadd.f32 0.0, %v5304
    %v5306 = vpop.f32.mrb[0].mxu0
    %v5307 = vadd.f32 0.0, %v5306
    %5308 = vmatprep.mubr.f32.mxu0 0.0
    %5309 = vmatmul.mubr.f32.gmra.mrb[0].mxu0 %v2470
    %v5310 = vpop.f32.mrb[0].mxu0
    %v5311 = vadd.f32 0.0, %v5310
    %v5312 = vpop.f32.mrb[0].mxu0
    %v5313 = vadd.f32 0.0, %v5312
    %5314 = vdwg.mxu0
    %v5315 = vmul.f32 %v5234, %v5234
    %v5316 = vmul.f32 %v5235, %v5235
    %v5317 = vmul.f32 %v5236, %v5236
    %v5318 = vmul.f32 %v5237, %v5237
    %5319 = vmatprep.subr.mxu0 %v5316
    %5320 = vmatpush1.msra.mxu0 %v5315
    %5321 = vmatprep.subr.mxu0 %v5318
    %5322 = vmatpush1.msra.mxu0 %v5317
    %5323 = vmatprep.subr.mxu0 0.0
    %5324 = vmatpush1.msra.mxu0 0.0
    %5325 = vmatprep.subr.mxu0 0.0
    %5326 = vmatpush1.msra.mxu0 0.0
    %5327 = vmatprep.subr.mxu0 0.0
    %5328 = vmatpush1.msra.mxu0 0.0
    %5329 = vmatprep.subr.mxu0 0.0
    %5330 = vmatpush1.msra.mxu0 0.0
    %5331 = vmatprep.subr.mxu0 0.0
    %5332 = vmatpush1.msra.mxu0 0.0
    %5333 = vmatprep.subr.mxu0 0.0
    %5334 = vmatpush1.msra.mxu0 0.0
    %5335 = vmatprep.subr.mxu0 0.0
    %5336 = vmatpush1.msra.mxu0 0.0
    %5337 = vmatprep.subr.mxu0 0.0
    %5338 = vmatpush1.msra.mxu0 0.0
    %5339 = vmatprep.subr.mxu0 0.0
    %5340 = vmatpush1.msra.mxu0 0.0
    %5341 = vmatprep.subr.mxu0 0.0
    %5342 = vmatpush1.msra.mxu0 0.0
    %5343 = vmatprep.subr.mxu0 0.0
    %5344 = vmatpush1.msra.mxu0 0.0
    %5345 = vmatprep.subr.mxu0 0.0
    %5346 = vmatpush1.msra.mxu0 0.0
    %5347 = vmatprep.subr.mxu0 0.0
    %5348 = vmatpush1.msra.mxu0 0.0
    %5349 = vmatprep.subr.mxu0 0.0
    %5350 = vmatpush1.msra.mxu0 0.0
    %5351 = vmatprep.subr.mxu0 0.0
    %5352 = vmatpush1.msra.mxu0 0.0
    %5353 = vmatprep.subr.mxu0 0.0
    %5354 = vmatpush1.msra.mxu0 0.0
    %5355 = vmatprep.subr.mxu0 0.0
    %5356 = vmatpush1.msra.mxu0 0.0
    %5357 = vmatprep.subr.mxu0 0.0
    %5358 = vmatpush1.msra.mxu0 0.0
    %5359 = vmatprep.subr.mxu0 0.0
    %5360 = vmatpush1.msra.mxu0 0.0
    %5361 = vmatprep.subr.mxu0 0.0
    %5362 = vmatpush1.msra.mxu0 0.0
    %5363 = vmatprep.subr.mxu0 0.0
    %5364 = vmatpush1.msra.mxu0 0.0
    %5365 = vmatprep.subr.mxu0 0.0
    %5366 = vmatpush1.msra.mxu0 0.0
    %5367 = vmatprep.subr.mxu0 0.0
    %5368 = vmatpush1.msra.mxu0 0.0
    %5369 = vmatprep.subr.mxu0 0.0
    %5370 = vmatpush1.msra.mxu0 0.0
    %5371 = vmatprep.subr.mxu0 0.0
    %5372 = vmatpush1.msra.mxu0 0.0
    %5373 = vmatprep.subr.mxu0 0.0
    %5374 = vmatpush1.msra.mxu0 0.0
    %5375 = vmatprep.subr.mxu0 0.0
    %5376 = vmatpush1.msra.mxu0 0.0
    %5377 = vmatprep.subr.mxu0 0.0
    %5378 = vmatpush1.msra.mxu0 0.0
    %5379 = vmatprep.subr.mxu0 0.0
    %5380 = vmatpush1.msra.mxu0 0.0
    %5381 = vmatprep.subr.mxu0 0.0
    %5382 = vmatpush1.msra.mxu0 0.0
    %5383 = vmatprep.mubr.f32.mxu0 0.0
    %5384 = vmatmul.mubr.f32.gmra.mrb[0].mxu0 %v2467
    %v5385 = vpop.f32.mrb[0].mxu0
    %v5386 = vadd.f32 0.0, %v5385
    %v5387 = vpop.f32.mrb[0].mxu0
    %v5388 = vadd.f32 0.0, %v5387
    %5389 = vmatprep.mubr.f32.mxu0 0.0
    %5390 = vmatmul.mubr.f32.gmra.mrb[0].mxu0 %v2470
    %v5391 = vpop.f32.mrb[0].mxu0
    %v5392 = vadd.f32 0.0, %v5391
    %v5393 = vpop.f32.mrb[0].mxu0
    %v5394 = vadd.f32 0.0, %v5393
    %5395 = vdwg.mxu0
    %v5396 = vadd.f32 %v5305, %v5307
    %5397 = vadd.xlane.f32.xlu0 %v5396
    %v5398 = vpop.xlane.xlu0 %5397
    %v5399 = vadd.f32 %v5311, %v5313
    %5400 = vadd.xlane.f32.xlu0 %v5399
    %v5401 = vpop.xlane.xlu0 %5400
    %v5402 = vrcp.pop 256.0
    %v5403 = vmul.f32 %v5398, %v5402
    %v5404 = vmul.f32 %v5401, %v5402
    %v5405 = vadd.f32 %v5386, %v5388
    %5406 = vadd.xlane.f32.xlu0 %v5405
    %v5407 = vpop.xlane.xlu0 %5406
    %v5408 = vadd.f32 %v5392, %v5394
    %5409 = vadd.xlane.f32.xlu0 %v5408
    %v5410 = vpop.xlane.xlu0 %5409
    %v5411 = vmul.f32 %v5407, %v5402
    %v5412 = vmul.f32 %v5410, %v5402
    %v5413 = vmul.f32 %v5403, %v5403
    %v5414 = vmul.f32 %v5404, %v5404
    %v5415 = vsub.f32 %v5411, %v5413
    %v5416 = vsub.f32 %v5412, %v5414
    %v5417 = vmax.f32 %v5415, 0.0
    %v5418 = vmax.f32 %v5416, 0.0
    %v5419 = vsub.f32 %v5234, %v5403
    %v5420 = vsub.f32 %v5235, %v5403
    %v5421 = vsub.f32 %v5236, %v5404
    %v5422 = vsub.f32 %v5237, %v5404
    %v5423 = vadd.f32 %v5417, 1e-05
    %v5424 = vadd.f32 %v5418, 1e-05
    %v5425 = vrsqrt.pop %v5423
    %v5426 = vrsqrt.pop %v5424
    %v5427 = vmul.f32 %v5419, %v5425
    %v5428 = vmul.f32 %v5420, %v5425
    %v5429 = vmul.f32 %v5421, %v5426
    %v5430 = vmul.f32 %v5422, %v5426
    %v5431 = vld [vmem:[%s47] sm:$0xff]
    %v5432 = vld [vmem:[%s47 + $0x8] sm:$0xff]
    %5434 = vset.pattern.permute.xlu0 0
    %5435 = vperm.xlu0 %5434, %v5431
    %v5436 = vpop.permute.xlu0 %5435
    %5439 = vset.pattern.permute.xlu0 0
    %5440 = vperm.xlu0 %5439, %v5432
    %v5441 = vpop.permute.xlu0 %5440
    %v5443 = vmul.f32 %v5427, %v5436
    %v5444 = vmul.f32 %v5428, %v5436
    %v5445 = vmul.f32 %v5429, %v5441
    %v5446 = vmul.f32 %v5430, %v5441
    %v5447 = vld [vmem:[%s49] sm:$0xff]
    %v5448 = vld [vmem:[%s49 + $0x8] sm:$0xff]
    %5450 = vset.pattern.permute.xlu0 0
    %5451 = vperm.xlu0 %5450, %v5447
    %v5452 = vpop.permute.xlu0 %5451
    %5455 = vset.pattern.permute.xlu0 0
    %5456 = vperm.xlu0 %5455, %v5448
    %v5457 = vpop.permute.xlu0 %5456
    %v5459 = vadd.f32 %v5443, %v5452
    %v5460 = vadd.f32 %v5444, %v5452
    %v5461 = vadd.f32 %v5445, %v5457
    %v5462 = vadd.f32 %v5446, %v5457
    %v5463 = vpack.c.bf16 %v5461, %v5459
    %v5464 = vpack.c.bf16 %v5462, %v5460
    %v5465 = vld [vmem:[%s51] sm:$0xf]
    %v5466 = vld [vmem:[%s51 + $0x4] sm:$0xf]
    %v5467 = vld [vmem:[%s51 + $0x8] sm:$0xf]
    %v5468 = vld [vmem:[%s51 + $0xc] sm:$0xf]
    %v5469 = vld [vmem:[%s51 + $0x10] sm:$0xf]
    %v5470 = vld [vmem:[%s51 + $0x14] sm:$0xf]
    %v5471 = vld [vmem:[%s51 + $0x18] sm:$0xf]
    %v5472 = vld [vmem:[%s51 + $0x1c] sm:$0xf]
    %v5473 = vld [vmem:[%s51 + $0x20] sm:$0xf]
    %v5474 = vld [vmem:[%s51 + $0x24] sm:$0xf]
    %v5475 = vld [vmem:[%s51 + $0x28] sm:$0xf]
    %v5476 = vld [vmem:[%s51 + $0x2c] sm:$0xf]
    %v5477 = vld [vmem:[%s51 + $0x30] sm:$0xf]
    %v5478 = vld [vmem:[%s51 + $0x34] sm:$0xf]
    %v5479 = vld [vmem:[%s51 + $0x38] sm:$0xf]
    %v5480 = vld [vmem:[%s51 + $0x3c] sm:$0xf]
    %v5481 = vld [vmem:[%s51 + $0x40] sm:$0xf]
    %v5482 = vld [vmem:[%s51 + $0x44] sm:$0xf]
    %v5483 = vld [vmem:[%s51 + $0x48] sm:$0xf]
    %v5484 = vld [vmem:[%s51 + $0x4c] sm:$0xf]
    %v5485 = vld [vmem:[%s51 + $0x50] sm:$0xf]
    %v5486 = vld [vmem:[%s51 + $0x54] sm:$0xf]
    %v5487 = vld [vmem:[%s51 + $0x58] sm:$0xf]
    %v5488 = vld [vmem:[%s51 + $0x5c] sm:$0xf]
    %v5489 = vld [vmem:[%s51 + $0x60] sm:$0xf]
    %v5490 = vld [vmem:[%s51 + $0x64] sm:$0xf]
    %v5491 = vld [vmem:[%s51 + $0x68] sm:$0xf]
    %v5492 = vld [vmem:[%s51 + $0x6c] sm:$0xf]
    %v5493 = vld [vmem:[%s51 + $0x70] sm:$0xf]
    %v5494 = vld [vmem:[%s51 + $0x74] sm:$0xf]
    %v5495 = vld [vmem:[%s51 + $0x78] sm:$0xf]
    %v5496 = vld [vmem:[%s51 + $0x7c] sm:$0xf]
    %v5497 = vld [vmem:[#allocation28] sm:$0x1]
    %v5499 = vlaneseq
    %v5500 = vshrl.u32 %v5499, 7
    %v5501 = vsub.s32 0, %v5500
    %v5502 = vrot.slane %v5497, %v5501
    %v5536 = vunpack.c.l.b16 %v5465
    %v5537 = vunpack.c.l.b16 %v5466
    %v5538 = vunpack.c.l.b16 %v5467
    %v5539 = vunpack.c.l.b16 %v5468
    %v5540 = vunpack.c.l.b16 %v5469
    %v5541 = vunpack.c.l.b16 %v5470
    %v5542 = vunpack.c.l.b16 %v5471
    %v5543 = vunpack.c.l.b16 %v5472
    %v5544 = vunpack.c.l.b16 %v5473
    %v5545 = vunpack.c.l.b16 %v5474
    %v5546 = vunpack.c.l.b16 %v5475
    %v5547 = vunpack.c.l.b16 %v5476
    %v5548 = vunpack.c.l.b16 %v5477
    %v5549 = vunpack.c.l.b16 %v5478
    %v5550 = vunpack.c.l.b16 %v5479
    %v5551 = vunpack.c.l.b16 %v5480
    %v5552 = vunpack.c.l.b16 %v5481
    %v5553 = vunpack.c.l.b16 %v5482
    %v5554 = vunpack.c.l.b16 %v5483
    %v5555 = vunpack.c.l.b16 %v5484
    %v5556 = vunpack.c.l.b16 %v5485
    %v5557 = vunpack.c.l.b16 %v5486
    %v5558 = vunpack.c.l.b16 %v5487
    %v5559 = vunpack.c.l.b16 %v5488
    %v5560 = vunpack.c.l.b16 %v5489
    %v5561 = vunpack.c.l.b16 %v5490
    %v5562 = vunpack.c.l.b16 %v5491
    %v5563 = vunpack.c.l.b16 %v5492
    %v5564 = vunpack.c.l.b16 %v5493
    %v5565 = vunpack.c.l.b16 %v5494
    %v5566 = vunpack.c.l.b16 %v5495
    %v5567 = vunpack.c.l.b16 %v5496
    %v5568 = vpack.c.b16 %v5537, %v5536
    %v5569 = vpack.c.b16 %v5539, %v5538
    %v5570 = vpack.c.b16 %v5541, %v5540
    %v5571 = vpack.c.b16 %v5543, %v5542
    %v5572 = vpack.c.b16 %v5545, %v5544
    %v5573 = vpack.c.b16 %v5547, %v5546
    %v5574 = vpack.c.b16 %v5549, %v5548
    %v5575 = vpack.c.b16 %v5551, %v5550
    %v5576 = vpack.c.b16 %v5553, %v5552
    %v5577 = vpack.c.b16 %v5555, %v5554
    %v5578 = vpack.c.b16 %v5557, %v5556
    %v5579 = vpack.c.b16 %v5559, %v5558
    %v5580 = vpack.c.b16 %v5561, %v5560
    %v5581 = vpack.c.b16 %v5563, %v5562
    %v5582 = vpack.c.b16 %v5565, %v5564
    %v5583 = vpack.c.b16 %v5567, %v5566
    %5600 = vmatprep.subr.bf16.mxu0 0
    %5601 = vmatpush1.bf16.msra.mxu0 %v5568
    %5602 = vmatprep.subr.bf16.mxu0 0
    %5603 = vmatpush1.bf16.msra.mxu0 %v5569
    %5604 = vmatprep.subr.bf16.mxu0 0
    %5605 = vmatpush1.bf16.msra.mxu0 %v5570
    %5606 = vmatprep.subr.bf16.mxu0 0
    %5607 = vmatpush1.bf16.msra.mxu0 %v5571
    %5608 = vmatprep.subr.bf16.mxu0 0
    %5609 = vmatpush1.bf16.msra.mxu0 %v5572
    %5610 = vmatprep.subr.bf16.mxu0 0
    %5611 = vmatpush1.bf16.msra.mxu0 %v5573
    %5612 = vmatprep.subr.bf16.mxu0 0
    %5613 = vmatpush1.bf16.msra.mxu0 %v5574
    %5614 = vmatprep.subr.bf16.mxu0 0
    %5615 = vmatpush1.bf16.msra.mxu0 %v5575
    %5616 = vmatprep.subr.bf16.mxu0 0
    %5617 = vmatpush1.bf16.msra.mxu0 %v5576
    %5618 = vmatprep.subr.bf16.mxu0 0
    %5619 = vmatpush1.bf16.msra.mxu0 %v5577
    %5620 = vmatprep.subr.bf16.mxu0 0
    %5621 = vmatpush1.bf16.msra.mxu0 %v5578
    %5622 = vmatprep.subr.bf16.mxu0 0
    %5623 = vmatpush1.bf16.msra.mxu0 %v5579
    %5624 = vmatprep.subr.bf16.mxu0 0
    %5625 = vmatpush1.bf16.msra.mxu0 %v5580
    %5626 = vmatprep.subr.bf16.mxu0 0
    %5627 = vmatpush1.bf16.msra.mxu0 %v5581
    %5628 = vmatprep.subr.bf16.mxu0 0
    %5629 = vmatpush1.bf16.msra.mxu0 %v5582
    %5630 = vmatprep.subr.bf16.mxu0 0
    %5631 = vmatpush1.bf16.msra.mxu0 %v5583
    %5632 = vmatprep.mubr.bf16.mxu0 %v5464
    %5633 = vmatmul.mubr.bf16.gmra.mrb[0].mxu0 %v5463
    %v5634 = vpop.f32.mrb[0].mxu0
    %v5635 = vadd.f32 %v5502, %v5634
    %v5636 = vpop.f32.mrb[0].mxu0
    %v5637 = vpop.f32.mrb[0].mxu0
    %v5638 = vadd.f32 %v5502, %v5637
    %v5639 = vpop.f32.mrb[0].mxu0
    %5640 = vdwg.mxu0
    %v5641 = vld [vmem:[#allocation26] sm:$0xf]
    %v5642 = vld [vmem:[#allocation26 + $0x4] sm:$0xf]
    %v5643 = vld [vmem:[#allocation26 + $0x8] sm:$0xf]
    %v5644 = vld [vmem:[#allocation26 + $0xc] sm:$0xf]
    %v5645 = vld [vmem:[#allocation26 + $0x10] sm:$0xf]
    %v5646 = vld [vmem:[#allocation26 + $0x14] sm:$0xf]
    %v5647 = vld [vmem:[#allocation26 + $0x18] sm:$0xf]
    %v5648 = vld [vmem:[#allocation26 + $0x1c] sm:$0xf]
    %v5649 = vld [vmem:[#allocation26 + $0x20] sm:$0xf]
    %v5650 = vld [vmem:[#allocation26 + $0x24] sm:$0xf]
    %v5651 = vld [vmem:[#allocation26 + $0x28] sm:$0xf]
    %v5652 = vld [vmem:[#allocation26 + $0x2c] sm:$0xf]
    %v5653 = vld [vmem:[#allocation26 + $0x30] sm:$0xf]
    %v5654 = vld [vmem:[#allocation26 + $0x34] sm:$0xf]
    %v5655 = vld [vmem:[#allocation26 + $0x38] sm:$0xf]
    %v5656 = vld [vmem:[#allocation26 + $0x3c] sm:$0xf]
    %v5657 = vld [vmem:[#allocation26 + $0x40] sm:$0xf]
    %v5658 = vld [vmem:[#allocation26 + $0x44] sm:$0xf]
    %v5659 = vld [vmem:[#allocation26 + $0x48] sm:$0xf]
    %v5660 = vld [vmem:[#allocation26 + $0x4c] sm:$0xf]
    %v5661 = vld [vmem:[#allocation26 + $0x50] sm:$0xf]
    %v5662 = vld [vmem:[#allocation26 + $0x54] sm:$0xf]
    %v5663 = vld [vmem:[#allocation26 + $0x58] sm:$0xf]
    %v5664 = vld [vmem:[#allocation26 + $0x5c] sm:$0xf]
    %v5665 = vld [vmem:[#allocation26 + $0x60] sm:$0xf]
    %v5666 = vld [vmem:[#allocation26 + $0x64] sm:$0xf]
    %v5667 = vld [vmem:[#allocation26 + $0x68] sm:$0xf]
    %v5668 = vld [vmem:[#allocation26 + $0x6c] sm:$0xf]
    %v5669 = vld [vmem:[#allocation26 + $0x70] sm:$0xf]
    %v5670 = vld [vmem:[#allocation26 + $0x74] sm:$0xf]
    %v5671 = vld [vmem:[#allocation26 + $0x78] sm:$0xf]
    %v5672 = vld [vmem:[#allocation26 + $0x7c] sm:$0xf]
    %v5673 = vld [vmem:[#allocation29] sm:$0x1]
    %v5675 = vlaneseq
    %v5676 = vshrl.u32 %v5675, 7
    %v5677 = vsub.s32 0, %v5676
    %v5678 = vrot.slane %v5673, %v5677
    %v5712 = vunpack.c.l.b16 %v5641
    %v5713 = vunpack.c.l.b16 %v5642
    %v5714 = vunpack.c.l.b16 %v5643
    %v5715 = vunpack.c.l.b16 %v5644
    %v5716 = vunpack.c.l.b16 %v5645
    %v5717 = vunpack.c.l.b16 %v5646
    %v5718 = vunpack.c.l.b16 %v5647
    %v5719 = vunpack.c.l.b16 %v5648
    %v5720 = vunpack.c.l.b16 %v5649
    %v5721 = vunpack.c.l.b16 %v5650
    %v5722 = vunpack.c.l.b16 %v5651
    %v5723 = vunpack.c.l.b16 %v5652
    %v5724 = vunpack.c.l.b16 %v5653
    %v5725 = vunpack.c.l.b16 %v5654
    %v5726 = vunpack.c.l.b16 %v5655
    %v5727 = vunpack.c.l.b16 %v5656
    %v5728 = vunpack.c.l.b16 %v5657
    %v5729 = vunpack.c.l.b16 %v5658
    %v5730 = vunpack.c.l.b16 %v5659
    %v5731 = vunpack.c.l.b16 %v5660
    %v5732 = vunpack.c.l.b16 %v5661
    %v5733 = vunpack.c.l.b16 %v5662
    %v5734 = vunpack.c.l.b16 %v5663
    %v5735 = vunpack.c.l.b16 %v5664
    %v5736 = vunpack.c.l.b16 %v5665
    %v5737 = vunpack.c.l.b16 %v5666
    %v5738 = vunpack.c.l.b16 %v5667
    %v5739 = vunpack.c.l.b16 %v5668
    %v5740 = vunpack.c.l.b16 %v5669
    %v5741 = vunpack.c.l.b16 %v5670
    %v5742 = vunpack.c.l.b16 %v5671
    %v5743 = vunpack.c.l.b16 %v5672
    %v5744 = vpack.c.b16 %v5713, %v5712
    %v5745 = vpack.c.b16 %v5715, %v5714
    %v5746 = vpack.c.b16 %v5717, %v5716
    %v5747 = vpack.c.b16 %v5719, %v5718
    %v5748 = vpack.c.b16 %v5721, %v5720
    %v5749 = vpack.c.b16 %v5723, %v5722
    %v5750 = vpack.c.b16 %v5725, %v5724
    %v5751 = vpack.c.b16 %v5727, %v5726
    %v5752 = vpack.c.b16 %v5729, %v5728
    %v5753 = vpack.c.b16 %v5731, %v5730
    %v5754 = vpack.c.b16 %v5733, %v5732
    %v5755 = vpack.c.b16 %v5735, %v5734
    %v5756 = vpack.c.b16 %v5737, %v5736
    %v5757 = vpack.c.b16 %v5739, %v5738
    %v5758 = vpack.c.b16 %v5741, %v5740
    %v5759 = vpack.c.b16 %v5743, %v5742
    %5776 = vmatprep.subr.bf16.mxu0 0
    %5777 = vmatpush1.bf16.msra.mxu0 %v5744
    %5778 = vmatprep.subr.bf16.mxu0 0
    %5779 = vmatpush1.bf16.msra.mxu0 %v5745
    %5780 = vmatprep.subr.bf16.mxu0 0
    %5781 = vmatpush1.bf16.msra.mxu0 %v5746
    %5782 = vmatprep.subr.bf16.mxu0 0
    %5783 = vmatpush1.bf16.msra.mxu0 %v5747
    %5784 = vmatprep.subr.bf16.mxu0 0
    %5785 = vmatpush1.bf16.msra.mxu0 %v5748
    %5786 = vmatprep.subr.bf16.mxu0 0
    %5787 = vmatpush1.bf16.msra.mxu0 %v5749
    %5788 = vmatprep.subr.bf16.mxu0 0
    %5789 = vmatpush1.bf16.msra.mxu0 %v5750
    %5790 = vmatprep.subr.bf16.mxu0 0
    %5791 = vmatpush1.bf16.msra.mxu0 %v5751
    %5792 = vmatprep.subr.bf16.mxu0 0
    %5793 = vmatpush1.bf16.msra.mxu0 %v5752
    %5794 = vmatprep.subr.bf16.mxu0 0
    %5795 = vmatpush1.bf16.msra.mxu0 %v5753
    %5796 = vmatprep.subr.bf16.mxu0 0
    %5797 = vmatpush1.bf16.msra.mxu0 %v5754
    %5798 = vmatprep.subr.bf16.mxu0 0
    %5799 = vmatpush1.bf16.msra.mxu0 %v5755
    %5800 = vmatprep.subr.bf16.mxu0 0
    %5801 = vmatpush1.bf16.msra.mxu0 %v5756
    %5802 = vmatprep.subr.bf16.mxu0 0
    %5803 = vmatpush1.bf16.msra.mxu0 %v5757
    %5804 = vmatprep.subr.bf16.mxu0 0
    %5805 = vmatpush1.bf16.msra.mxu0 %v5758
    %5806 = vmatprep.subr.bf16.mxu0 0
    %5807 = vmatpush1.bf16.msra.mxu0 %v5759
    %5808 = vmatprep.mubr.bf16.mxu0 %v5464
    %5809 = vmatmul.mubr.bf16.gmra.mrb[0].mxu0 %v5463
    %v5810 = vpop.f32.mrb[0].mxu0
    %v5811 = vadd.f32 %v5678, %v5810
    %v5812 = vpop.f32.mrb[0].mxu0
    %v5813 = vpop.f32.mrb[0].mxu0
    %v5814 = vadd.f32 %v5678, %v5813
    %v5815 = vpop.f32.mrb[0].mxu0
    %5816 = vdwg.mxu0
    %v5817 = vxor.u32 %v5811, 2147483648
    %v5818 = vxor.u32 %v5814, 2147483648
    %v5819 = vmul.f32 %v5817, 1.442695
    %v5820 = vpow.pop %v5819
    %v5821 = vmul.f32 %v5818, 1.442695
    %v5822 = vpow.pop %v5821
    %v5823 = vadd.f32 %v5820, 1.0
    %v5824 = vadd.f32 %v5822, 1.0
    %v5825 = vrcp.pop %v5823
    %v5826 = vmul.f32 1.0, %v5825
    %v5827 = vrcp.pop %v5824
    %v5828 = vmul.f32 1.0, %v5827
    %v5829 = vadd.f32 %v5635, %v5826
    %v5830 = vadd.f32 %v5638, %v5828
    %v5831 = vmax.f32 %v5829, 0.0
    %v5832 = vmax.f32 %v5830, 0.0
    %5833 = vst [vmem:[#allocation31] sm:$0xff] %v5831
    %5834 = vst [vmem:[#allocation31 + $0x8] sm:$0xff] %v5832
    // Predicated region
    $region190: #{tpu_custom_call.1} parent=1 // pred_check
      _
    $region191: #{tpu_custom_call.1} parent=1 // pred_check_branch
      %5836 = sbr.rel (0) target = $region193
    $region192: #{tpu_custom_call.1} parent=1 // pred_region
      %s5838 = ssub.s32 256, 256
      %5839 = vsyncadd [#allocation4], %s5838
      %s5840 = sshll.u32 [#allocation31], 4
      %s5841 = int_to_ptr.vmem [resolvable:$true] %s5840
      %5846 = dma.vmem_to_hbm [thread:$0]  %s5841, 256, %s59, [#allocation4], 128, 128, 8
    $region193: #{tpu_custom_call.1} parent=1 // pred_fallthru
      _
    // Predicated region
    $region194: #{tpu_custom_call.1} parent=1 // pred_check
      _
    $region195: #{tpu_custom_call.1} parent=1 // pred_check_branch
      %5848 = sbr.rel (0) target = $region197
    $region196: #{tpu_custom_call.1} parent=1 // pred_region
      %5849 = dma.done [#allocation4], 256
    $region197: #{tpu_custom_call.1} parent=1 // pred_fallthru
      _
    %5850 = vsyncpa [#allocation3], 1
    %5851 = vsyncpa [#allocation6], 1
    %5852 = vsyncpa [#allocation9], 1
    %5853 = vsyncpa [#allocation12], 1
    %5854 = vsyncpa [#allocation15], 1
    %5855 = vsyncpa [#allocation18], 1
    %5856 = vsyncpa [#allocation21], 1
    %5857 = vsyncpa [#allocation24], 1
    %5858 = vsyncpa [#allocation27], 1
    %5859 = vsyncpa [#allocation30], 1
    %5860 = vsyncpa [#allocation4], 1

</llo_original>
